<compile_context>
chip_gen: v5e
topology: v5e:2x2
jax: 0.10.0
libtpu: 0.0.40
codegen_flags: <defaults>
</compile_context>

<pallas_src>
import functools

import jax
import jax.numpy as jnp
from jax.experimental import pallas as pl
from jax.experimental.pallas import tpu as pltpu


# ----------------------------------------------------------------------------
# Fused forward kernel:
#   encode(Linear) -> MLP(Linear,ReLU,Linear) -> L2-normalize
#   -> logits{1..4} = [<q,k>, q @ queue] / T   -> queue[:, :N] = k.T
# ----------------------------------------------------------------------------
def _impash_fused_kernel(
    xq1_ref, xq2_ref, xk1_ref, xk2_ref,              # (n, Din) f32 each
    we_ref, be_ref, w1_ref, b1_ref, w2_ref, b2_ref,  # encoder + MLP params
    queue1_ref, queue2_ref,                          # (dim, K) f32
    l1_ref, l2_ref, l3_ref, l4_ref,                  # (n, 1+K) f32
    nq1_ref, nq2_ref,                                # (dim, K) f32 (aliased to queues)
    *, n, inv_t):
    f32 = jnp.float32
    bf16 = jnp.bfloat16

    # ---- base encoder + projection MLP, all 4 branches stacked (MXU M = 4n) ----
    # Cast each branch to bf16 *before* the sublane concat (halves the VMEM copy).
    x = jnp.concatenate(
        [xq1_ref[...].astype(bf16), xq2_ref[...].astype(bf16),
         xk1_ref[...].astype(bf16), xk2_ref[...].astype(bf16)], axis=0)   # (4n, Din)
    h0 = jnp.dot(x, we_ref[...], preferred_element_type=f32) + be_ref[...]
    h1 = jnp.dot(h0.astype(bf16), w1_ref[...],
                 preferred_element_type=f32) + b1_ref[...]
    h1 = jnp.maximum(h1, 0.0)
    z = jnp.dot(h1.astype(bf16), w2_ref[...],
                preferred_element_type=f32) + b2_ref[...]                 # (4n, dim) f32

    # ---- F.normalize(dim=1): x * rsqrt(max(||x||^2, eps^2)), eps=1e-12 (EUP) ----
    nsq = jnp.sum(z * z, axis=1, keepdims=True)
    z = z * jax.lax.rsqrt(jnp.maximum(nsq, 1e-24))

    k1 = z[2 * n:3 * n]
    k2 = z[3 * n:4 * n]

    # Fold 1/T into q (equivalent to dividing the concatenated logits by T).
    q12 = z[0:2 * n] * inv_t          # [q1 ; q2] scaled, (2n, dim)
    q1s = q12[0:n]
    q2s = q12[n:2 * n]

    queue1 = queue1_ref[...]
    queue2 = queue2_ref[...]

    # Negatives: one (2n, dim) @ (dim, K) matmul per queue (f32 for logits fidelity).
    neg_a = jnp.dot(q12, queue1, preferred_element_type=f32)  # rows 0:n -> l1, n:2n -> l3
    neg_b = jnp.dot(q12, queue2, preferred_element_type=f32)  # rows 0:n -> l4, n:2n -> l2

    # Positives + in-kernel concat -> lane-dense (n, 1+K) stores.
    l1_ref[...] = jnp.concatenate(
        [jnp.sum(q1s * k1, axis=1, keepdims=True), neg_a[0:n]], axis=1)
    l2_ref[...] = jnp.concatenate(
        [jnp.sum(q2s * k2, axis=1, keepdims=True), neg_b[n:2 * n]], axis=1)
    l3_ref[...] = jnp.concatenate(
        [jnp.sum(q2s * k1, axis=1, keepdims=True), neg_a[n:2 * n]], axis=1)
    l4_ref[...] = jnp.concatenate(
        [jnp.sum(q1s * k2, axis=1, keepdims=True), neg_b[0:n]], axis=1)

    # ---- _dequeue_and_enqueue (ptr starts at 0): queue[:, 0:n] = k.T ----
    # TODO(synk): a persistent ring pointer (SMEM counter / scalar prefetch) is needed
    # for faithful multi-step MoCo queue semantics; this matches step 0 (ptr == 0).
    nq1_ref[...] = queue1
    nq1_ref[:, 0:n] = k1.T
    nq2_ref[...] = queue2
    nq2_ref[:, 0:n] = k2.T


# ----------------------------------------------------------------------------
# Parameter construction (deterministic, mirrors IMPaSh.__init__ tying)
# ----------------------------------------------------------------------------
def init_impash_params(key, din, dim=128, hidden=2048, K=256):
    ks = jax.random.split(key, 8)
    scale = lambda fan_in: 1.0 / jnp.sqrt(jnp.float32(fan_in))

    # MXU operands stored as bf16 (halves weight HBM traffic); biases stay f32, 2D.
    enc_w = (jax.random.normal(ks[0], (din, dim), jnp.float32) * scale(din)).astype(jnp.bfloat16)
    enc_b = jax.random.normal(ks[1], (1, dim), jnp.float32) * scale(din)

    w1 = (jax.random.normal(ks[2], (dim, hidden), jnp.float32) * scale(dim)).astype(jnp.bfloat16)
    b1 = jax.random.normal(ks[3], (1, hidden), jnp.float32) * scale(dim)
    w2 = (jax.random.normal(ks[4], (hidden, dim), jnp.float32) * scale(hidden)).astype(jnp.bfloat16)
    b2 = jax.random.normal(ks[5], (1, dim), jnp.float32) * scale(hidden)

    # __init__ copies: encoder_k <- encoder_q; q2/k1/k2 MLPs <- q1 MLP (same arrays here).
    enc = (enc_w, enc_b)
    mlp = (w1, b1, w2, b2)

    def _unit_cols(k):
        q = jax.random.normal(k, (dim, K), jnp.float32)
        return q / jnp.maximum(jnp.sqrt(jnp.sum(q * q, axis=0, keepdims=True)), 1e-12)

    return dict(enc_q=enc, enc_k=enc,
                q1_mlp=mlp, q2_mlp=mlp, k1_mlp=mlp, k2_mlp=mlp,
                queue1=_unit_cols(ks[6]), queue2=_unit_cols(ks[7]))


# ----------------------------------------------------------------------------
# IMPaSh forward (single fused pallas_call)
# ----------------------------------------------------------------------------
@functools.partial(jax.jit, static_argnames=("T",))
def impash_forward(params, im_q1, im_k1, im_q2, im_k2, T=0.07):
    n = im_q1.shape[0]
    flat = lambda x: x.reshape(n, -1).astype(jnp.float32)

    # momentum update is a no-op (key params == query params at init);
    # batch shuffle/unshuffle + concat_all_gather are identity on a single device.
    # TODO(synk): cross-device all_gather / batch shuffle would need
    # pltpu.make_async_remote_copy + barrier semaphores.
    enc_w, enc_b = params["enc_q"]          # == enc_k
    w1, b1, w2, b2 = params["q1_mlp"]       # == q2/k1/k2 MLPs
    queue1, queue2 = params["queue1"], params["queue2"]
    dim, K = queue1.shape

    vmem = pl.BlockSpec(memory_space=pltpu.MemorySpace.VMEM)
    out_shape = (
        jax.ShapeDtypeStruct((n, 1 + K), jnp.float32),   # logits1
        jax.ShapeDtypeStruct((n, 1 + K), jnp.float32),   # logits2
        jax.ShapeDtypeStruct((n, 1 + K), jnp.float32),   # logits3
        jax.ShapeDtypeStruct((n, 1 + K), jnp.float32),   # logits4
        jax.ShapeDtypeStruct((dim, K), jnp.float32),     # new queue1 (aliased)
        jax.ShapeDtypeStruct((dim, K), jnp.float32),     # new queue2 (aliased)
    )

    # TODO(synk): at production sizes, add a batch-tile grid axis with
    # dimension_semantics=("parallel",) (two v7x TensorCores) and tile the hidden
    # axis of w1/w2 against the 64 MiB v7x VMEM; at these shapes everything fits.
    l1, l2, l3, l4, new_q1, new_q2 = pl.pallas_call(
        functools.partial(_impash_fused_kernel, n=n, inv_t=1.0 / T),
        out_shape=out_shape,
        in_specs=[vmem] * 12,
        out_specs=(vmem,) * 6,
        input_output_aliases={10: 4, 11: 5},   # queue1 -> new_q1, queue2 -> new_q2
    )(flat(im_q1), flat(im_q2), flat(im_k1), flat(im_k2),
      enc_w, enc_b, w1, b1, w2, b2, queue1, queue2)

    labels = jnp.zeros((n,), dtype=jnp.int32)
    return (l1, l2, l3, l4, labels), (new_q1, new_q2)


# ----------------------------------------------------------------------------
# Pure-JAX reference (same dtype policy) for a correctness sanity check
# ----------------------------------------------------------------------------
def _reference_forward(params, im_q1, im_k1, im_q2, im_k2, T):
    n = im_q1.shape[0]
    enc_w, enc_b = params["enc_q"]
    w1, b1, w2, b2 = params["q1_mlp"]
    queue1, queue2 = params["queue1"], params["queue2"]
    hp = jax.lax.Precision.HIGHEST

    def encode(x):
        x = x.reshape(n, -1).astype(jnp.bfloat16)
        h0 = jnp.dot(x, enc_w, preferred_element_type=jnp.float32) + enc_b
        h1 = jnp.dot(h0.astype(jnp.bfloat16), w1, preferred_element_type=jnp.float32) + b1
        h1 = jnp.maximum(h1, 0.0)
        z = jnp.dot(h1.astype(jnp.bfloat16), w2, preferred_element_type=jnp.float32) + b2
        nrm = jnp.sqrt(jnp.sum(z * z, axis=1, keepdims=True))
        return z / jnp.maximum(nrm, 1e-12)

    q1, q2 = encode(im_q1), encode(im_q2)
    k1, k2 = encode(im_k1), encode(im_k2)

    def logits(q, k, queue):
        pos = jnp.sum(q * k, axis=1, keepdims=True)
        neg = jnp.dot(q, queue, precision=hp)
        return jnp.concatenate([pos, neg], axis=1) / T

    l1 = logits(q1, k1, queue1)
    l2 = logits(q2, k2, queue2)
    l3 = logits(q2, k1, queue1)
    l4 = logits(q1, k2, queue2)
    nq1 = queue1.at[:, 0:n].set(k1.T)
    nq2 = queue2.at[:, 0:n].set(k2.T)
    return (l1, l2, l3, l4), (nq1, nq2)


if __name__ == "__main__":
    # small shapes: batch=8, channels=3, spatial=16x16, dim=128, hidden=2048, K=256
    N, C, H, W = 8, 3, 16, 16
    DIM, HIDDEN, K, T = 128, 2048, 256, 0.07
    DIN = C * H * W

    root = jax.random.PRNGKey(0)
    kp, kq1, kk1, kq2, kk2 = jax.random.split(root, 5)

    params = init_impash_params(kp, DIN, dim=DIM, hidden=HIDDEN, K=K)

    im_q1 = jax.random.normal(kq1, (N, C, H, W), jnp.float32)
    im_k1 = jax.random.normal(kk1, (N, C, H, W), jnp.float32)
    im_q2 = jax.random.normal(kq2, (N, C, H, W), jnp.float32)
    im_k2 = jax.random.normal(kk2, (N, C, H, W), jnp.float32)

    # Reference computed first (queues are read before the kernel runs).
    (r1, r2, r3, r4), (rq1, rq2) = _reference_forward(params, im_q1, im_k1, im_q2, im_k2, T)

    (l1, l2, l3, l4, labels), (nq1, nq2) = impash_forward(
        params, im_q1, im_k1, im_q2, im_k2, T=T)
    jax.block_until_ready((l1, l2, l3, l4, labels, nq1, nq2))

    assert l1.shape == (N, 1 + K) and l2.shape == (N, 1 + K)
    assert l3.shape == (N, 1 + K) and l4.shape == (N, 1 + K)
    assert labels.shape == (N,)
    assert nq1.shape == (DIM, K) and nq2.shape == (DIM, K)

    for got, want in ((l1, r1), (l2, r2), (l3, r3), (l4, r4), (nq1, rq1), (nq2, rq2)):
        err = float(jnp.max(jnp.abs(got - want)))
        assert jnp.allclose(got, want, rtol=2e-2, atol=2e-2), f"max abs err {err}"

    print("KERNEL_OK")
</pallas_src>

<mosaic_0001>
module attributes {stable_mosaic.version = 11 : i64} {
  func.func @_impash_fused_kernel(%arg0: memref<8x768xf32, #tpu.memory_space<vmem>>, %arg1: memref<8x768xf32, #tpu.memory_space<vmem>>, %arg2: memref<8x768xf32, #tpu.memory_space<vmem>>, %arg3: memref<8x768xf32, #tpu.memory_space<vmem>>, %arg4: memref<768x128xbf16, #tpu.memory_space<vmem>>, %arg5: memref<1x128xf32, #tpu.memory_space<vmem>>, %arg6: memref<128x2048xbf16, #tpu.memory_space<vmem>>, %arg7: memref<1x2048xf32, #tpu.memory_space<vmem>>, %arg8: memref<2048x128xbf16, #tpu.memory_space<vmem>>, %arg9: memref<1x128xf32, #tpu.memory_space<vmem>>, %arg10: memref<128x256xf32, #tpu.memory_space<vmem>>, %arg11: memref<128x256xf32, #tpu.memory_space<vmem>>, %arg12: memref<8x257xf32, #tpu.memory_space<vmem>>, %arg13: memref<8x257xf32, #tpu.memory_space<vmem>>, %arg14: memref<8x257xf32, #tpu.memory_space<vmem>>, %arg15: memref<8x257xf32, #tpu.memory_space<vmem>>, %arg16: memref<128x256xf32, #tpu.memory_space<vmem>>, %arg17: memref<128x256xf32, #tpu.memory_space<vmem>>) attributes {dimension_semantics = [], scalar_prefetch = 0 : i64, scratch_operands = 0 : i64, tpu.core_type = #tpu.core_type<tc>} {
    %c0 = arith.constant 0 : index
    %c0_0 = arith.constant 0 : index
    %0 = vector.load %arg0[%c0, %c0_0] : memref<8x768xf32, #tpu.memory_space<vmem>>, vector<8x768xf32>
    %1 = arith.truncf %0 : vector<8x768xf32> to vector<8x768xbf16>
    %c0_1 = arith.constant 0 : index
    %c0_2 = arith.constant 0 : index
    %2 = vector.load %arg1[%c0_1, %c0_2] : memref<8x768xf32, #tpu.memory_space<vmem>>, vector<8x768xf32>
    %3 = arith.truncf %2 : vector<8x768xf32> to vector<8x768xbf16>
    %c0_3 = arith.constant 0 : index
    %c0_4 = arith.constant 0 : index
    %4 = vector.load %arg2[%c0_3, %c0_4] : memref<8x768xf32, #tpu.memory_space<vmem>>, vector<8x768xf32>
    %5 = arith.truncf %4 : vector<8x768xf32> to vector<8x768xbf16>
    %c0_5 = arith.constant 0 : index
    %c0_6 = arith.constant 0 : index
    %6 = vector.load %arg3[%c0_5, %c0_6] : memref<8x768xf32, #tpu.memory_space<vmem>>, vector<8x768xf32>
    %7 = arith.truncf %6 : vector<8x768xf32> to vector<8x768xbf16>
    %8 = tpu.concatenate %1, %3, %5, %7 in 0 : vector<8x768xbf16>, vector<8x768xbf16>, vector<8x768xbf16>, vector<8x768xbf16> -> vector<32x768xbf16>
    %c0_7 = arith.constant 0 : index
    %c0_8 = arith.constant 0 : index
    %9 = vector.load %arg4[%c0_7, %c0_8] : memref<768x128xbf16, #tpu.memory_space<vmem>>, vector<768x128xbf16>
    %cst = arith.constant dense<0.000000e+00> : vector<32x128xf32>
    %10 = tpu.matmul %8, %9, %cst {dimension_numbers = #tpu.dot_dimension_numbers<[1], [0], [0], [1], [0, 0, 1, 1], [], []>} : vector<32x768xbf16>, vector<768x128xbf16>, vector<32x128xf32> -> vector<32x128xf32>
    %c0_9 = arith.constant 0 : index
    %c0_10 = arith.constant 0 : index
    %11 = vector.load %arg5[%c0_9, %c0_10] : memref<1x128xf32, #tpu.memory_space<vmem>>, vector<1x128xf32>
    %12 = vector.broadcast %11 : vector<1x128xf32> to vector<32x128xf32>
    %13 = arith.addf %10, %12 : vector<32x128xf32>
    %14 = arith.truncf %13 : vector<32x128xf32> to vector<32x128xbf16>
    %c0_11 = arith.constant 0 : index
    %c0_12 = arith.constant 0 : index
    %15 = vector.load %arg6[%c0_11, %c0_12] : memref<128x2048xbf16, #tpu.memory_space<vmem>>, vector<128x2048xbf16>
    %cst_13 = arith.constant dense<0.000000e+00> : vector<32x2048xf32>
    %16 = tpu.matmul %14, %15, %cst_13 {dimension_numbers = #tpu.dot_dimension_numbers<[1], [0], [0], [1], [0, 0, 1, 1], [], []>} : vector<32x128xbf16>, vector<128x2048xbf16>, vector<32x2048xf32> -> vector<32x2048xf32>
    %c0_14 = arith.constant 0 : index
    %c0_15 = arith.constant 0 : index
    %17 = vector.load %arg7[%c0_14, %c0_15] : memref<1x2048xf32, #tpu.memory_space<vmem>>, vector<1x2048xf32>
    %18 = vector.broadcast %17 : vector<1x2048xf32> to vector<32x2048xf32>
    %19 = arith.addf %16, %18 : vector<32x2048xf32>
    %cst_16 = arith.constant 0.000000e+00 : f32
    %20 = vector.broadcast %cst_16 : f32 to vector<32x2048xf32>
    %21 = arith.maximumf %19, %20 : vector<32x2048xf32>
    %22 = arith.truncf %21 : vector<32x2048xf32> to vector<32x2048xbf16>
    %c0_17 = arith.constant 0 : index
    %c0_18 = arith.constant 0 : index
    %23 = vector.load %arg8[%c0_17, %c0_18] : memref<2048x128xbf16, #tpu.memory_space<vmem>>, vector<2048x128xbf16>
    %cst_19 = arith.constant dense<0.000000e+00> : vector<32x128xf32>
    %24 = tpu.matmul %22, %23, %cst_19 {dimension_numbers = #tpu.dot_dimension_numbers<[1], [0], [0], [1], [0, 0, 1, 1], [], []>} : vector<32x2048xbf16>, vector<2048x128xbf16>, vector<32x128xf32> -> vector<32x128xf32>
    %c0_20 = arith.constant 0 : index
    %c0_21 = arith.constant 0 : index
    %25 = vector.load %arg9[%c0_20, %c0_21] : memref<1x128xf32, #tpu.memory_space<vmem>>, vector<1x128xf32>
    %26 = vector.broadcast %25 : vector<1x128xf32> to vector<32x128xf32>
    %27 = arith.addf %24, %26 : vector<32x128xf32>
    %28 = arith.mulf %27, %27 : vector<32x128xf32>
    %cst_22 = arith.constant dense<0.000000e+00> : vector<32xf32>
    %29 = vector.multi_reduction <add>, %28, %cst_22 [1] : vector<32x128xf32> to vector<32xf32>
    %30 = vector.shape_cast %29 : vector<32xf32> to vector<32x1xf32>
    %cst_23 = arith.constant 1.000000e-24 : f32
    %31 = vector.broadcast %cst_23 : f32 to vector<32x1xf32>
    %32 = arith.maximumf %30, %31 : vector<32x1xf32>
    %33 = math.rsqrt %32 : vector<32x1xf32>
    %34 = vector.broadcast %33 : vector<32x1xf32> to vector<32x128xf32>
    %35 = arith.mulf %27, %34 : vector<32x128xf32>
    %36 = vector.extract_strided_slice %35 {offsets = [16, 0], sizes = [8, 128], strides = [1, 1]} : vector<32x128xf32> to vector<8x128xf32>
    %37 = vector.extract_strided_slice %35 {offsets = [24, 0], sizes = [8, 128], strides = [1, 1]} : vector<32x128xf32> to vector<8x128xf32>
    %38 = vector.extract_strided_slice %35 {offsets = [0, 0], sizes = [16, 128], strides = [1, 1]} : vector<32x128xf32> to vector<16x128xf32>
    %cst_24 = arith.constant 14.2857141 : f32
    %39 = vector.broadcast %cst_24 : f32 to vector<16x128xf32>
    %40 = arith.mulf %38, %39 : vector<16x128xf32>
    %41 = vector.extract_strided_slice %40 {offsets = [0, 0], sizes = [8, 128], strides = [1, 1]} : vector<16x128xf32> to vector<8x128xf32>
    %42 = vector.extract_strided_slice %40 {offsets = [8, 0], sizes = [8, 128], strides = [1, 1]} : vector<16x128xf32> to vector<8x128xf32>
    %c0_25 = arith.constant 0 : index
    %c0_26 = arith.constant 0 : index
    %43 = vector.load %arg10[%c0_25, %c0_26] : memref<128x256xf32, #tpu.memory_space<vmem>>, vector<128x256xf32>
    %c0_27 = arith.constant 0 : index
    %c0_28 = arith.constant 0 : index
    %44 = vector.load %arg11[%c0_27, %c0_28] : memref<128x256xf32, #tpu.memory_space<vmem>>, vector<128x256xf32>
    %cst_29 = arith.constant dense<0.000000e+00> : vector<16x256xf32>
    %45 = tpu.matmul %40, %43, %cst_29 {dimension_numbers = #tpu.dot_dimension_numbers<[1], [0], [0], [1], [0, 0, 1, 1], [], []>} : vector<16x128xf32>, vector<128x256xf32>, vector<16x256xf32> -> vector<16x256xf32>
    %cst_30 = arith.constant dense<0.000000e+00> : vector<16x256xf32>
    %46 = tpu.matmul %40, %44, %cst_30 {dimension_numbers = #tpu.dot_dimension_numbers<[1], [0], [0], [1], [0, 0, 1, 1], [], []>} : vector<16x128xf32>, vector<128x256xf32>, vector<16x256xf32> -> vector<16x256xf32>
    %47 = arith.mulf %41, %36 : vector<8x128xf32>
    %cst_31 = arith.constant dense<0.000000e+00> : vector<8xf32>
    %48 = vector.multi_reduction <add>, %47, %cst_31 [1] : vector<8x128xf32> to vector<8xf32>
    %49 = vector.shape_cast %48 : vector<8xf32> to vector<8x1xf32>
    %50 = vector.extract_strided_slice %45 {offsets = [0, 0], sizes = [8, 256], strides = [1, 1]} : vector<16x256xf32> to vector<8x256xf32>
    %51 = tpu.concatenate %49, %50 in 1 : vector<8x1xf32>, vector<8x256xf32> -> vector<8x257xf32>
    %c0_32 = arith.constant 0 : index
    %c0_33 = arith.constant 0 : index
    %52 = vector.load %arg12[%c0_32, %c0_33] : memref<8x257xf32, #tpu.memory_space<vmem>>, vector<8x257xf32>
    tpu.vector_store %arg12[%c0_32, %c0_33], %51 {strides = array<i32>} : memref<8x257xf32, #tpu.memory_space<vmem>>, vector<8x257xf32>,
    %53 = arith.mulf %42, %37 : vector<8x128xf32>
    %cst_34 = arith.constant dense<0.000000e+00> : vector<8xf32>
    %54 = vector.multi_reduction <add>, %53, %cst_34 [1] : vector<8x128xf32> to vector<8xf32>
    %55 = vector.shape_cast %54 : vector<8xf32> to vector<8x1xf32>
    %56 = vector.extract_strided_slice %46 {offsets = [8, 0], sizes = [8, 256], strides = [1, 1]} : vector<16x256xf32> to vector<8x256xf32>
    %57 = tpu.concatenate %55, %56 in 1 : vector<8x1xf32>, vector<8x256xf32> -> vector<8x257xf32>
    %c0_35 = arith.constant 0 : index
    %c0_36 = arith.constant 0 : index
    %58 = vector.load %arg13[%c0_35, %c0_36] : memref<8x257xf32, #tpu.memory_space<vmem>>, vector<8x257xf32>
    tpu.vector_store %arg13[%c0_35, %c0_36], %57 {strides = array<i32>} : memref<8x257xf32, #tpu.memory_space<vmem>>, vector<8x257xf32>,
    %59 = arith.mulf %42, %36 : vector<8x128xf32>
    %cst_37 = arith.constant dense<0.000000e+00> : vector<8xf32>
    %60 = vector.multi_reduction <add>, %59, %cst_37 [1] : vector<8x128xf32> to vector<8xf32>
    %61 = vector.shape_cast %60 : vector<8xf32> to vector<8x1xf32>
    %62 = vector.extract_strided_slice %45 {offsets = [8, 0], sizes = [8, 256], strides = [1, 1]} : vector<16x256xf32> to vector<8x256xf32>
    %63 = tpu.concatenate %61, %62 in 1 : vector<8x1xf32>, vector<8x256xf32> -> vector<8x257xf32>
    %c0_38 = arith.constant 0 : index
    %c0_39 = arith.constant 0 : index
    %64 = vector.load %arg14[%c0_38, %c0_39] : memref<8x257xf32, #tpu.memory_space<vmem>>, vector<8x257xf32>
    tpu.vector_store %arg14[%c0_38, %c0_39], %63 {strides = array<i32>} : memref<8x257xf32, #tpu.memory_space<vmem>>, vector<8x257xf32>,
    %65 = arith.mulf %41, %37 : vector<8x128xf32>
    %cst_40 = arith.constant dense<0.000000e+00> : vector<8xf32>
    %66 = vector.multi_reduction <add>, %65, %cst_40 [1] : vector<8x128xf32> to vector<8xf32>
    %67 = vector.shape_cast %66 : vector<8xf32> to vector<8x1xf32>
    %68 = vector.extract_strided_slice %46 {offsets = [0, 0], sizes = [8, 256], strides = [1, 1]} : vector<16x256xf32> to vector<8x256xf32>
    %69 = tpu.concatenate %67, %68 in 1 : vector<8x1xf32>, vector<8x256xf32> -> vector<8x257xf32>
    %c0_41 = arith.constant 0 : index
    %c0_42 = arith.constant 0 : index
    %70 = vector.load %arg15[%c0_41, %c0_42] : memref<8x257xf32, #tpu.memory_space<vmem>>, vector<8x257xf32>
    tpu.vector_store %arg15[%c0_41, %c0_42], %69 {strides = array<i32>} : memref<8x257xf32, #tpu.memory_space<vmem>>, vector<8x257xf32>,
    %c0_43 = arith.constant 0 : index
    %c0_44 = arith.constant 0 : index
    %71 = vector.load %arg16[%c0_43, %c0_44] : memref<128x256xf32, #tpu.memory_space<vmem>>, vector<128x256xf32>
    tpu.vector_store %arg16[%c0_43, %c0_44], %43 {strides = array<i32>} : memref<128x256xf32, #tpu.memory_space<vmem>>, vector<128x256xf32>,
    %72 = tpu.transpose %36, [1, 0] : vector<8x128xf32> -> vector<128x8xf32>
    %c0_45 = arith.constant 0 : index
    %c0_46 = arith.constant 0 : index
    %73 = vector.load %arg16[%c0_45, %c0_46] : memref<128x256xf32, #tpu.memory_space<vmem>>, vector<128x8xf32>
    tpu.vector_store %arg16[%c0_45, %c0_46], %72 {strides = array<i32>} : memref<128x256xf32, #tpu.memory_space<vmem>>, vector<128x8xf32>,
    %c0_47 = arith.constant 0 : index
    %c0_48 = arith.constant 0 : index
    %74 = vector.load %arg17[%c0_47, %c0_48] : memref<128x256xf32, #tpu.memory_space<vmem>>, vector<128x256xf32>
    tpu.vector_store %arg17[%c0_47, %c0_48], %44 {strides = array<i32>} : memref<128x256xf32, #tpu.memory_space<vmem>>, vector<128x256xf32>,
    %75 = tpu.transpose %37, [1, 0] : vector<8x128xf32> -> vector<128x8xf32>
    %c0_49 = arith.constant 0 : index
    %c0_50 = arith.constant 0 : index
    %76 = vector.load %arg17[%c0_49, %c0_50] : memref<128x256xf32, #tpu.memory_space<vmem>>, vector<128x8xf32>
    tpu.vector_store %arg17[%c0_49, %c0_50], %75 {strides = array<i32>} : memref<128x256xf32, #tpu.memory_space<vmem>>, vector<128x8xf32>,
    return
  }
}

</mosaic_0001>

<llo_original>
// kernel: impash_forward.1
$region0: #{impash_forward.1}
  #allocation0 [shape = 'u32[]', space=smem, size = 0x4, offset = 0x4, fixed_abs, tag = 'smem constant byte address 0x4 - core index']
  #allocation1 [shape = 'u32[72,128]{1,0:T(1,128)}', space=vmem, size = 0x9000, scoped, tag = 'internal scratch']
  %s0 = inlined_call_operand.vmem [shape: f32[8,768], index: 0, kind: input, shape index: {}]
  %s1 = inlined_call_operand.vmem [shape: f32[8,768], index: 1, kind: input, shape index: {}]
  %s2 = inlined_call_operand.vmem [shape: f32[8,768], index: 2, kind: input, shape index: {}]
  %s3 = inlined_call_operand.vmem [shape: f32[8,768], index: 3, kind: input, shape index: {}]
  %s4 = inlined_call_operand.vmem [shape: bf16[768,128], index: 4, kind: input, shape index: {}]
  %s5 = inlined_call_operand.vmem [shape: f32[1,128], index: 5, kind: input, shape index: {}]
  %s6 = inlined_call_operand.hbm [shape: bf16[128,2048], index: 6, kind: input, shape index: {}]
  %s7 = inlined_call_operand.vmem [shape: f32[1,2048], index: 7, kind: input, shape index: {}]
  %s8 = inlined_call_operand.hbm [shape: bf16[2048,128], index: 8, kind: input, shape index: {}]
  %s9 = inlined_call_operand.vmem [shape: f32[1,128], index: 9, kind: input, shape index: {}]
  %s10 = inlined_call_operand.vmem [shape: f32[128,256], index: 10, kind: input, shape index: {}, may-alias: {10,16}]
  %s11 = inlined_call_operand.vmem [shape: f32[128,256], index: 11, kind: input, shape index: {}, may-alias: {11,17}]
  %s12 = inlined_call_operand.hbm [shape: f32[8,257], index: 12, kind: output, shape index: {0}]
  %s13 = inlined_call_operand.hbm [shape: f32[8,257], index: 13, kind: output, shape index: {1}]
  %s14 = inlined_call_operand.hbm [shape: f32[8,257], index: 14, kind: output, shape index: {2}]
  %s15 = inlined_call_operand.hbm [shape: f32[8,257], index: 15, kind: output, shape index: {3}]
  %s16 = inlined_call_operand.vmem [shape: f32[128,256], index: 16, kind: output, shape index: {4}, may-alias: {10,16}]
  %s17 = inlined_call_operand.vmem [shape: f32[128,256], index: 17, kind: output, shape index: {5}, may-alias: {11,17}]
  %18 = xla_tuple %s12, %s13, %s14, %s15, %s16, %s17
  %s19 = sld [smem:[#allocation0]]
  $region106: #{impash_forward.1} parent=0
    _
  %s21 = ssub.s32 1, %s19
  %s22 = scalar_select 0, %s21, %s19
  $region1: #{impash_forward.1} parent=0
    #allocation2 [shape = 'u8[524288]{0}', space=vmem, size = 0x80000, scoped, tag = 'input window, operand 6, single buffered']
    #allocation3 [shape = 's32[1]{0}', space=sflag, size = 0x4, scoped, tag = 'scoped memory for impash_forward.1']
    #allocation4 [shape = 's32[1]{0}', space=sflag, size = 0x4, scoped, tag = 'scoped memory for impash_forward.1']
    #allocation5 [shape = 'u8[524288]{0}', space=vmem, size = 0x80000, scoped, tag = 'input window, operand 8, single buffered']
    #allocation6 [shape = 's32[1]{0}', space=sflag, size = 0x4, scoped, tag = 'scoped memory for impash_forward.1']
    #allocation7 [shape = 'u8[12288]{0}', space=vmem, size = 0x3000, scoped, tag = 'output window, operand 0, single buffered']
    #allocation8 [shape = 'u8[12288]{0}', space=vmem, size = 0x3000, scoped, tag = 'output window, operand 1, single buffered']
    #allocation9 [shape = 's32[1]{0}', space=sflag, size = 0x4, scoped, tag = 'scoped memory for impash_forward.1']
    #allocation10 [shape = 'u8[12288]{0}', space=vmem, size = 0x3000, scoped, tag = 'output window, operand 2, single buffered']
    #allocation11 [shape = 'u8[12288]{0}', space=vmem, size = 0x3000, scoped, tag = 'output window, operand 3, single buffered']
    #allocation12 [shape = 's32[1]{0}', space=sflag, size = 0x4, scoped, tag = 'scoped memory for impash_forward.1']
    %23 = vsyncpa [#allocation3], 0
    %24 = vsyncpa [#allocation6], 0
    %25 = vsyncpa [#allocation4], 0
    %26 = vsyncpa [#allocation9], 0
    %27 = vsyncpa [#allocation12], 0
    // Predicated region
    $region2: #{impash_forward.1} parent=1 // pred_check
      _
    $region3: #{impash_forward.1} parent=1 // pred_check_branch
      %29 = sbr.rel (0) target = $region5
    $region4: #{impash_forward.1} parent=1 // pred_region
      _
    $region5: #{impash_forward.1} parent=1 // pred_fallthru
      _
    // Predicated region
    $region6: #{impash_forward.1} parent=1 // pred_check
      _
    $region7: #{impash_forward.1} parent=1 // pred_check_branch
      %31 = sbr.rel (0) target = $region9
    $region8: #{impash_forward.1} parent=1 // pred_region
      _
    $region9: #{impash_forward.1} parent=1 // pred_fallthru
      _
    // Predicated region
    $region10: #{impash_forward.1} parent=1 // pred_check
      _
    $region11: #{impash_forward.1} parent=1 // pred_check_branch
      %33 = sbr.rel (0) target = $region13
    $region12: #{impash_forward.1} parent=1 // pred_region
      _
    $region13: #{impash_forward.1} parent=1 // pred_fallthru
      _
    // Predicated region
    $region14: #{impash_forward.1} parent=1 // pred_check
      _
    $region15: #{impash_forward.1} parent=1 // pred_check_branch
      %35 = sbr.rel (0) target = $region17
    $region16: #{impash_forward.1} parent=1 // pred_region
      _
    $region17: #{impash_forward.1} parent=1 // pred_fallthru
      _
    // Predicated region
    $region18: #{impash_forward.1} parent=1 // pred_check
      _
    $region19: #{impash_forward.1} parent=1 // pred_check_branch
      %37 = sbr.rel (0) target = $region21
    $region20: #{impash_forward.1} parent=1 // pred_region
      _
    $region21: #{impash_forward.1} parent=1 // pred_fallthru
      _
    // Predicated region
    $region22: #{impash_forward.1} parent=1 // pred_check
      _
    $region23: #{impash_forward.1} parent=1 // pred_check_branch
      %39 = sbr.rel (0) target = $region25
    $region24: #{impash_forward.1} parent=1 // pred_region
      _
    $region25: #{impash_forward.1} parent=1 // pred_fallthru
      _
    // Predicated region
    $region26: #{impash_forward.1} parent=1 // pred_check
      _
    $region27: #{impash_forward.1} parent=1 // pred_check_branch
      %41 = sbr.rel (0) target = $region29
    $region28: #{impash_forward.1} parent=1 // pred_region
      %43 = vsyncadd [#allocation3], 0
      %s44 = sshll.u32 %s6, 4
      %s45 = int_to_ptr.hbm [resolvable:$true] %s44
      %s46 = sshll.u32 [#allocation2], 4
      %s47 = int_to_ptr.vmem [resolvable:$true] %s46
      %52 = dma.hbm_to_vmem [thread:$0]  %s45, 16384, %s47, [#allocation3], 1024, 1024, 64
    $region29: #{impash_forward.1} parent=1 // pred_fallthru
      _
    // Predicated region
    $region30: #{impash_forward.1} parent=1 // pred_check
      _
    $region31: #{impash_forward.1} parent=1 // pred_check_branch
      %54 = sbr.rel (0) target = $region33
    $region32: #{impash_forward.1} parent=1 // pred_region
      _
    $region33: #{impash_forward.1} parent=1 // pred_fallthru
      _
    // Predicated region
    $region34: #{impash_forward.1} parent=1 // pred_check
      _
    $region35: #{impash_forward.1} parent=1 // pred_check_branch
      %56 = sbr.rel (0) target = $region37
    $region36: #{impash_forward.1} parent=1 // pred_region
      %58 = vsyncadd [#allocation6], 0
      %s59 = sshll.u32 %s8, 4
      %s60 = int_to_ptr.hbm [resolvable:$true] %s59
      %s61 = sshll.u32 [#allocation5], 4
      %s62 = int_to_ptr.vmem [resolvable:$true] %s61
      %67 = dma.hbm_to_vmem [thread:$0]  %s60, 16384, %s62, [#allocation6], 64, 64, 4
    $region37: #{impash_forward.1} parent=1 // pred_fallthru
      _
    // Predicated region
    $region38: #{impash_forward.1} parent=1 // pred_check
      _
    $region39: #{impash_forward.1} parent=1 // pred_check_branch
      %69 = sbr.rel (0) target = $region41
    $region40: #{impash_forward.1} parent=1 // pred_region
      _
    $region41: #{impash_forward.1} parent=1 // pred_fallthru
      _
    // Predicated region
    $region42: #{impash_forward.1} parent=1 // pred_check
      _
    $region43: #{impash_forward.1} parent=1 // pred_check_branch
      %71 = sbr.rel (0) target = $region45
    $region44: #{impash_forward.1} parent=1 // pred_region
      _
    $region45: #{impash_forward.1} parent=1 // pred_fallthru
      _
    // Predicated region
    $region46: #{impash_forward.1} parent=1 // pred_check
      _
    $region47: #{impash_forward.1} parent=1 // pred_check_branch
      %73 = sbr.rel (0) target = $region49
    $region48: #{impash_forward.1} parent=1 // pred_region
      _
    $region49: #{impash_forward.1} parent=1 // pred_fallthru
      _
    // Predicated region
    $region50: #{impash_forward.1} parent=1 // pred_check
      _
    $region51: #{impash_forward.1} parent=1 // pred_check_branch
      %75 = sbr.rel (0) target = $region53
    $region52: #{impash_forward.1} parent=1 // pred_region
      %77 = dma.done [#allocation3], 16384
    $region53: #{impash_forward.1} parent=1 // pred_fallthru
      _
    // Predicated region
    $region54: #{impash_forward.1} parent=1 // pred_check
      _
    $region55: #{impash_forward.1} parent=1 // pred_check_branch
      %79 = sbr.rel (0) target = $region57
    $region56: #{impash_forward.1} parent=1 // pred_region
      %81 = dma.done [#allocation6], 16384
    $region57: #{impash_forward.1} parent=1 // pred_fallthru
      _
    %v82 = vld [vmem:[%s0] sm:$0xff]
    %v83 = vld [vmem:[%s0 + $0x8] sm:$0xff]
    %v84 = vld [vmem:[%s0 + $0x10] sm:$0xff]
    %v85 = vld [vmem:[%s0 + $0x18] sm:$0xff]
    %v86 = vld [vmem:[%s0 + $0x20] sm:$0xff]
    %v87 = vld [vmem:[%s0 + $0x28] sm:$0xff]
    %v88 = vpack.c.bf16 %v83, %v82
    %v89 = vpack.c.bf16 %v85, %v84
    %v90 = vpack.c.bf16 %v87, %v86
    %v91 = vld [vmem:[%s1] sm:$0xff]
    %v92 = vld [vmem:[%s1 + $0x8] sm:$0xff]
    %v93 = vld [vmem:[%s1 + $0x10] sm:$0xff]
    %v94 = vld [vmem:[%s1 + $0x18] sm:$0xff]
    %v95 = vld [vmem:[%s1 + $0x20] sm:$0xff]
    %v96 = vld [vmem:[%s1 + $0x28] sm:$0xff]
    %v97 = vpack.c.bf16 %v92, %v91
    %v98 = vpack.c.bf16 %v94, %v93
    %v99 = vpack.c.bf16 %v96, %v95
    %v100 = vld [vmem:[%s2] sm:$0xff]
    %v101 = vld [vmem:[%s2 + $0x8] sm:$0xff]
    %v102 = vld [vmem:[%s2 + $0x10] sm:$0xff]
    %v103 = vld [vmem:[%s2 + $0x18] sm:$0xff]
    %v104 = vld [vmem:[%s2 + $0x20] sm:$0xff]
    %v105 = vld [vmem:[%s2 + $0x28] sm:$0xff]
    %v106 = vpack.c.bf16 %v101, %v100
    %v107 = vpack.c.bf16 %v103, %v102
    %v108 = vpack.c.bf16 %v105, %v104
    %v109 = vld [vmem:[%s3] sm:$0xff]
    %v110 = vld [vmem:[%s3 + $0x8] sm:$0xff]
    %v111 = vld [vmem:[%s3 + $0x10] sm:$0xff]
    %v112 = vld [vmem:[%s3 + $0x18] sm:$0xff]
    %v113 = vld [vmem:[%s3 + $0x20] sm:$0xff]
    %v114 = vld [vmem:[%s3 + $0x28] sm:$0xff]
    %v115 = vpack.c.bf16 %v110, %v109
    %v116 = vpack.c.bf16 %v112, %v111
    %v117 = vpack.c.bf16 %v114, %v113
    %v121 = vunpack.c.l.b16 %v88
    %v122 = vunpack.c.h.b16 %v88
    %v123 = vunpack.c.l.b16 %v89
    %v124 = vunpack.c.h.b16 %v89
    %v125 = vunpack.c.l.b16 %v90
    %v126 = vunpack.c.h.b16 %v90
    %v127 = vpack.c.b16 %v121, %v121
    %v128 = vpack.c.b16 %v122, %v122
    %v129 = vpack.c.b16 %v123, %v123
    %v130 = vpack.c.b16 %v124, %v124
    %v131 = vpack.c.b16 %v125, %v125
    %v132 = vpack.c.b16 %v126, %v126
    %v136 = vunpack.c.l.b16 %v97
    %v137 = vunpack.c.h.b16 %v97
    %v138 = vunpack.c.l.b16 %v98
    %v139 = vunpack.c.h.b16 %v98
    %v140 = vunpack.c.l.b16 %v99
    %v141 = vunpack.c.h.b16 %v99
    %v142 = vpack.c.b16 %v136, %v136
    %v143 = vpack.c.b16 %v137, %v137
    %v144 = vpack.c.b16 %v138, %v138
    %v145 = vpack.c.b16 %v139, %v139
    %v146 = vpack.c.b16 %v140, %v140
    %v147 = vpack.c.b16 %v141, %v141
    %v151 = vunpack.c.l.b16 %v106
    %v152 = vunpack.c.h.b16 %v106
    %v153 = vunpack.c.l.b16 %v107
    %v154 = vunpack.c.h.b16 %v107
    %v155 = vunpack.c.l.b16 %v108
    %v156 = vunpack.c.h.b16 %v108
    %v157 = vpack.c.b16 %v151, %v151
    %v158 = vpack.c.b16 %v152, %v152
    %v159 = vpack.c.b16 %v153, %v153
    %v160 = vpack.c.b16 %v154, %v154
    %v161 = vpack.c.b16 %v155, %v155
    %v162 = vpack.c.b16 %v156, %v156
    %v166 = vunpack.c.l.b16 %v115
    %v167 = vunpack.c.h.b16 %v115
    %v168 = vunpack.c.l.b16 %v116
    %v169 = vunpack.c.h.b16 %v116
    %v170 = vunpack.c.l.b16 %v117
    %v171 = vunpack.c.h.b16 %v117
    %v172 = vpack.c.b16 %v166, %v166
    %v173 = vpack.c.b16 %v167, %v167
    %v174 = vpack.c.b16 %v168, %v168
    %v175 = vpack.c.b16 %v169, %v169
    %v176 = vpack.c.b16 %v170, %v170
    %v177 = vpack.c.b16 %v171, %v171
    %vm178 = vcmask 1043456
    %v181 = vsel %vm178, %v127, %v142
    %v185 = vsel %vm178, %v128, %v143
    %v189 = vsel %vm178, %v129, %v144
    %v193 = vsel %vm178, %v130, %v145
    %v197 = vsel %vm178, %v131, %v146
    %v201 = vsel %vm178, %v132, %v147
    %v205 = vsel %vm178, %v157, %v172
    %v209 = vsel %vm178, %v158, %v173
    %v213 = vsel %vm178, %v159, %v174
    %v217 = vsel %vm178, %v160, %v175
    %v221 = vsel %vm178, %v161, %v176
    %v225 = vsel %vm178, %v162, %v177
    %v227 = vld [vmem:[%s4] sm:$0xf]
    %v228 = vld [vmem:[%s4 + $0x4] sm:$0xf]
    %v229 = vld [vmem:[%s4 + $0x8] sm:$0xf]
    %v230 = vld [vmem:[%s4 + $0xc] sm:$0xf]
    %v231 = vld [vmem:[%s4 + $0x10] sm:$0xf]
    %v232 = vld [vmem:[%s4 + $0x14] sm:$0xf]
    %v233 = vld [vmem:[%s4 + $0x18] sm:$0xf]
    %v234 = vld [vmem:[%s4 + $0x1c] sm:$0xf]
    %v235 = vld [vmem:[%s4 + $0x20] sm:$0xf]
    %v236 = vld [vmem:[%s4 + $0x24] sm:$0xf]
    %v237 = vld [vmem:[%s4 + $0x28] sm:$0xf]
    %v238 = vld [vmem:[%s4 + $0x2c] sm:$0xf]
    %v239 = vld [vmem:[%s4 + $0x30] sm:$0xf]
    %v240 = vld [vmem:[%s4 + $0x34] sm:$0xf]
    %v241 = vld [vmem:[%s4 + $0x38] sm:$0xf]
    %v242 = vld [vmem:[%s4 + $0x3c] sm:$0xf]
    %v243 = vld [vmem:[%s4 + $0x40] sm:$0xf]
    %v244 = vld [vmem:[%s4 + $0x44] sm:$0xf]
    %v245 = vld [vmem:[%s4 + $0x48] sm:$0xf]
    %v246 = vld [vmem:[%s4 + $0x4c] sm:$0xf]
    %v247 = vld [vmem:[%s4 + $0x50] sm:$0xf]
    %v248 = vld [vmem:[%s4 + $0x54] sm:$0xf]
    %v249 = vld [vmem:[%s4 + $0x58] sm:$0xf]
    %v250 = vld [vmem:[%s4 + $0x5c] sm:$0xf]
    %v251 = vld [vmem:[%s4 + $0x60] sm:$0xf]
    %v252 = vld [vmem:[%s4 + $0x64] sm:$0xf]
    %v253 = vld [vmem:[%s4 + $0x68] sm:$0xf]
    %v254 = vld [vmem:[%s4 + $0x6c] sm:$0xf]
    %v255 = vld [vmem:[%s4 + $0x70] sm:$0xf]
    %v256 = vld [vmem:[%s4 + $0x74] sm:$0xf]
    %v257 = vld [vmem:[%s4 + $0x78] sm:$0xf]
    %v258 = vld [vmem:[%s4 + $0x7c] sm:$0xf]
    %v259 = vld [vmem:[%s4 + $0x80] sm:$0xf]
    %v260 = vld [vmem:[%s4 + $0x84] sm:$0xf]
    %v261 = vld [vmem:[%s4 + $0x88] sm:$0xf]
    %v262 = vld [vmem:[%s4 + $0x8c] sm:$0xf]
    %v263 = vld [vmem:[%s4 + $0x90] sm:$0xf]
    %v264 = vld [vmem:[%s4 + $0x94] sm:$0xf]
    %v265 = vld [vmem:[%s4 + $0x98] sm:$0xf]
    %v266 = vld [vmem:[%s4 + $0x9c] sm:$0xf]
    %v267 = vld [vmem:[%s4 + $0xa0] sm:$0xf]
    %v268 = vld [vmem:[%s4 + $0xa4] sm:$0xf]
    %v269 = vld [vmem:[%s4 + $0xa8] sm:$0xf]
    %v270 = vld [vmem:[%s4 + $0xac] sm:$0xf]
    %v271 = vld [vmem:[%s4 + $0xb0] sm:$0xf]
    %v272 = vld [vmem:[%s4 + $0xb4] sm:$0xf]
    %v273 = vld [vmem:[%s4 + $0xb8] sm:$0xf]
    %v274 = vld [vmem:[%s4 + $0xbc] sm:$0xf]
    %v275 = vld [vmem:[%s4 + $0xc0] sm:$0xf]
    %v276 = vld [vmem:[%s4 + $0xc4] sm:$0xf]
    %v277 = vld [vmem:[%s4 + $0xc8] sm:$0xf]
    %v278 = vld [vmem:[%s4 + $0xcc] sm:$0xf]
    %v279 = vld [vmem:[%s4 + $0xd0] sm:$0xf]
    %v280 = vld [vmem:[%s4 + $0xd4] sm:$0xf]
    %v281 = vld [vmem:[%s4 + $0xd8] sm:$0xf]
    %v282 = vld [vmem:[%s4 + $0xdc] sm:$0xf]
    %v283 = vld [vmem:[%s4 + $0xe0] sm:$0xf]
    %v284 = vld [vmem:[%s4 + $0xe4] sm:$0xf]
    %v285 = vld [vmem:[%s4 + $0xe8] sm:$0xf]
    %v286 = vld [vmem:[%s4 + $0xec] sm:$0xf]
    %v287 = vld [vmem:[%s4 + $0xf0] sm:$0xf]
    %v288 = vld [vmem:[%s4 + $0xf4] sm:$0xf]
    %v289 = vld [vmem:[%s4 + $0xf8] sm:$0xf]
    %v290 = vld [vmem:[%s4 + $0xfc] sm:$0xf]
    %v291 = vld [vmem:[%s4 + $0x100] sm:$0xf]
    %v292 = vld [vmem:[%s4 + $0x104] sm:$0xf]
    %v293 = vld [vmem:[%s4 + $0x108] sm:$0xf]
    %v294 = vld [vmem:[%s4 + $0x10c] sm:$0xf]
    %v295 = vld [vmem:[%s4 + $0x110] sm:$0xf]
    %v296 = vld [vmem:[%s4 + $0x114] sm:$0xf]
    %v297 = vld [vmem:[%s4 + $0x118] sm:$0xf]
    %v298 = vld [vmem:[%s4 + $0x11c] sm:$0xf]
    %v299 = vld [vmem:[%s4 + $0x120] sm:$0xf]
    %v300 = vld [vmem:[%s4 + $0x124] sm:$0xf]
    %v301 = vld [vmem:[%s4 + $0x128] sm:$0xf]
    %v302 = vld [vmem:[%s4 + $0x12c] sm:$0xf]
    %v303 = vld [vmem:[%s4 + $0x130] sm:$0xf]
    %v304 = vld [vmem:[%s4 + $0x134] sm:$0xf]
    %v305 = vld [vmem:[%s4 + $0x138] sm:$0xf]
    %v306 = vld [vmem:[%s4 + $0x13c] sm:$0xf]
    %v307 = vld [vmem:[%s4 + $0x140] sm:$0xf]
    %v308 = vld [vmem:[%s4 + $0x144] sm:$0xf]
    %v309 = vld [vmem:[%s4 + $0x148] sm:$0xf]
    %v310 = vld [vmem:[%s4 + $0x14c] sm:$0xf]
    %v311 = vld [vmem:[%s4 + $0x150] sm:$0xf]
    %v312 = vld [vmem:[%s4 + $0x154] sm:$0xf]
    %v313 = vld [vmem:[%s4 + $0x158] sm:$0xf]
    %v314 = vld [vmem:[%s4 + $0x15c] sm:$0xf]
    %v315 = vld [vmem:[%s4 + $0x160] sm:$0xf]
    %v316 = vld [vmem:[%s4 + $0x164] sm:$0xf]
    %v317 = vld [vmem:[%s4 + $0x168] sm:$0xf]
    %v318 = vld [vmem:[%s4 + $0x16c] sm:$0xf]
    %v319 = vld [vmem:[%s4 + $0x170] sm:$0xf]
    %v320 = vld [vmem:[%s4 + $0x174] sm:$0xf]
    %v321 = vld [vmem:[%s4 + $0x178] sm:$0xf]
    %v322 = vld [vmem:[%s4 + $0x17c] sm:$0xf]
    %v323 = vld [vmem:[%s5] sm:$0x1]
    %v325 = vperm.slane %v323, 0
    %v423 = vunpack.c.l.b16 %v227
    %v424 = vunpack.c.l.b16 %v228
    %v425 = vunpack.c.l.b16 %v229
    %v426 = vunpack.c.l.b16 %v230
    %v427 = vunpack.c.l.b16 %v231
    %v428 = vunpack.c.l.b16 %v232
    %v429 = vunpack.c.l.b16 %v233
    %v430 = vunpack.c.l.b16 %v234
    %v431 = vunpack.c.l.b16 %v235
    %v432 = vunpack.c.l.b16 %v236
    %v433 = vunpack.c.l.b16 %v237
    %v434 = vunpack.c.l.b16 %v238
    %v435 = vunpack.c.l.b16 %v239
    %v436 = vunpack.c.l.b16 %v240
    %v437 = vunpack.c.l.b16 %v241
    %v438 = vunpack.c.l.b16 %v242
    %v439 = vunpack.c.l.b16 %v243
    %v440 = vunpack.c.l.b16 %v244
    %v441 = vunpack.c.l.b16 %v245
    %v442 = vunpack.c.l.b16 %v246
    %v443 = vunpack.c.l.b16 %v247
    %v444 = vunpack.c.l.b16 %v248
    %v445 = vunpack.c.l.b16 %v249
    %v446 = vunpack.c.l.b16 %v250
    %v447 = vunpack.c.l.b16 %v251
    %v448 = vunpack.c.l.b16 %v252
    %v449 = vunpack.c.l.b16 %v253
    %v450 = vunpack.c.l.b16 %v254
    %v451 = vunpack.c.l.b16 %v255
    %v452 = vunpack.c.l.b16 %v256
    %v453 = vunpack.c.l.b16 %v257
    %v454 = vunpack.c.l.b16 %v258
    %v455 = vunpack.c.l.b16 %v259
    %v456 = vunpack.c.l.b16 %v260
    %v457 = vunpack.c.l.b16 %v261
    %v458 = vunpack.c.l.b16 %v262
    %v459 = vunpack.c.l.b16 %v263
    %v460 = vunpack.c.l.b16 %v264
    %v461 = vunpack.c.l.b16 %v265
    %v462 = vunpack.c.l.b16 %v266
    %v463 = vunpack.c.l.b16 %v267
    %v464 = vunpack.c.l.b16 %v268
    %v465 = vunpack.c.l.b16 %v269
    %v466 = vunpack.c.l.b16 %v270
    %v467 = vunpack.c.l.b16 %v271
    %v468 = vunpack.c.l.b16 %v272
    %v469 = vunpack.c.l.b16 %v273
    %v470 = vunpack.c.l.b16 %v274
    %v471 = vunpack.c.l.b16 %v275
    %v472 = vunpack.c.l.b16 %v276
    %v473 = vunpack.c.l.b16 %v277
    %v474 = vunpack.c.l.b16 %v278
    %v475 = vunpack.c.l.b16 %v279
    %v476 = vunpack.c.l.b16 %v280
    %v477 = vunpack.c.l.b16 %v281
    %v478 = vunpack.c.l.b16 %v282
    %v479 = vunpack.c.l.b16 %v283
    %v480 = vunpack.c.l.b16 %v284
    %v481 = vunpack.c.l.b16 %v285
    %v482 = vunpack.c.l.b16 %v286
    %v483 = vunpack.c.l.b16 %v287
    %v484 = vunpack.c.l.b16 %v288
    %v485 = vunpack.c.l.b16 %v289
    %v486 = vunpack.c.l.b16 %v290
    %v487 = vunpack.c.l.b16 %v291
    %v488 = vunpack.c.l.b16 %v292
    %v489 = vunpack.c.l.b16 %v293
    %v490 = vunpack.c.l.b16 %v294
    %v491 = vunpack.c.l.b16 %v295
    %v492 = vunpack.c.l.b16 %v296
    %v493 = vunpack.c.l.b16 %v297
    %v494 = vunpack.c.l.b16 %v298
    %v495 = vunpack.c.l.b16 %v299
    %v496 = vunpack.c.l.b16 %v300
    %v497 = vunpack.c.l.b16 %v301
    %v498 = vunpack.c.l.b16 %v302
    %v499 = vunpack.c.l.b16 %v303
    %v500 = vunpack.c.l.b16 %v304
    %v501 = vunpack.c.l.b16 %v305
    %v502 = vunpack.c.l.b16 %v306
    %v503 = vunpack.c.l.b16 %v307
    %v504 = vunpack.c.l.b16 %v308
    %v505 = vunpack.c.l.b16 %v309
    %v506 = vunpack.c.l.b16 %v310
    %v507 = vunpack.c.l.b16 %v311
    %v508 = vunpack.c.l.b16 %v312
    %v509 = vunpack.c.l.b16 %v313
    %v510 = vunpack.c.l.b16 %v314
    %v511 = vunpack.c.l.b16 %v315
    %v512 = vunpack.c.l.b16 %v316
    %v513 = vunpack.c.l.b16 %v317
    %v514 = vunpack.c.l.b16 %v318
    %v515 = vunpack.c.l.b16 %v319
    %v516 = vunpack.c.l.b16 %v320
    %v517 = vunpack.c.l.b16 %v321
    %v518 = vunpack.c.l.b16 %v322
    %v519 = vpack.c.b16 %v424, %v423
    %v520 = vpack.c.b16 %v426, %v425
    %v521 = vpack.c.b16 %v428, %v427
    %v522 = vpack.c.b16 %v430, %v429
    %v523 = vpack.c.b16 %v432, %v431
    %v524 = vpack.c.b16 %v434, %v433
    %v525 = vpack.c.b16 %v436, %v435
    %v526 = vpack.c.b16 %v438, %v437
    %v527 = vpack.c.b16 %v440, %v439
    %v528 = vpack.c.b16 %v442, %v441
    %v529 = vpack.c.b16 %v444, %v443
    %v530 = vpack.c.b16 %v446, %v445
    %v531 = vpack.c.b16 %v448, %v447
    %v532 = vpack.c.b16 %v450, %v449
    %v533 = vpack.c.b16 %v452, %v451
    %v534 = vpack.c.b16 %v454, %v453
    %v535 = vpack.c.b16 %v456, %v455
    %v536 = vpack.c.b16 %v458, %v457
    %v537 = vpack.c.b16 %v460, %v459
    %v538 = vpack.c.b16 %v462, %v461
    %v539 = vpack.c.b16 %v464, %v463
    %v540 = vpack.c.b16 %v466, %v465
    %v541 = vpack.c.b16 %v468, %v467
    %v542 = vpack.c.b16 %v470, %v469
    %v543 = vpack.c.b16 %v472, %v471
    %v544 = vpack.c.b16 %v474, %v473
    %v545 = vpack.c.b16 %v476, %v475
    %v546 = vpack.c.b16 %v478, %v477
    %v547 = vpack.c.b16 %v480, %v479
    %v548 = vpack.c.b16 %v482, %v481
    %v549 = vpack.c.b16 %v484, %v483
    %v550 = vpack.c.b16 %v486, %v485
    %v551 = vpack.c.b16 %v488, %v487
    %v552 = vpack.c.b16 %v490, %v489
    %v553 = vpack.c.b16 %v492, %v491
    %v554 = vpack.c.b16 %v494, %v493
    %v555 = vpack.c.b16 %v496, %v495
    %v556 = vpack.c.b16 %v498, %v497
    %v557 = vpack.c.b16 %v500, %v499
    %v558 = vpack.c.b16 %v502, %v501
    %v559 = vpack.c.b16 %v504, %v503
    %v560 = vpack.c.b16 %v506, %v505
    %v561 = vpack.c.b16 %v508, %v507
    %v562 = vpack.c.b16 %v510, %v509
    %v563 = vpack.c.b16 %v512, %v511
    %v564 = vpack.c.b16 %v514, %v513
    %v565 = vpack.c.b16 %v516, %v515
    %v566 = vpack.c.b16 %v518, %v517
    %615 = vmatpush.bf16.msra.mxu0 %v526
    %616 = vmatpush.bf16.msra.mxu0 %v525
    %617 = vmatpush.bf16.msra.mxu0 %v524
    %618 = vmatpush.bf16.msra.mxu0 %v523
    %619 = vmatpush.bf16.msra.mxu0 %v522
    %620 = vmatpush.bf16.msra.mxu0 %v521
    %621 = vmatpush.bf16.msra.mxu0 %v520
    %622 = vmatpush.bf16.msra.mxu0 %v519
    %623 = vmatmul.bf16.gmra.mxu0 %v181
    %v624 = vpop.f32.mrf.mxu0
    %v625 = vadd.f32 %v325, %v624
    %v626 = vpop.f32.mrf.mxu0
    %v627 = vadd.f32 %v325, %v626
    %628 = vmatmul.bf16.gmra.mxu0 %v205
    %v629 = vpop.f32.mrf.mxu0
    %v630 = vadd.f32 %v325, %v629
    %v631 = vpop.f32.mrf.mxu0
    %v632 = vadd.f32 %v325, %v631
    %633 = vdwg.mxu0
    %634 = vmatpush.bf16.msra.mxu0 %v534
    %635 = vmatpush.bf16.msra.mxu0 %v533
    %636 = vmatpush.bf16.msra.mxu0 %v532
    %637 = vmatpush.bf16.msra.mxu0 %v531
    %638 = vmatpush.bf16.msra.mxu0 %v530
    %639 = vmatpush.bf16.msra.mxu0 %v529
    %640 = vmatpush.bf16.msra.mxu0 %v528
    %641 = vmatpush.bf16.msra.mxu0 %v527
    %642 = vmatmul.bf16.gmra.mxu0 %v185
    %v643 = vpop.f32.mrf.mxu0
    %v644 = vadd.f32 %v625, %v643
    %v645 = vpop.f32.mrf.mxu0
    %v646 = vadd.f32 %v627, %v645
    %647 = vmatmul.bf16.gmra.mxu0 %v209
    %v648 = vpop.f32.mrf.mxu0
    %v649 = vadd.f32 %v630, %v648
    %v650 = vpop.f32.mrf.mxu0
    %v651 = vadd.f32 %v632, %v650
    %652 = vdwg.mxu0
    %653 = vmatpush.bf16.msra.mxu0 %v542
    %654 = vmatpush.bf16.msra.mxu0 %v541
    %655 = vmatpush.bf16.msra.mxu0 %v540
    %656 = vmatpush.bf16.msra.mxu0 %v539
    %657 = vmatpush.bf16.msra.mxu0 %v538
    %658 = vmatpush.bf16.msra.mxu0 %v537
    %659 = vmatpush.bf16.msra.mxu0 %v536
    %660 = vmatpush.bf16.msra.mxu0 %v535
    %661 = vmatmul.bf16.gmra.mxu0 %v189
    %v662 = vpop.f32.mrf.mxu0
    %v663 = vadd.f32 %v644, %v662
    %v664 = vpop.f32.mrf.mxu0
    %v665 = vadd.f32 %v646, %v664
    %666 = vmatmul.bf16.gmra.mxu0 %v213
    %v667 = vpop.f32.mrf.mxu0
    %v668 = vadd.f32 %v649, %v667
    %v669 = vpop.f32.mrf.mxu0
    %v670 = vadd.f32 %v651, %v669
    %671 = vdwg.mxu0
    %672 = vmatpush.bf16.msra.mxu0 %v550
    %673 = vmatpush.bf16.msra.mxu0 %v549
    %674 = vmatpush.bf16.msra.mxu0 %v548
    %675 = vmatpush.bf16.msra.mxu0 %v547
    %676 = vmatpush.bf16.msra.mxu0 %v546
    %677 = vmatpush.bf16.msra.mxu0 %v545
    %678 = vmatpush.bf16.msra.mxu0 %v544
    %679 = vmatpush.bf16.msra.mxu0 %v543
    %680 = vmatmul.bf16.gmra.mxu0 %v193
    %v681 = vpop.f32.mrf.mxu0
    %v682 = vadd.f32 %v663, %v681
    %v683 = vpop.f32.mrf.mxu0
    %v684 = vadd.f32 %v665, %v683
    %685 = vmatmul.bf16.gmra.mxu0 %v217
    %v686 = vpop.f32.mrf.mxu0
    %v687 = vadd.f32 %v668, %v686
    %v688 = vpop.f32.mrf.mxu0
    %v689 = vadd.f32 %v670, %v688
    %690 = vdwg.mxu0
    %691 = vmatpush.bf16.msra.mxu0 %v558
    %692 = vmatpush.bf16.msra.mxu0 %v557
    %693 = vmatpush.bf16.msra.mxu0 %v556
    %694 = vmatpush.bf16.msra.mxu0 %v555
    %695 = vmatpush.bf16.msra.mxu0 %v554
    %696 = vmatpush.bf16.msra.mxu0 %v553
    %697 = vmatpush.bf16.msra.mxu0 %v552
    %698 = vmatpush.bf16.msra.mxu0 %v551
    %699 = vmatmul.bf16.gmra.mxu0 %v197
    %v700 = vpop.f32.mrf.mxu0
    %v701 = vadd.f32 %v682, %v700
    %v702 = vpop.f32.mrf.mxu0
    %v703 = vadd.f32 %v684, %v702
    %704 = vmatmul.bf16.gmra.mxu0 %v221
    %v705 = vpop.f32.mrf.mxu0
    %v706 = vadd.f32 %v687, %v705
    %v707 = vpop.f32.mrf.mxu0
    %v708 = vadd.f32 %v689, %v707
    %709 = vdwg.mxu0
    %710 = vmatpush.bf16.msra.mxu0 %v566
    %711 = vmatpush.bf16.msra.mxu0 %v565
    %712 = vmatpush.bf16.msra.mxu0 %v564
    %713 = vmatpush.bf16.msra.mxu0 %v563
    %714 = vmatpush.bf16.msra.mxu0 %v562
    %715 = vmatpush.bf16.msra.mxu0 %v561
    %716 = vmatpush.bf16.msra.mxu0 %v560
    %717 = vmatpush.bf16.msra.mxu0 %v559
    %718 = vmatmul.bf16.gmra.mxu0 %v201
    %v719 = vpop.f32.mrf.mxu0
    %v720 = vadd.f32 %v701, %v719
    %v721 = vpop.f32.mrf.mxu0
    %v722 = vadd.f32 %v703, %v721
    %723 = vmatmul.bf16.gmra.mxu0 %v225
    %v724 = vpop.f32.mrf.mxu0
    %v725 = vadd.f32 %v706, %v724
    %v726 = vpop.f32.mrf.mxu0
    %v727 = vadd.f32 %v708, %v726
    %728 = vdwg.mxu0
    %v729 = vpack.c.bf16 %v722, %v720
    %v730 = vpack.c.bf16 %v727, %v725
    %v731 = vld [vmem:[#allocation2] sm:$0xff]
    %v732 = vld [vmem:[#allocation2 + $0x8] sm:$0xff]
    %v733 = vld [vmem:[#allocation2 + $0x10] sm:$0xff]
    %v734 = vld [vmem:[#allocation2 + $0x18] sm:$0xff]
    %v735 = vld [vmem:[#allocation2 + $0x20] sm:$0xff]
    %v736 = vld [vmem:[#allocation2 + $0x28] sm:$0xff]
    %v737 = vld [vmem:[#allocation2 + $0x30] sm:$0xff]
    %v738 = vld [vmem:[#allocation2 + $0x38] sm:$0xff]
    %v739 = vld [vmem:[#allocation2 + $0x40] sm:$0xff]
    %v740 = vld [vmem:[#allocation2 + $0x48] sm:$0xff]
    %v741 = vld [vmem:[#allocation2 + $0x50] sm:$0xff]
    %v742 = vld [vmem:[#allocation2 + $0x58] sm:$0xff]
    %v743 = vld [vmem:[#allocation2 + $0x60] sm:$0xff]
    %v744 = vld [vmem:[#allocation2 + $0x68] sm:$0xff]
    %v745 = vld [vmem:[#allocation2 + $0x70] sm:$0xff]
    %v746 = vld [vmem:[#allocation2 + $0x78] sm:$0xff]
    %v747 = vld [vmem:[#allocation2 + $0x80] sm:$0xff]
    %v748 = vld [vmem:[#allocation2 + $0x88] sm:$0xff]
    %v749 = vld [vmem:[#allocation2 + $0x90] sm:$0xff]
    %v750 = vld [vmem:[#allocation2 + $0x98] sm:$0xff]
    %v751 = vld [vmem:[#allocation2 + $0xa0] sm:$0xff]
    %v752 = vld [vmem:[#allocation2 + $0xa8] sm:$0xff]
    %v753 = vld [vmem:[#allocation2 + $0xb0] sm:$0xff]
    %v754 = vld [vmem:[#allocation2 + $0xb8] sm:$0xff]
    %v755 = vld [vmem:[#allocation2 + $0xc0] sm:$0xff]
    %v756 = vld [vmem:[#allocation2 + $0xc8] sm:$0xff]
    %v757 = vld [vmem:[#allocation2 + $0xd0] sm:$0xff]
    %v758 = vld [vmem:[#allocation2 + $0xd8] sm:$0xff]
    %v759 = vld [vmem:[#allocation2 + $0xe0] sm:$0xff]
    %v760 = vld [vmem:[#allocation2 + $0xe8] sm:$0xff]
    %v761 = vld [vmem:[#allocation2 + $0xf0] sm:$0xff]
    %v762 = vld [vmem:[#allocation2 + $0xf8] sm:$0xff]
    %v763 = vld [vmem:[#allocation2 + $0x100] sm:$0xff]
    %v764 = vld [vmem:[#allocation2 + $0x108] sm:$0xff]
    %v765 = vld [vmem:[#allocation2 + $0x110] sm:$0xff]
    %v766 = vld [vmem:[#allocation2 + $0x118] sm:$0xff]
    %v767 = vld [vmem:[#allocation2 + $0x120] sm:$0xff]
    %v768 = vld [vmem:[#allocation2 + $0x128] sm:$0xff]
    %v769 = vld [vmem:[#allocation2 + $0x130] sm:$0xff]
    %v770 = vld [vmem:[#allocation2 + $0x138] sm:$0xff]
    %v771 = vld [vmem:[#allocation2 + $0x140] sm:$0xff]
    %v772 = vld [vmem:[#allocation2 + $0x148] sm:$0xff]
    %v773 = vld [vmem:[#allocation2 + $0x150] sm:$0xff]
    %v774 = vld [vmem:[#allocation2 + $0x158] sm:$0xff]
    %v775 = vld [vmem:[#allocation2 + $0x160] sm:$0xff]
    %v776 = vld [vmem:[#allocation2 + $0x168] sm:$0xff]
    %v777 = vld [vmem:[#allocation2 + $0x170] sm:$0xff]
    %v778 = vld [vmem:[#allocation2 + $0x178] sm:$0xff]
    %v779 = vld [vmem:[#allocation2 + $0x180] sm:$0xff]
    %v780 = vld [vmem:[#allocation2 + $0x188] sm:$0xff]
    %v781 = vld [vmem:[#allocation2 + $0x190] sm:$0xff]
    %v782 = vld [vmem:[#allocation2 + $0x198] sm:$0xff]
    %v783 = vld [vmem:[#allocation2 + $0x1a0] sm:$0xff]
    %v784 = vld [vmem:[#allocation2 + $0x1a8] sm:$0xff]
    %v785 = vld [vmem:[#allocation2 + $0x1b0] sm:$0xff]
    %v786 = vld [vmem:[#allocation2 + $0x1b8] sm:$0xff]
    %v787 = vld [vmem:[#allocation2 + $0x1c0] sm:$0xff]
    %v788 = vld [vmem:[#allocation2 + $0x1c8] sm:$0xff]
    %v789 = vld [vmem:[#allocation2 + $0x1d0] sm:$0xff]
    %v790 = vld [vmem:[#allocation2 + $0x1d8] sm:$0xff]
    %v791 = vld [vmem:[#allocation2 + $0x1e0] sm:$0xff]
    %v792 = vld [vmem:[#allocation2 + $0x1e8] sm:$0xff]
    %v793 = vld [vmem:[#allocation2 + $0x1f0] sm:$0xff]
    %v794 = vld [vmem:[#allocation2 + $0x1f8] sm:$0xff]
    %v795 = vld [vmem:[#allocation2 + $0x200] sm:$0xff]
    %v796 = vld [vmem:[#allocation2 + $0x208] sm:$0xff]
    %v797 = vld [vmem:[#allocation2 + $0x210] sm:$0xff]
    %v798 = vld [vmem:[#allocation2 + $0x218] sm:$0xff]
    %v799 = vld [vmem:[#allocation2 + $0x220] sm:$0xff]
    %v800 = vld [vmem:[#allocation2 + $0x228] sm:$0xff]
    %v801 = vld [vmem:[#allocation2 + $0x230] sm:$0xff]
    %v802 = vld [vmem:[#allocation2 + $0x238] sm:$0xff]
    %v803 = vld [vmem:[#allocation2 + $0x240] sm:$0xff]
    %v804 = vld [vmem:[#allocation2 + $0x248] sm:$0xff]
    %v805 = vld [vmem:[#allocation2 + $0x250] sm:$0xff]
    %v806 = vld [vmem:[#allocation2 + $0x258] sm:$0xff]
    %v807 = vld [vmem:[#allocation2 + $0x260] sm:$0xff]
    %v808 = vld [vmem:[#allocation2 + $0x268] sm:$0xff]
    %v809 = vld [vmem:[#allocation2 + $0x270] sm:$0xff]
    %v810 = vld [vmem:[#allocation2 + $0x278] sm:$0xff]
    %v811 = vld [vmem:[#allocation2 + $0x280] sm:$0xff]
    %v812 = vld [vmem:[#allocation2 + $0x288] sm:$0xff]
    %v813 = vld [vmem:[#allocation2 + $0x290] sm:$0xff]
    %v814 = vld [vmem:[#allocation2 + $0x298] sm:$0xff]
    %v815 = vld [vmem:[#allocation2 + $0x2a0] sm:$0xff]
    %v816 = vld [vmem:[#allocation2 + $0x2a8] sm:$0xff]
    %v817 = vld [vmem:[#allocation2 + $0x2b0] sm:$0xff]
    %v818 = vld [vmem:[#allocation2 + $0x2b8] sm:$0xff]
    %v819 = vld [vmem:[#allocation2 + $0x2c0] sm:$0xff]
    %v820 = vld [vmem:[#allocation2 + $0x2c8] sm:$0xff]
    %v821 = vld [vmem:[#allocation2 + $0x2d0] sm:$0xff]
    %v822 = vld [vmem:[#allocation2 + $0x2d8] sm:$0xff]
    %v823 = vld [vmem:[#allocation2 + $0x2e0] sm:$0xff]
    %v824 = vld [vmem:[#allocation2 + $0x2e8] sm:$0xff]
    %v825 = vld [vmem:[#allocation2 + $0x2f0] sm:$0xff]
    %v826 = vld [vmem:[#allocation2 + $0x2f8] sm:$0xff]
    %v827 = vld [vmem:[#allocation2 + $0x300] sm:$0xff]
    %v828 = vld [vmem:[#allocation2 + $0x308] sm:$0xff]
    %v829 = vld [vmem:[#allocation2 + $0x310] sm:$0xff]
    %v830 = vld [vmem:[#allocation2 + $0x318] sm:$0xff]
    %v831 = vld [vmem:[#allocation2 + $0x320] sm:$0xff]
    %v832 = vld [vmem:[#allocation2 + $0x328] sm:$0xff]
    %v833 = vld [vmem:[#allocation2 + $0x330] sm:$0xff]
    %v834 = vld [vmem:[#allocation2 + $0x338] sm:$0xff]
    %v835 = vld [vmem:[#allocation2 + $0x340] sm:$0xff]
    %v836 = vld [vmem:[#allocation2 + $0x348] sm:$0xff]
    %v837 = vld [vmem:[#allocation2 + $0x350] sm:$0xff]
    %v838 = vld [vmem:[#allocation2 + $0x358] sm:$0xff]
    %v839 = vld [vmem:[#allocation2 + $0x360] sm:$0xff]
    %v840 = vld [vmem:[#allocation2 + $0x368] sm:$0xff]
    %v841 = vld [vmem:[#allocation2 + $0x370] sm:$0xff]
    %v842 = vld [vmem:[#allocation2 + $0x378] sm:$0xff]
    %v843 = vld [vmem:[#allocation2 + $0x380] sm:$0xff]
    %v844 = vld [vmem:[#allocation2 + $0x388] sm:$0xff]
    %v845 = vld [vmem:[#allocation2 + $0x390] sm:$0xff]
    %v846 = vld [vmem:[#allocation2 + $0x398] sm:$0xff]
    %v847 = vld [vmem:[#allocation2 + $0x3a0] sm:$0xff]
    %v848 = vld [vmem:[#allocation2 + $0x3a8] sm:$0xff]
    %v849 = vld [vmem:[#allocation2 + $0x3b0] sm:$0xff]
    %v850 = vld [vmem:[#allocation2 + $0x3b8] sm:$0xff]
    %v851 = vld [vmem:[#allocation2 + $0x3c0] sm:$0xff]
    %v852 = vld [vmem:[#allocation2 + $0x3c8] sm:$0xff]
    %v853 = vld [vmem:[#allocation2 + $0x3d0] sm:$0xff]
    %v854 = vld [vmem:[#allocation2 + $0x3d8] sm:$0xff]
    %v855 = vld [vmem:[#allocation2 + $0x3e0] sm:$0xff]
    %v856 = vld [vmem:[#allocation2 + $0x3e8] sm:$0xff]
    %v857 = vld [vmem:[#allocation2 + $0x3f0] sm:$0xff]
    %v858 = vld [vmem:[#allocation2 + $0x3f8] sm:$0xff]
    %v859 = vld [vmem:[%s7] sm:$0xff]
    %v860 = vld [vmem:[%s7 + $0x8] sm:$0xff]
    %v863 = vperm.slane %v859, 0
    %v864 = vperm.slane %v859, 1
    %v865 = vperm.slane %v859, 2
    %v866 = vperm.slane %v859, 3
    %v867 = vperm.slane %v859, 4
    %v868 = vperm.slane %v859, 5
    %v869 = vperm.slane %v859, 6
    %v870 = vperm.slane %v859, 7
    %v871 = vperm.slane %v860, 0
    %v872 = vperm.slane %v860, 1
    %v873 = vperm.slane %v860, 2
    %v874 = vperm.slane %v860, 3
    %v875 = vperm.slane %v860, 4
    %v876 = vperm.slane %v860, 5
    %v877 = vperm.slane %v860, 6
    %v878 = vperm.slane %v860, 7
    %v1023 = vunpack.c.l.b16 %v731
    %v1024 = vunpack.c.h.b16 %v731
    %v1025 = vunpack.c.l.b16 %v732
    %v1026 = vunpack.c.h.b16 %v732
    %v1027 = vunpack.c.l.b16 %v733
    %v1028 = vunpack.c.h.b16 %v733
    %v1029 = vunpack.c.l.b16 %v734
    %v1030 = vunpack.c.h.b16 %v734
    %v1031 = vunpack.c.l.b16 %v735
    %v1032 = vunpack.c.h.b16 %v735
    %v1033 = vunpack.c.l.b16 %v736
    %v1034 = vunpack.c.h.b16 %v736
    %v1035 = vunpack.c.l.b16 %v737
    %v1036 = vunpack.c.h.b16 %v737
    %v1037 = vunpack.c.l.b16 %v738
    %v1038 = vunpack.c.h.b16 %v738
    %v1039 = vunpack.c.l.b16 %v739
    %v1040 = vunpack.c.h.b16 %v739
    %v1041 = vunpack.c.l.b16 %v740
    %v1042 = vunpack.c.h.b16 %v740
    %v1043 = vunpack.c.l.b16 %v741
    %v1044 = vunpack.c.h.b16 %v741
    %v1045 = vunpack.c.l.b16 %v742
    %v1046 = vunpack.c.h.b16 %v742
    %v1047 = vunpack.c.l.b16 %v743
    %v1048 = vunpack.c.h.b16 %v743
    %v1049 = vunpack.c.l.b16 %v744
    %v1050 = vunpack.c.h.b16 %v744
    %v1051 = vunpack.c.l.b16 %v745
    %v1052 = vunpack.c.h.b16 %v745
    %v1053 = vunpack.c.l.b16 %v746
    %v1054 = vunpack.c.h.b16 %v746
    %v1055 = vunpack.c.l.b16 %v747
    %v1056 = vunpack.c.h.b16 %v747
    %v1057 = vunpack.c.l.b16 %v748
    %v1058 = vunpack.c.h.b16 %v748
    %v1059 = vunpack.c.l.b16 %v749
    %v1060 = vunpack.c.h.b16 %v749
    %v1061 = vunpack.c.l.b16 %v750
    %v1062 = vunpack.c.h.b16 %v750
    %v1063 = vunpack.c.l.b16 %v751
    %v1064 = vunpack.c.h.b16 %v751
    %v1065 = vunpack.c.l.b16 %v752
    %v1066 = vunpack.c.h.b16 %v752
    %v1067 = vunpack.c.l.b16 %v753
    %v1068 = vunpack.c.h.b16 %v753
    %v1069 = vunpack.c.l.b16 %v754
    %v1070 = vunpack.c.h.b16 %v754
    %v1071 = vunpack.c.l.b16 %v755
    %v1072 = vunpack.c.h.b16 %v755
    %v1073 = vunpack.c.l.b16 %v756
    %v1074 = vunpack.c.h.b16 %v756
    %v1075 = vunpack.c.l.b16 %v757
    %v1076 = vunpack.c.h.b16 %v757
    %v1077 = vunpack.c.l.b16 %v758
    %v1078 = vunpack.c.h.b16 %v758
    %v1079 = vunpack.c.l.b16 %v759
    %v1080 = vunpack.c.h.b16 %v759
    %v1081 = vunpack.c.l.b16 %v760
    %v1082 = vunpack.c.h.b16 %v760
    %v1083 = vunpack.c.l.b16 %v761
    %v1084 = vunpack.c.h.b16 %v761
    %v1085 = vunpack.c.l.b16 %v762
    %v1086 = vunpack.c.h.b16 %v762
    %v1087 = vunpack.c.l.b16 %v763
    %v1088 = vunpack.c.h.b16 %v763
    %v1089 = vunpack.c.l.b16 %v764
    %v1090 = vunpack.c.h.b16 %v764
    %v1091 = vunpack.c.l.b16 %v765
    %v1092 = vunpack.c.h.b16 %v765
    %v1093 = vunpack.c.l.b16 %v766
    %v1094 = vunpack.c.h.b16 %v766
    %v1095 = vunpack.c.l.b16 %v767
    %v1096 = vunpack.c.h.b16 %v767
    %v1097 = vunpack.c.l.b16 %v768
    %v1098 = vunpack.c.h.b16 %v768
    %v1099 = vunpack.c.l.b16 %v769
    %v1100 = vunpack.c.h.b16 %v769
    %v1101 = vunpack.c.l.b16 %v770
    %v1102 = vunpack.c.h.b16 %v770
    %v1103 = vunpack.c.l.b16 %v771
    %v1104 = vunpack.c.h.b16 %v771
    %v1105 = vunpack.c.l.b16 %v772
    %v1106 = vunpack.c.h.b16 %v772
    %v1107 = vunpack.c.l.b16 %v773
    %v1108 = vunpack.c.h.b16 %v773
    %v1109 = vunpack.c.l.b16 %v774
    %v1110 = vunpack.c.h.b16 %v774
    %v1111 = vunpack.c.l.b16 %v775
    %v1112 = vunpack.c.h.b16 %v775
    %v1113 = vunpack.c.l.b16 %v776
    %v1114 = vunpack.c.h.b16 %v776
    %v1115 = vunpack.c.l.b16 %v777
    %v1116 = vunpack.c.h.b16 %v777
    %v1117 = vunpack.c.l.b16 %v778
    %v1118 = vunpack.c.h.b16 %v778
    %v1119 = vunpack.c.l.b16 %v779
    %v1120 = vunpack.c.h.b16 %v779
    %v1121 = vunpack.c.l.b16 %v780
    %v1122 = vunpack.c.h.b16 %v780
    %v1123 = vunpack.c.l.b16 %v781
    %v1124 = vunpack.c.h.b16 %v781
    %v1125 = vunpack.c.l.b16 %v782
    %v1126 = vunpack.c.h.b16 %v782
    %v1127 = vunpack.c.l.b16 %v783
    %v1128 = vunpack.c.h.b16 %v783
    %v1129 = vunpack.c.l.b16 %v784
    %v1130 = vunpack.c.h.b16 %v784
    %v1131 = vunpack.c.l.b16 %v785
    %v1132 = vunpack.c.h.b16 %v785
    %v1133 = vunpack.c.l.b16 %v786
    %v1134 = vunpack.c.h.b16 %v786
    %v1135 = vunpack.c.l.b16 %v787
    %v1136 = vunpack.c.h.b16 %v787
    %v1137 = vunpack.c.l.b16 %v788
    %v1138 = vunpack.c.h.b16 %v788
    %v1139 = vunpack.c.l.b16 %v789
    %v1140 = vunpack.c.h.b16 %v789
    %v1141 = vunpack.c.l.b16 %v790
    %v1142 = vunpack.c.h.b16 %v790
    %v1143 = vunpack.c.l.b16 %v791
    %v1144 = vunpack.c.h.b16 %v791
    %v1145 = vunpack.c.l.b16 %v792
    %v1146 = vunpack.c.h.b16 %v792
    %v1147 = vunpack.c.l.b16 %v793
    %v1148 = vunpack.c.h.b16 %v793
    %v1149 = vunpack.c.l.b16 %v794
    %v1150 = vunpack.c.h.b16 %v794
    %v1151 = vunpack.c.l.b16 %v795
    %v1152 = vunpack.c.h.b16 %v795
    %v1153 = vunpack.c.l.b16 %v796
    %v1154 = vunpack.c.h.b16 %v796
    %v1155 = vunpack.c.l.b16 %v797
    %v1156 = vunpack.c.h.b16 %v797
    %v1157 = vunpack.c.l.b16 %v798
    %v1158 = vunpack.c.h.b16 %v798
    %v1159 = vunpack.c.l.b16 %v799
    %v1160 = vunpack.c.h.b16 %v799
    %v1161 = vunpack.c.l.b16 %v800
    %v1162 = vunpack.c.h.b16 %v800
    %v1163 = vunpack.c.l.b16 %v801
    %v1164 = vunpack.c.h.b16 %v801
    %v1165 = vunpack.c.l.b16 %v802
    %v1166 = vunpack.c.h.b16 %v802
    %v1167 = vunpack.c.l.b16 %v803
    %v1168 = vunpack.c.h.b16 %v803
    %v1169 = vunpack.c.l.b16 %v804
    %v1170 = vunpack.c.h.b16 %v804
    %v1171 = vunpack.c.l.b16 %v805
    %v1172 = vunpack.c.h.b16 %v805
    %v1173 = vunpack.c.l.b16 %v806
    %v1174 = vunpack.c.h.b16 %v806
    %v1175 = vunpack.c.l.b16 %v807
    %v1176 = vunpack.c.h.b16 %v807
    %v1177 = vunpack.c.l.b16 %v808
    %v1178 = vunpack.c.h.b16 %v808
    %v1179 = vunpack.c.l.b16 %v809
    %v1180 = vunpack.c.h.b16 %v809
    %v1181 = vunpack.c.l.b16 %v810
    %v1182 = vunpack.c.h.b16 %v810
    %v1183 = vunpack.c.l.b16 %v811
    %v1184 = vunpack.c.h.b16 %v811
    %v1185 = vunpack.c.l.b16 %v812
    %v1186 = vunpack.c.h.b16 %v812
    %v1187 = vunpack.c.l.b16 %v813
    %v1188 = vunpack.c.h.b16 %v813
    %v1189 = vunpack.c.l.b16 %v814
    %v1190 = vunpack.c.h.b16 %v814
    %v1191 = vunpack.c.l.b16 %v815
    %v1192 = vunpack.c.h.b16 %v815
    %v1193 = vunpack.c.l.b16 %v816
    %v1194 = vunpack.c.h.b16 %v816
    %v1195 = vunpack.c.l.b16 %v817
    %v1196 = vunpack.c.h.b16 %v817
    %v1197 = vunpack.c.l.b16 %v818
    %v1198 = vunpack.c.h.b16 %v818
    %v1199 = vunpack.c.l.b16 %v819
    %v1200 = vunpack.c.h.b16 %v819
    %v1201 = vunpack.c.l.b16 %v820
    %v1202 = vunpack.c.h.b16 %v820
    %v1203 = vunpack.c.l.b16 %v821
    %v1204 = vunpack.c.h.b16 %v821
    %v1205 = vunpack.c.l.b16 %v822
    %v1206 = vunpack.c.h.b16 %v822
    %v1207 = vunpack.c.l.b16 %v823
    %v1208 = vunpack.c.h.b16 %v823
    %v1209 = vunpack.c.l.b16 %v824
    %v1210 = vunpack.c.h.b16 %v824
    %v1211 = vunpack.c.l.b16 %v825
    %v1212 = vunpack.c.h.b16 %v825
    %v1213 = vunpack.c.l.b16 %v826
    %v1214 = vunpack.c.h.b16 %v826
    %v1215 = vunpack.c.l.b16 %v827
    %v1216 = vunpack.c.h.b16 %v827
    %v1217 = vunpack.c.l.b16 %v828
    %v1218 = vunpack.c.h.b16 %v828
    %v1219 = vunpack.c.l.b16 %v829
    %v1220 = vunpack.c.h.b16 %v829
    %v1221 = vunpack.c.l.b16 %v830
    %v1222 = vunpack.c.h.b16 %v830
    %v1223 = vunpack.c.l.b16 %v831
    %v1224 = vunpack.c.h.b16 %v831
    %v1225 = vunpack.c.l.b16 %v832
    %v1226 = vunpack.c.h.b16 %v832
    %v1227 = vunpack.c.l.b16 %v833
    %v1228 = vunpack.c.h.b16 %v833
    %v1229 = vunpack.c.l.b16 %v834
    %v1230 = vunpack.c.h.b16 %v834
    %v1231 = vunpack.c.l.b16 %v835
    %v1232 = vunpack.c.h.b16 %v835
    %v1233 = vunpack.c.l.b16 %v836
    %v1234 = vunpack.c.h.b16 %v836
    %v1235 = vunpack.c.l.b16 %v837
    %v1236 = vunpack.c.h.b16 %v837
    %v1237 = vunpack.c.l.b16 %v838
    %v1238 = vunpack.c.h.b16 %v838
    %v1239 = vunpack.c.l.b16 %v839
    %v1240 = vunpack.c.h.b16 %v839
    %v1241 = vunpack.c.l.b16 %v840
    %v1242 = vunpack.c.h.b16 %v840
    %v1243 = vunpack.c.l.b16 %v841
    %v1244 = vunpack.c.h.b16 %v841
    %v1245 = vunpack.c.l.b16 %v842
    %v1246 = vunpack.c.h.b16 %v842
    %v1247 = vunpack.c.l.b16 %v843
    %v1248 = vunpack.c.h.b16 %v843
    %v1249 = vunpack.c.l.b16 %v844
    %v1250 = vunpack.c.h.b16 %v844
    %v1251 = vunpack.c.l.b16 %v845
    %v1252 = vunpack.c.h.b16 %v845
    %v1253 = vunpack.c.l.b16 %v846
    %v1254 = vunpack.c.h.b16 %v846
    %v1255 = vunpack.c.l.b16 %v847
    %v1256 = vunpack.c.h.b16 %v847
    %v1257 = vunpack.c.l.b16 %v848
    %v1258 = vunpack.c.h.b16 %v848
    %v1259 = vunpack.c.l.b16 %v849
    %v1260 = vunpack.c.h.b16 %v849
    %v1261 = vunpack.c.l.b16 %v850
    %v1262 = vunpack.c.h.b16 %v850
    %v1263 = vunpack.c.l.b16 %v851
    %v1264 = vunpack.c.h.b16 %v851
    %v1265 = vunpack.c.l.b16 %v852
    %v1266 = vunpack.c.h.b16 %v852
    %v1267 = vunpack.c.l.b16 %v853
    %v1268 = vunpack.c.h.b16 %v853
    %v1269 = vunpack.c.l.b16 %v854
    %v1270 = vunpack.c.h.b16 %v854
    %v1271 = vunpack.c.l.b16 %v855
    %v1272 = vunpack.c.h.b16 %v855
    %v1273 = vunpack.c.l.b16 %v856
    %v1274 = vunpack.c.h.b16 %v856
    %v1275 = vunpack.c.l.b16 %v857
    %v1276 = vunpack.c.h.b16 %v857
    %v1277 = vunpack.c.l.b16 %v858
    %v1278 = vunpack.c.h.b16 %v858
    %v1279 = vpack.c.b16 %v1039, %v1023
    %v1280 = vpack.c.b16 %v1040, %v1024
    %v1281 = vpack.c.b16 %v1041, %v1025
    %v1282 = vpack.c.b16 %v1042, %v1026
    %v1283 = vpack.c.b16 %v1043, %v1027
    %v1284 = vpack.c.b16 %v1044, %v1028
    %v1285 = vpack.c.b16 %v1045, %v1029
    %v1286 = vpack.c.b16 %v1046, %v1030
    %v1287 = vpack.c.b16 %v1047, %v1031
    %v1288 = vpack.c.b16 %v1048, %v1032
    %v1289 = vpack.c.b16 %v1049, %v1033
    %v1290 = vpack.c.b16 %v1050, %v1034
    %v1291 = vpack.c.b16 %v1051, %v1035
    %v1292 = vpack.c.b16 %v1052, %v1036
    %v1293 = vpack.c.b16 %v1053, %v1037
    %v1294 = vpack.c.b16 %v1054, %v1038
    %v1295 = vpack.c.b16 %v1071, %v1055
    %v1296 = vpack.c.b16 %v1072, %v1056
    %v1297 = vpack.c.b16 %v1073, %v1057
    %v1298 = vpack.c.b16 %v1074, %v1058
    %v1299 = vpack.c.b16 %v1075, %v1059
    %v1300 = vpack.c.b16 %v1076, %v1060
    %v1301 = vpack.c.b16 %v1077, %v1061
    %v1302 = vpack.c.b16 %v1078, %v1062
    %v1303 = vpack.c.b16 %v1079, %v1063
    %v1304 = vpack.c.b16 %v1080, %v1064
    %v1305 = vpack.c.b16 %v1081, %v1065
    %v1306 = vpack.c.b16 %v1082, %v1066
    %v1307 = vpack.c.b16 %v1083, %v1067
    %v1308 = vpack.c.b16 %v1084, %v1068
    %v1309 = vpack.c.b16 %v1085, %v1069
    %v1310 = vpack.c.b16 %v1086, %v1070
    %v1311 = vpack.c.b16 %v1103, %v1087
    %v1312 = vpack.c.b16 %v1104, %v1088
    %v1313 = vpack.c.b16 %v1105, %v1089
    %v1314 = vpack.c.b16 %v1106, %v1090
    %v1315 = vpack.c.b16 %v1107, %v1091
    %v1316 = vpack.c.b16 %v1108, %v1092
    %v1317 = vpack.c.b16 %v1109, %v1093
    %v1318 = vpack.c.b16 %v1110, %v1094
    %v1319 = vpack.c.b16 %v1111, %v1095
    %v1320 = vpack.c.b16 %v1112, %v1096
    %v1321 = vpack.c.b16 %v1113, %v1097
    %v1322 = vpack.c.b16 %v1114, %v1098
    %v1323 = vpack.c.b16 %v1115, %v1099
    %v1324 = vpack.c.b16 %v1116, %v1100
    %v1325 = vpack.c.b16 %v1117, %v1101
    %v1326 = vpack.c.b16 %v1118, %v1102
    %v1327 = vpack.c.b16 %v1135, %v1119
    %v1328 = vpack.c.b16 %v1136, %v1120
    %v1329 = vpack.c.b16 %v1137, %v1121
    %v1330 = vpack.c.b16 %v1138, %v1122
    %v1331 = vpack.c.b16 %v1139, %v1123
    %v1332 = vpack.c.b16 %v1140, %v1124
    %v1333 = vpack.c.b16 %v1141, %v1125
    %v1334 = vpack.c.b16 %v1142, %v1126
    %v1335 = vpack.c.b16 %v1143, %v1127
    %v1336 = vpack.c.b16 %v1144, %v1128
    %v1337 = vpack.c.b16 %v1145, %v1129
    %v1338 = vpack.c.b16 %v1146, %v1130
    %v1339 = vpack.c.b16 %v1147, %v1131
    %v1340 = vpack.c.b16 %v1148, %v1132
    %v1341 = vpack.c.b16 %v1149, %v1133
    %v1342 = vpack.c.b16 %v1150, %v1134
    %v1343 = vpack.c.b16 %v1167, %v1151
    %v1344 = vpack.c.b16 %v1168, %v1152
    %v1345 = vpack.c.b16 %v1169, %v1153
    %v1346 = vpack.c.b16 %v1170, %v1154
    %v1347 = vpack.c.b16 %v1171, %v1155
    %v1348 = vpack.c.b16 %v1172, %v1156
    %v1349 = vpack.c.b16 %v1173, %v1157
    %v1350 = vpack.c.b16 %v1174, %v1158
    %v1351 = vpack.c.b16 %v1175, %v1159
    %v1352 = vpack.c.b16 %v1176, %v1160
    %v1353 = vpack.c.b16 %v1177, %v1161
    %v1354 = vpack.c.b16 %v1178, %v1162
    %v1355 = vpack.c.b16 %v1179, %v1163
    %v1356 = vpack.c.b16 %v1180, %v1164
    %v1357 = vpack.c.b16 %v1181, %v1165
    %v1358 = vpack.c.b16 %v1182, %v1166
    %v1359 = vpack.c.b16 %v1199, %v1183
    %v1360 = vpack.c.b16 %v1200, %v1184
    %v1361 = vpack.c.b16 %v1201, %v1185
    %v1362 = vpack.c.b16 %v1202, %v1186
    %v1363 = vpack.c.b16 %v1203, %v1187
    %v1364 = vpack.c.b16 %v1204, %v1188
    %v1365 = vpack.c.b16 %v1205, %v1189
    %v1366 = vpack.c.b16 %v1206, %v1190
    %v1367 = vpack.c.b16 %v1207, %v1191
    %v1368 = vpack.c.b16 %v1208, %v1192
    %v1369 = vpack.c.b16 %v1209, %v1193
    %v1370 = vpack.c.b16 %v1210, %v1194
    %v1371 = vpack.c.b16 %v1211, %v1195
    %v1372 = vpack.c.b16 %v1212, %v1196
    %v1373 = vpack.c.b16 %v1213, %v1197
    %v1374 = vpack.c.b16 %v1214, %v1198
    %v1375 = vpack.c.b16 %v1231, %v1215
    %v1376 = vpack.c.b16 %v1232, %v1216
    %v1377 = vpack.c.b16 %v1233, %v1217
    %v1378 = vpack.c.b16 %v1234, %v1218
    %v1379 = vpack.c.b16 %v1235, %v1219
    %v1380 = vpack.c.b16 %v1236, %v1220
    %v1381 = vpack.c.b16 %v1237, %v1221
    %v1382 = vpack.c.b16 %v1238, %v1222
    %v1383 = vpack.c.b16 %v1239, %v1223
    %v1384 = vpack.c.b16 %v1240, %v1224
    %v1385 = vpack.c.b16 %v1241, %v1225
    %v1386 = vpack.c.b16 %v1242, %v1226
    %v1387 = vpack.c.b16 %v1243, %v1227
    %v1388 = vpack.c.b16 %v1244, %v1228
    %v1389 = vpack.c.b16 %v1245, %v1229
    %v1390 = vpack.c.b16 %v1246, %v1230
    %v1391 = vpack.c.b16 %v1263, %v1247
    %v1392 = vpack.c.b16 %v1264, %v1248
    %v1393 = vpack.c.b16 %v1265, %v1249
    %v1394 = vpack.c.b16 %v1266, %v1250
    %v1395 = vpack.c.b16 %v1267, %v1251
    %v1396 = vpack.c.b16 %v1268, %v1252
    %v1397 = vpack.c.b16 %v1269, %v1253
    %v1398 = vpack.c.b16 %v1270, %v1254
    %v1399 = vpack.c.b16 %v1271, %v1255
    %v1400 = vpack.c.b16 %v1272, %v1256
    %v1401 = vpack.c.b16 %v1273, %v1257
    %v1402 = vpack.c.b16 %v1274, %v1258
    %v1403 = vpack.c.b16 %v1275, %v1259
    %v1404 = vpack.c.b16 %v1276, %v1260
    %v1405 = vpack.c.b16 %v1277, %v1261
    %v1406 = vpack.c.b16 %v1278, %v1262
    %1535 = vmatpush.bf16.msra.mxu0 %v1391
    %1536 = vmatpush.bf16.msra.mxu0 %v1375
    %1537 = vmatpush.bf16.msra.mxu0 %v1359
    %1538 = vmatpush.bf16.msra.mxu0 %v1343
    %1539 = vmatpush.bf16.msra.mxu0 %v1327
    %1540 = vmatpush.bf16.msra.mxu0 %v1311
    %1541 = vmatpush.bf16.msra.mxu0 %v1295
    %1542 = vmatpush.bf16.msra.mxu0 %v1279
    %1543 = vmatmul.bf16.gmra.mxu0 %v729
    %v1544 = vpop.f32.mrf.mxu0
    %v1545 = vadd.f32 %v863, %v1544
    %v1546 = vpop.f32.mrf.mxu0
    %v1547 = vadd.f32 %v863, %v1546
    %1548 = vmatmul.bf16.gmra.mxu0 %v730
    %v1549 = vpop.f32.mrf.mxu0
    %v1550 = vadd.f32 %v863, %v1549
    %v1551 = vpop.f32.mrf.mxu0
    %v1552 = vadd.f32 %v863, %v1551
    %1553 = vdwg.mxu0
    %1554 = vmatpush.bf16.msra.mxu0 %v1392
    %1555 = vmatpush.bf16.msra.mxu0 %v1376
    %1556 = vmatpush.bf16.msra.mxu0 %v1360
    %1557 = vmatpush.bf16.msra.mxu0 %v1344
    %1558 = vmatpush.bf16.msra.mxu0 %v1328
    %1559 = vmatpush.bf16.msra.mxu0 %v1312
    %1560 = vmatpush.bf16.msra.mxu0 %v1296
    %1561 = vmatpush.bf16.msra.mxu0 %v1280
    %1562 = vmatmul.bf16.gmra.mxu0 %v729
    %v1563 = vpop.f32.mrf.mxu0
    %v1564 = vadd.f32 %v864, %v1563
    %v1565 = vpop.f32.mrf.mxu0
    %v1566 = vadd.f32 %v864, %v1565
    %1567 = vmatmul.bf16.gmra.mxu0 %v730
    %v1568 = vpop.f32.mrf.mxu0
    %v1569 = vadd.f32 %v864, %v1568
    %v1570 = vpop.f32.mrf.mxu0
    %v1571 = vadd.f32 %v864, %v1570
    %1572 = vdwg.mxu0
    %1573 = vmatpush.bf16.msra.mxu0 %v1393
    %1574 = vmatpush.bf16.msra.mxu0 %v1377
    %1575 = vmatpush.bf16.msra.mxu0 %v1361
    %1576 = vmatpush.bf16.msra.mxu0 %v1345
    %1577 = vmatpush.bf16.msra.mxu0 %v1329
    %1578 = vmatpush.bf16.msra.mxu0 %v1313
    %1579 = vmatpush.bf16.msra.mxu0 %v1297
    %1580 = vmatpush.bf16.msra.mxu0 %v1281
    %1581 = vmatmul.bf16.gmra.mxu0 %v729
    %v1582 = vpop.f32.mrf.mxu0
    %v1583 = vadd.f32 %v865, %v1582
    %v1584 = vpop.f32.mrf.mxu0
    %v1585 = vadd.f32 %v865, %v1584
    %1586 = vmatmul.bf16.gmra.mxu0 %v730
    %v1587 = vpop.f32.mrf.mxu0
    %v1588 = vadd.f32 %v865, %v1587
    %v1589 = vpop.f32.mrf.mxu0
    %v1590 = vadd.f32 %v865, %v1589
    %1591 = vdwg.mxu0
    %1592 = vmatpush.bf16.msra.mxu0 %v1394
    %1593 = vmatpush.bf16.msra.mxu0 %v1378
    %1594 = vmatpush.bf16.msra.mxu0 %v1362
    %1595 = vmatpush.bf16.msra.mxu0 %v1346
    %1596 = vmatpush.bf16.msra.mxu0 %v1330
    %1597 = vmatpush.bf16.msra.mxu0 %v1314
    %1598 = vmatpush.bf16.msra.mxu0 %v1298
    %1599 = vmatpush.bf16.msra.mxu0 %v1282
    %1600 = vmatmul.bf16.gmra.mxu0 %v729
    %v1601 = vpop.f32.mrf.mxu0
    %v1602 = vadd.f32 %v866, %v1601
    %v1603 = vpop.f32.mrf.mxu0
    %v1604 = vadd.f32 %v866, %v1603
    %1605 = vmatmul.bf16.gmra.mxu0 %v730
    %v1606 = vpop.f32.mrf.mxu0
    %v1607 = vadd.f32 %v866, %v1606
    %v1608 = vpop.f32.mrf.mxu0
    %v1609 = vadd.f32 %v866, %v1608
    %1610 = vdwg.mxu0
    %1611 = vmatpush.bf16.msra.mxu0 %v1395
    %1612 = vmatpush.bf16.msra.mxu0 %v1379
    %1613 = vmatpush.bf16.msra.mxu0 %v1363
    %1614 = vmatpush.bf16.msra.mxu0 %v1347
    %1615 = vmatpush.bf16.msra.mxu0 %v1331
    %1616 = vmatpush.bf16.msra.mxu0 %v1315
    %1617 = vmatpush.bf16.msra.mxu0 %v1299
    %1618 = vmatpush.bf16.msra.mxu0 %v1283
    %1619 = vmatmul.bf16.gmra.mxu0 %v729
    %v1620 = vpop.f32.mrf.mxu0
    %v1621 = vadd.f32 %v867, %v1620
    %v1622 = vpop.f32.mrf.mxu0
    %v1623 = vadd.f32 %v867, %v1622
    %1624 = vmatmul.bf16.gmra.mxu0 %v730
    %v1625 = vpop.f32.mrf.mxu0
    %v1626 = vadd.f32 %v867, %v1625
    %v1627 = vpop.f32.mrf.mxu0
    %v1628 = vadd.f32 %v867, %v1627
    %1629 = vdwg.mxu0
    %1630 = vmatpush.bf16.msra.mxu0 %v1396
    %1631 = vmatpush.bf16.msra.mxu0 %v1380
    %1632 = vmatpush.bf16.msra.mxu0 %v1364
    %1633 = vmatpush.bf16.msra.mxu0 %v1348
    %1634 = vmatpush.bf16.msra.mxu0 %v1332
    %1635 = vmatpush.bf16.msra.mxu0 %v1316
    %1636 = vmatpush.bf16.msra.mxu0 %v1300
    %1637 = vmatpush.bf16.msra.mxu0 %v1284
    %1638 = vmatmul.bf16.gmra.mxu0 %v729
    %v1639 = vpop.f32.mrf.mxu0
    %v1640 = vadd.f32 %v868, %v1639
    %v1641 = vpop.f32.mrf.mxu0
    %v1642 = vadd.f32 %v868, %v1641
    %1643 = vmatmul.bf16.gmra.mxu0 %v730
    %v1644 = vpop.f32.mrf.mxu0
    %v1645 = vadd.f32 %v868, %v1644
    %v1646 = vpop.f32.mrf.mxu0
    %v1647 = vadd.f32 %v868, %v1646
    %1648 = vdwg.mxu0
    %1649 = vmatpush.bf16.msra.mxu0 %v1397
    %1650 = vmatpush.bf16.msra.mxu0 %v1381
    %1651 = vmatpush.bf16.msra.mxu0 %v1365
    %1652 = vmatpush.bf16.msra.mxu0 %v1349
    %1653 = vmatpush.bf16.msra.mxu0 %v1333
    %1654 = vmatpush.bf16.msra.mxu0 %v1317
    %1655 = vmatpush.bf16.msra.mxu0 %v1301
    %1656 = vmatpush.bf16.msra.mxu0 %v1285
    %1657 = vmatmul.bf16.gmra.mxu0 %v729
    %v1658 = vpop.f32.mrf.mxu0
    %v1659 = vadd.f32 %v869, %v1658
    %v1660 = vpop.f32.mrf.mxu0
    %v1661 = vadd.f32 %v869, %v1660
    %1662 = vmatmul.bf16.gmra.mxu0 %v730
    %v1663 = vpop.f32.mrf.mxu0
    %v1664 = vadd.f32 %v869, %v1663
    %v1665 = vpop.f32.mrf.mxu0
    %v1666 = vadd.f32 %v869, %v1665
    %1667 = vdwg.mxu0
    %1668 = vmatpush.bf16.msra.mxu0 %v1398
    %1669 = vmatpush.bf16.msra.mxu0 %v1382
    %1670 = vmatpush.bf16.msra.mxu0 %v1366
    %1671 = vmatpush.bf16.msra.mxu0 %v1350
    %1672 = vmatpush.bf16.msra.mxu0 %v1334
    %1673 = vmatpush.bf16.msra.mxu0 %v1318
    %1674 = vmatpush.bf16.msra.mxu0 %v1302
    %1675 = vmatpush.bf16.msra.mxu0 %v1286
    %1676 = vmatmul.bf16.gmra.mxu0 %v729
    %v1677 = vpop.f32.mrf.mxu0
    %v1678 = vadd.f32 %v870, %v1677
    %v1679 = vpop.f32.mrf.mxu0
    %v1680 = vadd.f32 %v870, %v1679
    %1681 = vmatmul.bf16.gmra.mxu0 %v730
    %v1682 = vpop.f32.mrf.mxu0
    %v1683 = vadd.f32 %v870, %v1682
    %v1684 = vpop.f32.mrf.mxu0
    %v1685 = vadd.f32 %v870, %v1684
    %1686 = vdwg.mxu0
    %1687 = vmatpush.bf16.msra.mxu0 %v1399
    %1688 = vmatpush.bf16.msra.mxu0 %v1383
    %1689 = vmatpush.bf16.msra.mxu0 %v1367
    %1690 = vmatpush.bf16.msra.mxu0 %v1351
    %1691 = vmatpush.bf16.msra.mxu0 %v1335
    %1692 = vmatpush.bf16.msra.mxu0 %v1319
    %1693 = vmatpush.bf16.msra.mxu0 %v1303
    %1694 = vmatpush.bf16.msra.mxu0 %v1287
    %1695 = vmatmul.bf16.gmra.mxu0 %v729
    %v1696 = vpop.f32.mrf.mxu0
    %v1697 = vadd.f32 %v871, %v1696
    %v1698 = vpop.f32.mrf.mxu0
    %v1699 = vadd.f32 %v871, %v1698
    %1700 = vmatmul.bf16.gmra.mxu0 %v730
    %v1701 = vpop.f32.mrf.mxu0
    %v1702 = vadd.f32 %v871, %v1701
    %v1703 = vpop.f32.mrf.mxu0
    %v1704 = vadd.f32 %v871, %v1703
    %1705 = vdwg.mxu0
    %1706 = vmatpush.bf16.msra.mxu0 %v1400
    %1707 = vmatpush.bf16.msra.mxu0 %v1384
    %1708 = vmatpush.bf16.msra.mxu0 %v1368
    %1709 = vmatpush.bf16.msra.mxu0 %v1352
    %1710 = vmatpush.bf16.msra.mxu0 %v1336
    %1711 = vmatpush.bf16.msra.mxu0 %v1320
    %1712 = vmatpush.bf16.msra.mxu0 %v1304
    %1713 = vmatpush.bf16.msra.mxu0 %v1288
    %1714 = vmatmul.bf16.gmra.mxu0 %v729
    %v1715 = vpop.f32.mrf.mxu0
    %v1716 = vadd.f32 %v872, %v1715
    %v1717 = vpop.f32.mrf.mxu0
    %v1718 = vadd.f32 %v872, %v1717
    %1719 = vmatmul.bf16.gmra.mxu0 %v730
    %v1720 = vpop.f32.mrf.mxu0
    %v1721 = vadd.f32 %v872, %v1720
    %v1722 = vpop.f32.mrf.mxu0
    %v1723 = vadd.f32 %v872, %v1722
    %1724 = vdwg.mxu0
    %1725 = vmatpush.bf16.msra.mxu0 %v1401
    %1726 = vmatpush.bf16.msra.mxu0 %v1385
    %1727 = vmatpush.bf16.msra.mxu0 %v1369
    %1728 = vmatpush.bf16.msra.mxu0 %v1353
    %1729 = vmatpush.bf16.msra.mxu0 %v1337
    %1730 = vmatpush.bf16.msra.mxu0 %v1321
    %1731 = vmatpush.bf16.msra.mxu0 %v1305
    %1732 = vmatpush.bf16.msra.mxu0 %v1289
    %1733 = vmatmul.bf16.gmra.mxu0 %v729
    %v1734 = vpop.f32.mrf.mxu0
    %v1735 = vadd.f32 %v873, %v1734
    %v1736 = vpop.f32.mrf.mxu0
    %v1737 = vadd.f32 %v873, %v1736
    %1738 = vmatmul.bf16.gmra.mxu0 %v730
    %v1739 = vpop.f32.mrf.mxu0
    %v1740 = vadd.f32 %v873, %v1739
    %v1741 = vpop.f32.mrf.mxu0
    %v1742 = vadd.f32 %v873, %v1741
    %1743 = vdwg.mxu0
    %1744 = vmatpush.bf16.msra.mxu0 %v1402
    %1745 = vmatpush.bf16.msra.mxu0 %v1386
    %1746 = vmatpush.bf16.msra.mxu0 %v1370
    %1747 = vmatpush.bf16.msra.mxu0 %v1354
    %1748 = vmatpush.bf16.msra.mxu0 %v1338
    %1749 = vmatpush.bf16.msra.mxu0 %v1322
    %1750 = vmatpush.bf16.msra.mxu0 %v1306
    %1751 = vmatpush.bf16.msra.mxu0 %v1290
    %1752 = vmatmul.bf16.gmra.mxu0 %v729
    %v1753 = vpop.f32.mrf.mxu0
    %v1754 = vadd.f32 %v874, %v1753
    %v1755 = vpop.f32.mrf.mxu0
    %v1756 = vadd.f32 %v874, %v1755
    %1757 = vmatmul.bf16.gmra.mxu0 %v730
    %v1758 = vpop.f32.mrf.mxu0
    %v1759 = vadd.f32 %v874, %v1758
    %v1760 = vpop.f32.mrf.mxu0
    %v1761 = vadd.f32 %v874, %v1760
    %1762 = vdwg.mxu0
    %1763 = vmatpush.bf16.msra.mxu0 %v1403
    %1764 = vmatpush.bf16.msra.mxu0 %v1387
    %1765 = vmatpush.bf16.msra.mxu0 %v1371
    %1766 = vmatpush.bf16.msra.mxu0 %v1355
    %1767 = vmatpush.bf16.msra.mxu0 %v1339
    %1768 = vmatpush.bf16.msra.mxu0 %v1323
    %1769 = vmatpush.bf16.msra.mxu0 %v1307
    %1770 = vmatpush.bf16.msra.mxu0 %v1291
    %1771 = vmatmul.bf16.gmra.mxu0 %v729
    %v1772 = vpop.f32.mrf.mxu0
    %v1773 = vadd.f32 %v875, %v1772
    %v1774 = vpop.f32.mrf.mxu0
    %v1775 = vadd.f32 %v875, %v1774
    %1776 = vmatmul.bf16.gmra.mxu0 %v730
    %v1777 = vpop.f32.mrf.mxu0
    %v1778 = vadd.f32 %v875, %v1777
    %v1779 = vpop.f32.mrf.mxu0
    %v1780 = vadd.f32 %v875, %v1779
    %1781 = vdwg.mxu0
    %1782 = vmatpush.bf16.msra.mxu0 %v1404
    %1783 = vmatpush.bf16.msra.mxu0 %v1388
    %1784 = vmatpush.bf16.msra.mxu0 %v1372
    %1785 = vmatpush.bf16.msra.mxu0 %v1356
    %1786 = vmatpush.bf16.msra.mxu0 %v1340
    %1787 = vmatpush.bf16.msra.mxu0 %v1324
    %1788 = vmatpush.bf16.msra.mxu0 %v1308
    %1789 = vmatpush.bf16.msra.mxu0 %v1292
    %1790 = vmatmul.bf16.gmra.mxu0 %v729
    %v1791 = vpop.f32.mrf.mxu0
    %v1792 = vadd.f32 %v876, %v1791
    %v1793 = vpop.f32.mrf.mxu0
    %v1794 = vadd.f32 %v876, %v1793
    %1795 = vmatmul.bf16.gmra.mxu0 %v730
    %v1796 = vpop.f32.mrf.mxu0
    %v1797 = vadd.f32 %v876, %v1796
    %v1798 = vpop.f32.mrf.mxu0
    %v1799 = vadd.f32 %v876, %v1798
    %1800 = vdwg.mxu0
    %1801 = vmatpush.bf16.msra.mxu0 %v1405
    %1802 = vmatpush.bf16.msra.mxu0 %v1389
    %1803 = vmatpush.bf16.msra.mxu0 %v1373
    %1804 = vmatpush.bf16.msra.mxu0 %v1357
    %1805 = vmatpush.bf16.msra.mxu0 %v1341
    %1806 = vmatpush.bf16.msra.mxu0 %v1325
    %1807 = vmatpush.bf16.msra.mxu0 %v1309
    %1808 = vmatpush.bf16.msra.mxu0 %v1293
    %1809 = vmatmul.bf16.gmra.mxu0 %v729
    %v1810 = vpop.f32.mrf.mxu0
    %v1811 = vadd.f32 %v877, %v1810
    %v1812 = vpop.f32.mrf.mxu0
    %v1813 = vadd.f32 %v877, %v1812
    %1814 = vmatmul.bf16.gmra.mxu0 %v730
    %v1815 = vpop.f32.mrf.mxu0
    %v1816 = vadd.f32 %v877, %v1815
    %v1817 = vpop.f32.mrf.mxu0
    %v1818 = vadd.f32 %v877, %v1817
    %1819 = vdwg.mxu0
    %1820 = vmatpush.bf16.msra.mxu0 %v1406
    %1821 = vmatpush.bf16.msra.mxu0 %v1390
    %1822 = vmatpush.bf16.msra.mxu0 %v1374
    %1823 = vmatpush.bf16.msra.mxu0 %v1358
    %1824 = vmatpush.bf16.msra.mxu0 %v1342
    %1825 = vmatpush.bf16.msra.mxu0 %v1326
    %1826 = vmatpush.bf16.msra.mxu0 %v1310
    %1827 = vmatpush.bf16.msra.mxu0 %v1294
    %1828 = vmatmul.bf16.gmra.mxu0 %v729
    %v1829 = vpop.f32.mrf.mxu0
    %v1830 = vadd.f32 %v878, %v1829
    %v1831 = vpop.f32.mrf.mxu0
    %v1832 = vadd.f32 %v878, %v1831
    %1833 = vmatmul.bf16.gmra.mxu0 %v730
    %v1834 = vpop.f32.mrf.mxu0
    %v1835 = vadd.f32 %v878, %v1834
    %v1836 = vpop.f32.mrf.mxu0
    %v1837 = vadd.f32 %v878, %v1836
    %1838 = vdwg.mxu0
    %v1839 = vmax.f32 %v1545, 0.0
    %v1840 = vmax.f32 %v1564, 0.0
    %v1841 = vmax.f32 %v1583, 0.0
    %v1842 = vmax.f32 %v1602, 0.0
    %v1843 = vmax.f32 %v1621, 0.0
    %v1844 = vmax.f32 %v1640, 0.0
    %v1845 = vmax.f32 %v1659, 0.0
    %v1846 = vmax.f32 %v1678, 0.0
    %v1847 = vmax.f32 %v1697, 0.0
    %v1848 = vmax.f32 %v1716, 0.0
    %v1849 = vmax.f32 %v1735, 0.0
    %v1850 = vmax.f32 %v1754, 0.0
    %v1851 = vmax.f32 %v1773, 0.0
    %v1852 = vmax.f32 %v1792, 0.0
    %v1853 = vmax.f32 %v1811, 0.0
    %v1854 = vmax.f32 %v1830, 0.0
    %v1855 = vmax.f32 %v1547, 0.0
    %v1856 = vmax.f32 %v1566, 0.0
    %v1857 = vmax.f32 %v1585, 0.0
    %v1858 = vmax.f32 %v1604, 0.0
    %v1859 = vmax.f32 %v1623, 0.0
    %v1860 = vmax.f32 %v1642, 0.0
    %v1861 = vmax.f32 %v1661, 0.0
    %v1862 = vmax.f32 %v1680, 0.0
    %v1863 = vmax.f32 %v1699, 0.0
    %v1864 = vmax.f32 %v1718, 0.0
    %v1865 = vmax.f32 %v1737, 0.0
    %v1866 = vmax.f32 %v1756, 0.0
    %v1867 = vmax.f32 %v1775, 0.0
    %v1868 = vmax.f32 %v1794, 0.0
    %v1869 = vmax.f32 %v1813, 0.0
    %v1870 = vmax.f32 %v1832, 0.0
    %v1871 = vmax.f32 %v1550, 0.0
    %v1872 = vmax.f32 %v1569, 0.0
    %v1873 = vmax.f32 %v1588, 0.0
    %v1874 = vmax.f32 %v1607, 0.0
    %v1875 = vmax.f32 %v1626, 0.0
    %v1876 = vmax.f32 %v1645, 0.0
    %v1877 = vmax.f32 %v1664, 0.0
    %v1878 = vmax.f32 %v1683, 0.0
    %v1879 = vmax.f32 %v1702, 0.0
    %v1880 = vmax.f32 %v1721, 0.0
    %v1881 = vmax.f32 %v1740, 0.0
    %v1882 = vmax.f32 %v1759, 0.0
    %v1883 = vmax.f32 %v1778, 0.0
    %v1884 = vmax.f32 %v1797, 0.0
    %v1885 = vmax.f32 %v1816, 0.0
    %v1886 = vmax.f32 %v1835, 0.0
    %v1887 = vmax.f32 %v1552, 0.0
    %v1888 = vmax.f32 %v1571, 0.0
    %v1889 = vmax.f32 %v1590, 0.0
    %v1890 = vmax.f32 %v1609, 0.0
    %v1891 = vmax.f32 %v1628, 0.0
    %v1892 = vmax.f32 %v1647, 0.0
    %v1893 = vmax.f32 %v1666, 0.0
    %v1894 = vmax.f32 %v1685, 0.0
    %v1895 = vmax.f32 %v1704, 0.0
    %v1896 = vmax.f32 %v1723, 0.0
    %v1897 = vmax.f32 %v1742, 0.0
    %v1898 = vmax.f32 %v1761, 0.0
    %v1899 = vmax.f32 %v1780, 0.0
    %v1900 = vmax.f32 %v1799, 0.0
    %v1901 = vmax.f32 %v1818, 0.0
    %v1902 = vmax.f32 %v1837, 0.0
    %v1903 = vpack.c.bf16 %v1855, %v1839
    %v1904 = vpack.c.bf16 %v1856, %v1840
    %v1905 = vpack.c.bf16 %v1857, %v1841
    %v1906 = vpack.c.bf16 %v1858, %v1842
    %v1907 = vpack.c.bf16 %v1859, %v1843
    %v1908 = vpack.c.bf16 %v1860, %v1844
    %v1909 = vpack.c.bf16 %v1861, %v1845
    %v1910 = vpack.c.bf16 %v1862, %v1846
    %v1911 = vpack.c.bf16 %v1863, %v1847
    %v1912 = vpack.c.bf16 %v1864, %v1848
    %v1913 = vpack.c.bf16 %v1865, %v1849
    %v1914 = vpack.c.bf16 %v1866, %v1850
    %v1915 = vpack.c.bf16 %v1867, %v1851
    %v1916 = vpack.c.bf16 %v1868, %v1852
    %v1917 = vpack.c.bf16 %v1869, %v1853
    %v1918 = vpack.c.bf16 %v1870, %v1854
    %v1919 = vpack.c.bf16 %v1887, %v1871
    %v1920 = vpack.c.bf16 %v1888, %v1872
    %v1921 = vpack.c.bf16 %v1889, %v1873
    %v1922 = vpack.c.bf16 %v1890, %v1874
    %v1923 = vpack.c.bf16 %v1891, %v1875
    %v1924 = vpack.c.bf16 %v1892, %v1876
    %v1925 = vpack.c.bf16 %v1893, %v1877
    %v1926 = vpack.c.bf16 %v1894, %v1878
    %v1927 = vpack.c.bf16 %v1895, %v1879
    %v1928 = vpack.c.bf16 %v1896, %v1880
    %v1929 = vpack.c.bf16 %v1897, %v1881
    %v1930 = vpack.c.bf16 %v1898, %v1882
    %v1931 = vpack.c.bf16 %v1899, %v1883
    %v1932 = vpack.c.bf16 %v1900, %v1884
    %v1933 = vpack.c.bf16 %v1901, %v1885
    %v1934 = vpack.c.bf16 %v1902, %v1886
    %v1935 = vld [vmem:[#allocation5] sm:$0xf]
    %v1936 = vld [vmem:[#allocation5 + $0x4] sm:$0xf]
    %v1937 = vld [vmem:[#allocation5 + $0x8] sm:$0xf]
    %v1938 = vld [vmem:[#allocation5 + $0xc] sm:$0xf]
    %v1939 = vld [vmem:[#allocation5 + $0x10] sm:$0xf]
    %v1940 = vld [vmem:[#allocation5 + $0x14] sm:$0xf]
    %v1941 = vld [vmem:[#allocation5 + $0x18] sm:$0xf]
    %v1942 = vld [vmem:[#allocation5 + $0x1c] sm:$0xf]
    %v1943 = vld [vmem:[#allocation5 + $0x20] sm:$0xf]
    %v1944 = vld [vmem:[#allocation5 + $0x24] sm:$0xf]
    %v1945 = vld [vmem:[#allocation5 + $0x28] sm:$0xf]
    %v1946 = vld [vmem:[#allocation5 + $0x2c] sm:$0xf]
    %v1947 = vld [vmem:[#allocation5 + $0x30] sm:$0xf]
    %v1948 = vld [vmem:[#allocation5 + $0x34] sm:$0xf]
    %v1949 = vld [vmem:[#allocation5 + $0x38] sm:$0xf]
    %v1950 = vld [vmem:[#allocation5 + $0x3c] sm:$0xf]
    %v1951 = vld [vmem:[#allocation5 + $0x40] sm:$0xf]
    %v1952 = vld [vmem:[#allocation5 + $0x44] sm:$0xf]
    %v1953 = vld [vmem:[#allocation5 + $0x48] sm:$0xf]
    %v1954 = vld [vmem:[#allocation5 + $0x4c] sm:$0xf]
    %v1955 = vld [vmem:[#allocation5 + $0x50] sm:$0xf]
    %v1956 = vld [vmem:[#allocation5 + $0x54] sm:$0xf]
    %v1957 = vld [vmem:[#allocation5 + $0x58] sm:$0xf]
    %v1958 = vld [vmem:[#allocation5 + $0x5c] sm:$0xf]
    %v1959 = vld [vmem:[#allocation5 + $0x60] sm:$0xf]
    %v1960 = vld [vmem:[#allocation5 + $0x64] sm:$0xf]
    %v1961 = vld [vmem:[#allocation5 + $0x68] sm:$0xf]
    %v1962 = vld [vmem:[#allocation5 + $0x6c] sm:$0xf]
    %v1963 = vld [vmem:[#allocation5 + $0x70] sm:$0xf]
    %v1964 = vld [vmem:[#allocation5 + $0x74] sm:$0xf]
    %v1965 = vld [vmem:[#allocation5 + $0x78] sm:$0xf]
    %v1966 = vld [vmem:[#allocation5 + $0x7c] sm:$0xf]
    %v1967 = vld [vmem:[#allocation5 + $0x80] sm:$0xf]
    %v1968 = vld [vmem:[#allocation5 + $0x84] sm:$0xf]
    %v1969 = vld [vmem:[#allocation5 + $0x88] sm:$0xf]
    %v1970 = vld [vmem:[#allocation5 + $0x8c] sm:$0xf]
    %v1971 = vld [vmem:[#allocation5 + $0x90] sm:$0xf]
    %v1972 = vld [vmem:[#allocation5 + $0x94] sm:$0xf]
    %v1973 = vld [vmem:[#allocation5 + $0x98] sm:$0xf]
    %v1974 = vld [vmem:[#allocation5 + $0x9c] sm:$0xf]
    %v1975 = vld [vmem:[#allocation5 + $0xa0] sm:$0xf]
    %v1976 = vld [vmem:[#allocation5 + $0xa4] sm:$0xf]
    %v1977 = vld [vmem:[#allocation5 + $0xa8] sm:$0xf]
    %v1978 = vld [vmem:[#allocation5 + $0xac] sm:$0xf]
    %v1979 = vld [vmem:[#allocation5 + $0xb0] sm:$0xf]
    %v1980 = vld [vmem:[#allocation5 + $0xb4] sm:$0xf]
    %v1981 = vld [vmem:[#allocation5 + $0xb8] sm:$0xf]
    %v1982 = vld [vmem:[#allocation5 + $0xbc] sm:$0xf]
    %v1983 = vld [vmem:[#allocation5 + $0xc0] sm:$0xf]
    %v1984 = vld [vmem:[#allocation5 + $0xc4] sm:$0xf]
    %v1985 = vld [vmem:[#allocation5 + $0xc8] sm:$0xf]
    %v1986 = vld [vmem:[#allocation5 + $0xcc] sm:$0xf]
    %v1987 = vld [vmem:[#allocation5 + $0xd0] sm:$0xf]
    %v1988 = vld [vmem:[#allocation5 + $0xd4] sm:$0xf]
    %v1989 = vld [vmem:[#allocation5 + $0xd8] sm:$0xf]
    %v1990 = vld [vmem:[#allocation5 + $0xdc] sm:$0xf]
    %v1991 = vld [vmem:[#allocation5 + $0xe0] sm:$0xf]
    %v1992 = vld [vmem:[#allocation5 + $0xe4] sm:$0xf]
    %v1993 = vld [vmem:[#allocation5 + $0xe8] sm:$0xf]
    %v1994 = vld [vmem:[#allocation5 + $0xec] sm:$0xf]
    %v1995 = vld [vmem:[#allocation5 + $0xf0] sm:$0xf]
    %v1996 = vld [vmem:[#allocation5 + $0xf4] sm:$0xf]
    %v1997 = vld [vmem:[#allocation5 + $0xf8] sm:$0xf]
    %v1998 = vld [vmem:[#allocation5 + $0xfc] sm:$0xf]
    %v1999 = vld [vmem:[#allocation5 + $0x100] sm:$0xf]
    %v2000 = vld [vmem:[#allocation5 + $0x104] sm:$0xf]
    %v2001 = vld [vmem:[#allocation5 + $0x108] sm:$0xf]
    %v2002 = vld [vmem:[#allocation5 + $0x10c] sm:$0xf]
    %v2003 = vld [vmem:[#allocation5 + $0x110] sm:$0xf]
    %v2004 = vld [vmem:[#allocation5 + $0x114] sm:$0xf]
    %v2005 = vld [vmem:[#allocation5 + $0x118] sm:$0xf]
    %v2006 = vld [vmem:[#allocation5 + $0x11c] sm:$0xf]
    %v2007 = vld [vmem:[#allocation5 + $0x120] sm:$0xf]
    %v2008 = vld [vmem:[#allocation5 + $0x124] sm:$0xf]
    %v2009 = vld [vmem:[#allocation5 + $0x128] sm:$0xf]
    %v2010 = vld [vmem:[#allocation5 + $0x12c] sm:$0xf]
    %v2011 = vld [vmem:[#allocation5 + $0x130] sm:$0xf]
    %v2012 = vld [vmem:[#allocation5 + $0x134] sm:$0xf]
    %v2013 = vld [vmem:[#allocation5 + $0x138] sm:$0xf]
    %v2014 = vld [vmem:[#allocation5 + $0x13c] sm:$0xf]
    %v2015 = vld [vmem:[#allocation5 + $0x140] sm:$0xf]
    %v2016 = vld [vmem:[#allocation5 + $0x144] sm:$0xf]
    %v2017 = vld [vmem:[#allocation5 + $0x148] sm:$0xf]
    %v2018 = vld [vmem:[#allocation5 + $0x14c] sm:$0xf]
    %v2019 = vld [vmem:[#allocation5 + $0x150] sm:$0xf]
    %v2020 = vld [vmem:[#allocation5 + $0x154] sm:$0xf]
    %v2021 = vld [vmem:[#allocation5 + $0x158] sm:$0xf]
    %v2022 = vld [vmem:[#allocation5 + $0x15c] sm:$0xf]
    %v2023 = vld [vmem:[#allocation5 + $0x160] sm:$0xf]
    %v2024 = vld [vmem:[#allocation5 + $0x164] sm:$0xf]
    %v2025 = vld [vmem:[#allocation5 + $0x168] sm:$0xf]
    %v2026 = vld [vmem:[#allocation5 + $0x16c] sm:$0xf]
    %v2027 = vld [vmem:[#allocation5 + $0x170] sm:$0xf]
    %v2028 = vld [vmem:[#allocation5 + $0x174] sm:$0xf]
    %v2029 = vld [vmem:[#allocation5 + $0x178] sm:$0xf]
    %v2030 = vld [vmem:[#allocation5 + $0x17c] sm:$0xf]
    %v2031 = vld [vmem:[#allocation5 + $0x180] sm:$0xf]
    %v2032 = vld [vmem:[#allocation5 + $0x184] sm:$0xf]
    %v2033 = vld [vmem:[#allocation5 + $0x188] sm:$0xf]
    %v2034 = vld [vmem:[#allocation5 + $0x18c] sm:$0xf]
    %v2035 = vld [vmem:[#allocation5 + $0x190] sm:$0xf]
    %v2036 = vld [vmem:[#allocation5 + $0x194] sm:$0xf]
    %v2037 = vld [vmem:[#allocation5 + $0x198] sm:$0xf]
    %v2038 = vld [vmem:[#allocation5 + $0x19c] sm:$0xf]
    %v2039 = vld [vmem:[#allocation5 + $0x1a0] sm:$0xf]
    %v2040 = vld [vmem:[#allocation5 + $0x1a4] sm:$0xf]
    %v2041 = vld [vmem:[#allocation5 + $0x1a8] sm:$0xf]
    %v2042 = vld [vmem:[#allocation5 + $0x1ac] sm:$0xf]
    %v2043 = vld [vmem:[#allocation5 + $0x1b0] sm:$0xf]
    %v2044 = vld [vmem:[#allocation5 + $0x1b4] sm:$0xf]
    %v2045 = vld [vmem:[#allocation5 + $0x1b8] sm:$0xf]
    %v2046 = vld [vmem:[#allocation5 + $0x1bc] sm:$0xf]
    %v2047 = vld [vmem:[#allocation5 + $0x1c0] sm:$0xf]
    %v2048 = vld [vmem:[#allocation5 + $0x1c4] sm:$0xf]
    %v2049 = vld [vmem:[#allocation5 + $0x1c8] sm:$0xf]
    %v2050 = vld [vmem:[#allocation5 + $0x1cc] sm:$0xf]
    %v2051 = vld [vmem:[#allocation5 + $0x1d0] sm:$0xf]
    %v2052 = vld [vmem:[#allocation5 + $0x1d4] sm:$0xf]
    %v2053 = vld [vmem:[#allocation5 + $0x1d8] sm:$0xf]
    %v2054 = vld [vmem:[#allocation5 + $0x1dc] sm:$0xf]
    %v2055 = vld [vmem:[#allocation5 + $0x1e0] sm:$0xf]
    %v2056 = vld [vmem:[#allocation5 + $0x1e4] sm:$0xf]
    %v2057 = vld [vmem:[#allocation5 + $0x1e8] sm:$0xf]
    %v2058 = vld [vmem:[#allocation5 + $0x1ec] sm:$0xf]
    %v2059 = vld [vmem:[#allocation5 + $0x1f0] sm:$0xf]
    %v2060 = vld [vmem:[#allocation5 + $0x1f4] sm:$0xf]
    %v2061 = vld [vmem:[#allocation5 + $0x1f8] sm:$0xf]
    %v2062 = vld [vmem:[#allocation5 + $0x1fc] sm:$0xf]
    %v2063 = vld [vmem:[#allocation5 + $0x200] sm:$0xf]
    %v2064 = vld [vmem:[#allocation5 + $0x204] sm:$0xf]
    %v2065 = vld [vmem:[#allocation5 + $0x208] sm:$0xf]
    %v2066 = vld [vmem:[#allocation5 + $0x20c] sm:$0xf]
    %v2067 = vld [vmem:[#allocation5 + $0x210] sm:$0xf]
    %v2068 = vld [vmem:[#allocation5 + $0x214] sm:$0xf]
    %v2069 = vld [vmem:[#allocation5 + $0x218] sm:$0xf]
    %v2070 = vld [vmem:[#allocation5 + $0x21c] sm:$0xf]
    %v2071 = vld [vmem:[#allocation5 + $0x220] sm:$0xf]
    %v2072 = vld [vmem:[#allocation5 + $0x224] sm:$0xf]
    %v2073 = vld [vmem:[#allocation5 + $0x228] sm:$0xf]
    %v2074 = vld [vmem:[#allocation5 + $0x22c] sm:$0xf]
    %v2075 = vld [vmem:[#allocation5 + $0x230] sm:$0xf]
    %v2076 = vld [vmem:[#allocation5 + $0x234] sm:$0xf]
    %v2077 = vld [vmem:[#allocation5 + $0x238] sm:$0xf]
    %v2078 = vld [vmem:[#allocation5 + $0x23c] sm:$0xf]
    %v2079 = vld [vmem:[#allocation5 + $0x240] sm:$0xf]
    %v2080 = vld [vmem:[#allocation5 + $0x244] sm:$0xf]
    %v2081 = vld [vmem:[#allocation5 + $0x248] sm:$0xf]
    %v2082 = vld [vmem:[#allocation5 + $0x24c] sm:$0xf]
    %v2083 = vld [vmem:[#allocation5 + $0x250] sm:$0xf]
    %v2084 = vld [vmem:[#allocation5 + $0x254] sm:$0xf]
    %v2085 = vld [vmem:[#allocation5 + $0x258] sm:$0xf]
    %v2086 = vld [vmem:[#allocation5 + $0x25c] sm:$0xf]
    %v2087 = vld [vmem:[#allocation5 + $0x260] sm:$0xf]
    %v2088 = vld [vmem:[#allocation5 + $0x264] sm:$0xf]
    %v2089 = vld [vmem:[#allocation5 + $0x268] sm:$0xf]
    %v2090 = vld [vmem:[#allocation5 + $0x26c] sm:$0xf]
    %v2091 = vld [vmem:[#allocation5 + $0x270] sm:$0xf]
    %v2092 = vld [vmem:[#allocation5 + $0x274] sm:$0xf]
    %v2093 = vld [vmem:[#allocation5 + $0x278] sm:$0xf]
    %v2094 = vld [vmem:[#allocation5 + $0x27c] sm:$0xf]
    %v2095 = vld [vmem:[#allocation5 + $0x280] sm:$0xf]
    %v2096 = vld [vmem:[#allocation5 + $0x284] sm:$0xf]
    %v2097 = vld [vmem:[#allocation5 + $0x288] sm:$0xf]
    %v2098 = vld [vmem:[#allocation5 + $0x28c] sm:$0xf]
    %v2099 = vld [vmem:[#allocation5 + $0x290] sm:$0xf]
    %v2100 = vld [vmem:[#allocation5 + $0x294] sm:$0xf]
    %v2101 = vld [vmem:[#allocation5 + $0x298] sm:$0xf]
    %v2102 = vld [vmem:[#allocation5 + $0x29c] sm:$0xf]
    %v2103 = vld [vmem:[#allocation5 + $0x2a0] sm:$0xf]
    %v2104 = vld [vmem:[#allocation5 + $0x2a4] sm:$0xf]
    %v2105 = vld [vmem:[#allocation5 + $0x2a8] sm:$0xf]
    %v2106 = vld [vmem:[#allocation5 + $0x2ac] sm:$0xf]
    %v2107 = vld [vmem:[#allocation5 + $0x2b0] sm:$0xf]
    %v2108 = vld [vmem:[#allocation5 + $0x2b4] sm:$0xf]
    %v2109 = vld [vmem:[#allocation5 + $0x2b8] sm:$0xf]
    %v2110 = vld [vmem:[#allocation5 + $0x2bc] sm:$0xf]
    %v2111 = vld [vmem:[#allocation5 + $0x2c0] sm:$0xf]
    %v2112 = vld [vmem:[#allocation5 + $0x2c4] sm:$0xf]
    %v2113 = vld [vmem:[#allocation5 + $0x2c8] sm:$0xf]
    %v2114 = vld [vmem:[#allocation5 + $0x2cc] sm:$0xf]
    %v2115 = vld [vmem:[#allocation5 + $0x2d0] sm:$0xf]
    %v2116 = vld [vmem:[#allocation5 + $0x2d4] sm:$0xf]
    %v2117 = vld [vmem:[#allocation5 + $0x2d8] sm:$0xf]
    %v2118 = vld [vmem:[#allocation5 + $0x2dc] sm:$0xf]
    %v2119 = vld [vmem:[#allocation5 + $0x2e0] sm:$0xf]
    %v2120 = vld [vmem:[#allocation5 + $0x2e4] sm:$0xf]
    %v2121 = vld [vmem:[#allocation5 + $0x2e8] sm:$0xf]
    %v2122 = vld [vmem:[#allocation5 + $0x2ec] sm:$0xf]
    %v2123 = vld [vmem:[#allocation5 + $0x2f0] sm:$0xf]
    %v2124 = vld [vmem:[#allocation5 + $0x2f4] sm:$0xf]
    %v2125 = vld [vmem:[#allocation5 + $0x2f8] sm:$0xf]
    %v2126 = vld [vmem:[#allocation5 + $0x2fc] sm:$0xf]
    %v2127 = vld [vmem:[#allocation5 + $0x300] sm:$0xf]
    %v2128 = vld [vmem:[#allocation5 + $0x304] sm:$0xf]
    %v2129 = vld [vmem:[#allocation5 + $0x308] sm:$0xf]
    %v2130 = vld [vmem:[#allocation5 + $0x30c] sm:$0xf]
    %v2131 = vld [vmem:[#allocation5 + $0x310] sm:$0xf]
    %v2132 = vld [vmem:[#allocation5 + $0x314] sm:$0xf]
    %v2133 = vld [vmem:[#allocation5 + $0x318] sm:$0xf]
    %v2134 = vld [vmem:[#allocation5 + $0x31c] sm:$0xf]
    %v2135 = vld [vmem:[#allocation5 + $0x320] sm:$0xf]
    %v2136 = vld [vmem:[#allocation5 + $0x324] sm:$0xf]
    %v2137 = vld [vmem:[#allocation5 + $0x328] sm:$0xf]
    %v2138 = vld [vmem:[#allocation5 + $0x32c] sm:$0xf]
    %v2139 = vld [vmem:[#allocation5 + $0x330] sm:$0xf]
    %v2140 = vld [vmem:[#allocation5 + $0x334] sm:$0xf]
    %v2141 = vld [vmem:[#allocation5 + $0x338] sm:$0xf]
    %v2142 = vld [vmem:[#allocation5 + $0x33c] sm:$0xf]
    %v2143 = vld [vmem:[#allocation5 + $0x340] sm:$0xf]
    %v2144 = vld [vmem:[#allocation5 + $0x344] sm:$0xf]
    %v2145 = vld [vmem:[#allocation5 + $0x348] sm:$0xf]
    %v2146 = vld [vmem:[#allocation5 + $0x34c] sm:$0xf]
    %v2147 = vld [vmem:[#allocation5 + $0x350] sm:$0xf]
    %v2148 = vld [vmem:[#allocation5 + $0x354] sm:$0xf]
    %v2149 = vld [vmem:[#allocation5 + $0x358] sm:$0xf]
    %v2150 = vld [vmem:[#allocation5 + $0x35c] sm:$0xf]
    %v2151 = vld [vmem:[#allocation5 + $0x360] sm:$0xf]
    %v2152 = vld [vmem:[#allocation5 + $0x364] sm:$0xf]
    %v2153 = vld [vmem:[#allocation5 + $0x368] sm:$0xf]
    %v2154 = vld [vmem:[#allocation5 + $0x36c] sm:$0xf]
    %v2155 = vld [vmem:[#allocation5 + $0x370] sm:$0xf]
    %v2156 = vld [vmem:[#allocation5 + $0x374] sm:$0xf]
    %v2157 = vld [vmem:[#allocation5 + $0x378] sm:$0xf]
    %v2158 = vld [vmem:[#allocation5 + $0x37c] sm:$0xf]
    %v2159 = vld [vmem:[#allocation5 + $0x380] sm:$0xf]
    %v2160 = vld [vmem:[#allocation5 + $0x384] sm:$0xf]
    %v2161 = vld [vmem:[#allocation5 + $0x388] sm:$0xf]
    %v2162 = vld [vmem:[#allocation5 + $0x38c] sm:$0xf]
    %v2163 = vld [vmem:[#allocation5 + $0x390] sm:$0xf]
    %v2164 = vld [vmem:[#allocation5 + $0x394] sm:$0xf]
    %v2165 = vld [vmem:[#allocation5 + $0x398] sm:$0xf]
    %v2166 = vld [vmem:[#allocation5 + $0x39c] sm:$0xf]
    %v2167 = vld [vmem:[#allocation5 + $0x3a0] sm:$0xf]
    %v2168 = vld [vmem:[#allocation5 + $0x3a4] sm:$0xf]
    %v2169 = vld [vmem:[#allocation5 + $0x3a8] sm:$0xf]
    %v2170 = vld [vmem:[#allocation5 + $0x3ac] sm:$0xf]
    %v2171 = vld [vmem:[#allocation5 + $0x3b0] sm:$0xf]
    %v2172 = vld [vmem:[#allocation5 + $0x3b4] sm:$0xf]
    %v2173 = vld [vmem:[#allocation5 + $0x3b8] sm:$0xf]
    %v2174 = vld [vmem:[#allocation5 + $0x3bc] sm:$0xf]
    %v2175 = vld [vmem:[#allocation5 + $0x3c0] sm:$0xf]
    %v2176 = vld [vmem:[#allocation5 + $0x3c4] sm:$0xf]
    %v2177 = vld [vmem:[#allocation5 + $0x3c8] sm:$0xf]
    %v2178 = vld [vmem:[#allocation5 + $0x3cc] sm:$0xf]
    %v2179 = vld [vmem:[#allocation5 + $0x3d0] sm:$0xf]
    %v2180 = vld [vmem:[#allocation5 + $0x3d4] sm:$0xf]
    %v2181 = vld [vmem:[#allocation5 + $0x3d8] sm:$0xf]
    %v2182 = vld [vmem:[#allocation5 + $0x3dc] sm:$0xf]
    %v2183 = vld [vmem:[#allocation5 + $0x3e0] sm:$0xf]
    %v2184 = vld [vmem:[#allocation5 + $0x3e4] sm:$0xf]
    %v2185 = vld [vmem:[#allocation5 + $0x3e8] sm:$0xf]
    %v2186 = vld [vmem:[#allocation5 + $0x3ec] sm:$0xf]
    %v2187 = vld [vmem:[#allocation5 + $0x3f0] sm:$0xf]
    %v2188 = vld [vmem:[#allocation5 + $0x3f4] sm:$0xf]
    %v2189 = vld [vmem:[#allocation5 + $0x3f8] sm:$0xf]
    %v2190 = vld [vmem:[#allocation5 + $0x3fc] sm:$0xf]
    %v2191 = vld [vmem:[%s9] sm:$0x1]
    %v2193 = vperm.slane %v2191, 0
    %v2451 = vunpack.c.l.b16 %v1935
    %v2452 = vunpack.c.l.b16 %v1936
    %v2453 = vunpack.c.l.b16 %v1937
    %v2454 = vunpack.c.l.b16 %v1938
    %v2455 = vunpack.c.l.b16 %v1939
    %v2456 = vunpack.c.l.b16 %v1940
    %v2457 = vunpack.c.l.b16 %v1941
    %v2458 = vunpack.c.l.b16 %v1942
    %v2459 = vunpack.c.l.b16 %v1943
    %v2460 = vunpack.c.l.b16 %v1944
    %v2461 = vunpack.c.l.b16 %v1945
    %v2462 = vunpack.c.l.b16 %v1946
    %v2463 = vunpack.c.l.b16 %v1947
    %v2464 = vunpack.c.l.b16 %v1948
    %v2465 = vunpack.c.l.b16 %v1949
    %v2466 = vunpack.c.l.b16 %v1950
    %v2467 = vunpack.c.l.b16 %v1951
    %v2468 = vunpack.c.l.b16 %v1952
    %v2469 = vunpack.c.l.b16 %v1953
    %v2470 = vunpack.c.l.b16 %v1954
    %v2471 = vunpack.c.l.b16 %v1955
    %v2472 = vunpack.c.l.b16 %v1956
    %v2473 = vunpack.c.l.b16 %v1957
    %v2474 = vunpack.c.l.b16 %v1958
    %v2475 = vunpack.c.l.b16 %v1959
    %v2476 = vunpack.c.l.b16 %v1960
    %v2477 = vunpack.c.l.b16 %v1961
    %v2478 = vunpack.c.l.b16 %v1962
    %v2479 = vunpack.c.l.b16 %v1963
    %v2480 = vunpack.c.l.b16 %v1964
    %v2481 = vunpack.c.l.b16 %v1965
    %v2482 = vunpack.c.l.b16 %v1966
    %v2483 = vunpack.c.l.b16 %v1967
    %v2484 = vunpack.c.l.b16 %v1968
    %v2485 = vunpack.c.l.b16 %v1969
    %v2486 = vunpack.c.l.b16 %v1970
    %v2487 = vunpack.c.l.b16 %v1971
    %v2488 = vunpack.c.l.b16 %v1972
    %v2489 = vunpack.c.l.b16 %v1973
    %v2490 = vunpack.c.l.b16 %v1974
    %v2491 = vunpack.c.l.b16 %v1975
    %v2492 = vunpack.c.l.b16 %v1976
    %v2493 = vunpack.c.l.b16 %v1977
    %v2494 = vunpack.c.l.b16 %v1978
    %v2495 = vunpack.c.l.b16 %v1979
    %v2496 = vunpack.c.l.b16 %v1980
    %v2497 = vunpack.c.l.b16 %v1981
    %v2498 = vunpack.c.l.b16 %v1982
    %v2499 = vunpack.c.l.b16 %v1983
    %v2500 = vunpack.c.l.b16 %v1984
    %v2501 = vunpack.c.l.b16 %v1985
    %v2502 = vunpack.c.l.b16 %v1986
    %v2503 = vunpack.c.l.b16 %v1987
    %v2504 = vunpack.c.l.b16 %v1988
    %v2505 = vunpack.c.l.b16 %v1989
    %v2506 = vunpack.c.l.b16 %v1990
    %v2507 = vunpack.c.l.b16 %v1991
    %v2508 = vunpack.c.l.b16 %v1992
    %v2509 = vunpack.c.l.b16 %v1993
    %v2510 = vunpack.c.l.b16 %v1994
    %v2511 = vunpack.c.l.b16 %v1995
    %v2512 = vunpack.c.l.b16 %v1996
    %v2513 = vunpack.c.l.b16 %v1997
    %v2514 = vunpack.c.l.b16 %v1998
    %v2515 = vunpack.c.l.b16 %v1999
    %v2516 = vunpack.c.l.b16 %v2000
    %v2517 = vunpack.c.l.b16 %v2001
    %v2518 = vunpack.c.l.b16 %v2002
    %v2519 = vunpack.c.l.b16 %v2003
    %v2520 = vunpack.c.l.b16 %v2004
    %v2521 = vunpack.c.l.b16 %v2005
    %v2522 = vunpack.c.l.b16 %v2006
    %v2523 = vunpack.c.l.b16 %v2007
    %v2524 = vunpack.c.l.b16 %v2008
    %v2525 = vunpack.c.l.b16 %v2009
    %v2526 = vunpack.c.l.b16 %v2010
    %v2527 = vunpack.c.l.b16 %v2011
    %v2528 = vunpack.c.l.b16 %v2012
    %v2529 = vunpack.c.l.b16 %v2013
    %v2530 = vunpack.c.l.b16 %v2014
    %v2531 = vunpack.c.l.b16 %v2015
    %v2532 = vunpack.c.l.b16 %v2016
    %v2533 = vunpack.c.l.b16 %v2017
    %v2534 = vunpack.c.l.b16 %v2018
    %v2535 = vunpack.c.l.b16 %v2019
    %v2536 = vunpack.c.l.b16 %v2020
    %v2537 = vunpack.c.l.b16 %v2021
    %v2538 = vunpack.c.l.b16 %v2022
    %v2539 = vunpack.c.l.b16 %v2023
    %v2540 = vunpack.c.l.b16 %v2024
    %v2541 = vunpack.c.l.b16 %v2025
    %v2542 = vunpack.c.l.b16 %v2026
    %v2543 = vunpack.c.l.b16 %v2027
    %v2544 = vunpack.c.l.b16 %v2028
    %v2545 = vunpack.c.l.b16 %v2029
    %v2546 = vunpack.c.l.b16 %v2030
    %v2547 = vunpack.c.l.b16 %v2031
    %v2548 = vunpack.c.l.b16 %v2032
    %v2549 = vunpack.c.l.b16 %v2033
    %v2550 = vunpack.c.l.b16 %v2034
    %v2551 = vunpack.c.l.b16 %v2035
    %v2552 = vunpack.c.l.b16 %v2036
    %v2553 = vunpack.c.l.b16 %v2037
    %v2554 = vunpack.c.l.b16 %v2038
    %v2555 = vunpack.c.l.b16 %v2039
    %v2556 = vunpack.c.l.b16 %v2040
    %v2557 = vunpack.c.l.b16 %v2041
    %v2558 = vunpack.c.l.b16 %v2042
    %v2559 = vunpack.c.l.b16 %v2043
    %v2560 = vunpack.c.l.b16 %v2044
    %v2561 = vunpack.c.l.b16 %v2045
    %v2562 = vunpack.c.l.b16 %v2046
    %v2563 = vunpack.c.l.b16 %v2047
    %v2564 = vunpack.c.l.b16 %v2048
    %v2565 = vunpack.c.l.b16 %v2049
    %v2566 = vunpack.c.l.b16 %v2050
    %v2567 = vunpack.c.l.b16 %v2051
    %v2568 = vunpack.c.l.b16 %v2052
    %v2569 = vunpack.c.l.b16 %v2053
    %v2570 = vunpack.c.l.b16 %v2054
    %v2571 = vunpack.c.l.b16 %v2055
    %v2572 = vunpack.c.l.b16 %v2056
    %v2573 = vunpack.c.l.b16 %v2057
    %v2574 = vunpack.c.l.b16 %v2058
    %v2575 = vunpack.c.l.b16 %v2059
    %v2576 = vunpack.c.l.b16 %v2060
    %v2577 = vunpack.c.l.b16 %v2061
    %v2578 = vunpack.c.l.b16 %v2062
    %v2579 = vunpack.c.l.b16 %v2063
    %v2580 = vunpack.c.l.b16 %v2064
    %v2581 = vunpack.c.l.b16 %v2065
    %v2582 = vunpack.c.l.b16 %v2066
    %v2583 = vunpack.c.l.b16 %v2067
    %v2584 = vunpack.c.l.b16 %v2068
    %v2585 = vunpack.c.l.b16 %v2069
    %v2586 = vunpack.c.l.b16 %v2070
    %v2587 = vunpack.c.l.b16 %v2071
    %v2588 = vunpack.c.l.b16 %v2072
    %v2589 = vunpack.c.l.b16 %v2073
    %v2590 = vunpack.c.l.b16 %v2074
    %v2591 = vunpack.c.l.b16 %v2075
    %v2592 = vunpack.c.l.b16 %v2076
    %v2593 = vunpack.c.l.b16 %v2077
    %v2594 = vunpack.c.l.b16 %v2078
    %v2595 = vunpack.c.l.b16 %v2079
    %v2596 = vunpack.c.l.b16 %v2080
    %v2597 = vunpack.c.l.b16 %v2081
    %v2598 = vunpack.c.l.b16 %v2082
    %v2599 = vunpack.c.l.b16 %v2083
    %v2600 = vunpack.c.l.b16 %v2084
    %v2601 = vunpack.c.l.b16 %v2085
    %v2602 = vunpack.c.l.b16 %v2086
    %v2603 = vunpack.c.l.b16 %v2087
    %v2604 = vunpack.c.l.b16 %v2088
    %v2605 = vunpack.c.l.b16 %v2089
    %v2606 = vunpack.c.l.b16 %v2090
    %v2607 = vunpack.c.l.b16 %v2091
    %v2608 = vunpack.c.l.b16 %v2092
    %v2609 = vunpack.c.l.b16 %v2093
    %v2610 = vunpack.c.l.b16 %v2094
    %v2611 = vunpack.c.l.b16 %v2095
    %v2612 = vunpack.c.l.b16 %v2096
    %v2613 = vunpack.c.l.b16 %v2097
    %v2614 = vunpack.c.l.b16 %v2098
    %v2615 = vunpack.c.l.b16 %v2099
    %v2616 = vunpack.c.l.b16 %v2100
    %v2617 = vunpack.c.l.b16 %v2101
    %v2618 = vunpack.c.l.b16 %v2102
    %v2619 = vunpack.c.l.b16 %v2103
    %v2620 = vunpack.c.l.b16 %v2104
    %v2621 = vunpack.c.l.b16 %v2105
    %v2622 = vunpack.c.l.b16 %v2106
    %v2623 = vunpack.c.l.b16 %v2107
    %v2624 = vunpack.c.l.b16 %v2108
    %v2625 = vunpack.c.l.b16 %v2109
    %v2626 = vunpack.c.l.b16 %v2110
    %v2627 = vunpack.c.l.b16 %v2111
    %v2628 = vunpack.c.l.b16 %v2112
    %v2629 = vunpack.c.l.b16 %v2113
    %v2630 = vunpack.c.l.b16 %v2114
    %v2631 = vunpack.c.l.b16 %v2115
    %v2632 = vunpack.c.l.b16 %v2116
    %v2633 = vunpack.c.l.b16 %v2117
    %v2634 = vunpack.c.l.b16 %v2118
    %v2635 = vunpack.c.l.b16 %v2119
    %v2636 = vunpack.c.l.b16 %v2120
    %v2637 = vunpack.c.l.b16 %v2121
    %v2638 = vunpack.c.l.b16 %v2122
    %v2639 = vunpack.c.l.b16 %v2123
    %v2640 = vunpack.c.l.b16 %v2124
    %v2641 = vunpack.c.l.b16 %v2125
    %v2642 = vunpack.c.l.b16 %v2126
    %v2643 = vunpack.c.l.b16 %v2127
    %v2644 = vunpack.c.l.b16 %v2128
    %v2645 = vunpack.c.l.b16 %v2129
    %v2646 = vunpack.c.l.b16 %v2130
    %v2647 = vunpack.c.l.b16 %v2131
    %v2648 = vunpack.c.l.b16 %v2132
    %v2649 = vunpack.c.l.b16 %v2133
    %v2650 = vunpack.c.l.b16 %v2134
    %v2651 = vunpack.c.l.b16 %v2135
    %v2652 = vunpack.c.l.b16 %v2136
    %v2653 = vunpack.c.l.b16 %v2137
    %v2654 = vunpack.c.l.b16 %v2138
    %v2655 = vunpack.c.l.b16 %v2139
    %v2656 = vunpack.c.l.b16 %v2140
    %v2657 = vunpack.c.l.b16 %v2141
    %v2658 = vunpack.c.l.b16 %v2142
    %v2659 = vunpack.c.l.b16 %v2143
    %v2660 = vunpack.c.l.b16 %v2144
    %v2661 = vunpack.c.l.b16 %v2145
    %v2662 = vunpack.c.l.b16 %v2146
    %v2663 = vunpack.c.l.b16 %v2147
    %v2664 = vunpack.c.l.b16 %v2148
    %v2665 = vunpack.c.l.b16 %v2149
    %v2666 = vunpack.c.l.b16 %v2150
    %v2667 = vunpack.c.l.b16 %v2151
    %v2668 = vunpack.c.l.b16 %v2152
    %v2669 = vunpack.c.l.b16 %v2153
    %v2670 = vunpack.c.l.b16 %v2154
    %v2671 = vunpack.c.l.b16 %v2155
    %v2672 = vunpack.c.l.b16 %v2156
    %v2673 = vunpack.c.l.b16 %v2157
    %v2674 = vunpack.c.l.b16 %v2158
    %v2675 = vunpack.c.l.b16 %v2159
    %v2676 = vunpack.c.l.b16 %v2160
    %v2677 = vunpack.c.l.b16 %v2161
    %v2678 = vunpack.c.l.b16 %v2162
    %v2679 = vunpack.c.l.b16 %v2163
    %v2680 = vunpack.c.l.b16 %v2164
    %v2681 = vunpack.c.l.b16 %v2165
    %v2682 = vunpack.c.l.b16 %v2166
    %v2683 = vunpack.c.l.b16 %v2167
    %v2684 = vunpack.c.l.b16 %v2168
    %v2685 = vunpack.c.l.b16 %v2169
    %v2686 = vunpack.c.l.b16 %v2170
    %v2687 = vunpack.c.l.b16 %v2171
    %v2688 = vunpack.c.l.b16 %v2172
    %v2689 = vunpack.c.l.b16 %v2173
    %v2690 = vunpack.c.l.b16 %v2174
    %v2691 = vunpack.c.l.b16 %v2175
    %v2692 = vunpack.c.l.b16 %v2176
    %v2693 = vunpack.c.l.b16 %v2177
    %v2694 = vunpack.c.l.b16 %v2178
    %v2695 = vunpack.c.l.b16 %v2179
    %v2696 = vunpack.c.l.b16 %v2180
    %v2697 = vunpack.c.l.b16 %v2181
    %v2698 = vunpack.c.l.b16 %v2182
    %v2699 = vunpack.c.l.b16 %v2183
    %v2700 = vunpack.c.l.b16 %v2184
    %v2701 = vunpack.c.l.b16 %v2185
    %v2702 = vunpack.c.l.b16 %v2186
    %v2703 = vunpack.c.l.b16 %v2187
    %v2704 = vunpack.c.l.b16 %v2188
    %v2705 = vunpack.c.l.b16 %v2189
    %v2706 = vunpack.c.l.b16 %v2190
    %v2707 = vpack.c.b16 %v2452, %v2451
    %v2708 = vpack.c.b16 %v2454, %v2453
    %v2709 = vpack.c.b16 %v2456, %v2455
    %v2710 = vpack.c.b16 %v2458, %v2457
    %v2711 = vpack.c.b16 %v2460, %v2459
    %v2712 = vpack.c.b16 %v2462, %v2461
    %v2713 = vpack.c.b16 %v2464, %v2463
    %v2714 = vpack.c.b16 %v2466, %v2465
    %v2715 = vpack.c.b16 %v2468, %v2467
    %v2716 = vpack.c.b16 %v2470, %v2469
    %v2717 = vpack.c.b16 %v2472, %v2471
    %v2718 = vpack.c.b16 %v2474, %v2473
    %v2719 = vpack.c.b16 %v2476, %v2475
    %v2720 = vpack.c.b16 %v2478, %v2477
    %v2721 = vpack.c.b16 %v2480, %v2479
    %v2722 = vpack.c.b16 %v2482, %v2481
    %v2723 = vpack.c.b16 %v2484, %v2483
    %v2724 = vpack.c.b16 %v2486, %v2485
    %v2725 = vpack.c.b16 %v2488, %v2487
    %v2726 = vpack.c.b16 %v2490, %v2489
    %v2727 = vpack.c.b16 %v2492, %v2491
    %v2728 = vpack.c.b16 %v2494, %v2493
    %v2729 = vpack.c.b16 %v2496, %v2495
    %v2730 = vpack.c.b16 %v2498, %v2497
    %v2731 = vpack.c.b16 %v2500, %v2499
    %v2732 = vpack.c.b16 %v2502, %v2501
    %v2733 = vpack.c.b16 %v2504, %v2503
    %v2734 = vpack.c.b16 %v2506, %v2505
    %v2735 = vpack.c.b16 %v2508, %v2507
    %v2736 = vpack.c.b16 %v2510, %v2509
    %v2737 = vpack.c.b16 %v2512, %v2511
    %v2738 = vpack.c.b16 %v2514, %v2513
    %v2739 = vpack.c.b16 %v2516, %v2515
    %v2740 = vpack.c.b16 %v2518, %v2517
    %v2741 = vpack.c.b16 %v2520, %v2519
    %v2742 = vpack.c.b16 %v2522, %v2521
    %v2743 = vpack.c.b16 %v2524, %v2523
    %v2744 = vpack.c.b16 %v2526, %v2525
    %v2745 = vpack.c.b16 %v2528, %v2527
    %v2746 = vpack.c.b16 %v2530, %v2529
    %v2747 = vpack.c.b16 %v2532, %v2531
    %v2748 = vpack.c.b16 %v2534, %v2533
    %v2749 = vpack.c.b16 %v2536, %v2535
    %v2750 = vpack.c.b16 %v2538, %v2537
    %v2751 = vpack.c.b16 %v2540, %v2539
    %v2752 = vpack.c.b16 %v2542, %v2541
    %v2753 = vpack.c.b16 %v2544, %v2543
    %v2754 = vpack.c.b16 %v2546, %v2545
    %v2755 = vpack.c.b16 %v2548, %v2547
    %v2756 = vpack.c.b16 %v2550, %v2549
    %v2757 = vpack.c.b16 %v2552, %v2551
    %v2758 = vpack.c.b16 %v2554, %v2553
    %v2759 = vpack.c.b16 %v2556, %v2555
    %v2760 = vpack.c.b16 %v2558, %v2557
    %v2761 = vpack.c.b16 %v2560, %v2559
    %v2762 = vpack.c.b16 %v2562, %v2561
    %v2763 = vpack.c.b16 %v2564, %v2563
    %v2764 = vpack.c.b16 %v2566, %v2565
    %v2765 = vpack.c.b16 %v2568, %v2567
    %v2766 = vpack.c.b16 %v2570, %v2569
    %v2767 = vpack.c.b16 %v2572, %v2571
    %v2768 = vpack.c.b16 %v2574, %v2573
    %v2769 = vpack.c.b16 %v2576, %v2575
    %v2770 = vpack.c.b16 %v2578, %v2577
    %v2771 = vpack.c.b16 %v2580, %v2579
    %v2772 = vpack.c.b16 %v2582, %v2581
    %v2773 = vpack.c.b16 %v2584, %v2583
    %v2774 = vpack.c.b16 %v2586, %v2585
    %v2775 = vpack.c.b16 %v2588, %v2587
    %v2776 = vpack.c.b16 %v2590, %v2589
    %v2777 = vpack.c.b16 %v2592, %v2591
    %v2778 = vpack.c.b16 %v2594, %v2593
    %v2779 = vpack.c.b16 %v2596, %v2595
    %v2780 = vpack.c.b16 %v2598, %v2597
    %v2781 = vpack.c.b16 %v2600, %v2599
    %v2782 = vpack.c.b16 %v2602, %v2601
    %v2783 = vpack.c.b16 %v2604, %v2603
    %v2784 = vpack.c.b16 %v2606, %v2605
    %v2785 = vpack.c.b16 %v2608, %v2607
    %v2786 = vpack.c.b16 %v2610, %v2609
    %v2787 = vpack.c.b16 %v2612, %v2611
    %v2788 = vpack.c.b16 %v2614, %v2613
    %v2789 = vpack.c.b16 %v2616, %v2615
    %v2790 = vpack.c.b16 %v2618, %v2617
    %v2791 = vpack.c.b16 %v2620, %v2619
    %v2792 = vpack.c.b16 %v2622, %v2621
    %v2793 = vpack.c.b16 %v2624, %v2623
    %v2794 = vpack.c.b16 %v2626, %v2625
    %v2795 = vpack.c.b16 %v2628, %v2627
    %v2796 = vpack.c.b16 %v2630, %v2629
    %v2797 = vpack.c.b16 %v2632, %v2631
    %v2798 = vpack.c.b16 %v2634, %v2633
    %v2799 = vpack.c.b16 %v2636, %v2635
    %v2800 = vpack.c.b16 %v2638, %v2637
    %v2801 = vpack.c.b16 %v2640, %v2639
    %v2802 = vpack.c.b16 %v2642, %v2641
    %v2803 = vpack.c.b16 %v2644, %v2643
    %v2804 = vpack.c.b16 %v2646, %v2645
    %v2805 = vpack.c.b16 %v2648, %v2647
    %v2806 = vpack.c.b16 %v2650, %v2649
    %v2807 = vpack.c.b16 %v2652, %v2651
    %v2808 = vpack.c.b16 %v2654, %v2653
    %v2809 = vpack.c.b16 %v2656, %v2655
    %v2810 = vpack.c.b16 %v2658, %v2657
    %v2811 = vpack.c.b16 %v2660, %v2659
    %v2812 = vpack.c.b16 %v2662, %v2661
    %v2813 = vpack.c.b16 %v2664, %v2663
    %v2814 = vpack.c.b16 %v2666, %v2665
    %v2815 = vpack.c.b16 %v2668, %v2667
    %v2816 = vpack.c.b16 %v2670, %v2669
    %v2817 = vpack.c.b16 %v2672, %v2671
    %v2818 = vpack.c.b16 %v2674, %v2673
    %v2819 = vpack.c.b16 %v2676, %v2675
    %v2820 = vpack.c.b16 %v2678, %v2677
    %v2821 = vpack.c.b16 %v2680, %v2679
    %v2822 = vpack.c.b16 %v2682, %v2681
    %v2823 = vpack.c.b16 %v2684, %v2683
    %v2824 = vpack.c.b16 %v2686, %v2685
    %v2825 = vpack.c.b16 %v2688, %v2687
    %v2826 = vpack.c.b16 %v2690, %v2689
    %v2827 = vpack.c.b16 %v2692, %v2691
    %v2828 = vpack.c.b16 %v2694, %v2693
    %v2829 = vpack.c.b16 %v2696, %v2695
    %v2830 = vpack.c.b16 %v2698, %v2697
    %v2831 = vpack.c.b16 %v2700, %v2699
    %v2832 = vpack.c.b16 %v2702, %v2701
    %v2833 = vpack.c.b16 %v2704, %v2703
    %v2834 = vpack.c.b16 %v2706, %v2705
    %2963 = vmatpush.bf16.msra.mxu0 %v2714
    %2964 = vmatpush.bf16.msra.mxu0 %v2713
    %2965 = vmatpush.bf16.msra.mxu0 %v2712
    %2966 = vmatpush.bf16.msra.mxu0 %v2711
    %2967 = vmatpush.bf16.msra.mxu0 %v2710
    %2968 = vmatpush.bf16.msra.mxu0 %v2709
    %2969 = vmatpush.bf16.msra.mxu0 %v2708
    %2970 = vmatpush.bf16.msra.mxu0 %v2707
    %2971 = vmatmul.bf16.gmra.mxu0 %v1903
    %v2972 = vpop.f32.mrf.mxu0
    %v2973 = vadd.f32 %v2193, %v2972
    %v2974 = vpop.f32.mrf.mxu0
    %v2975 = vadd.f32 %v2193, %v2974
    %2976 = vmatmul.bf16.gmra.mxu0 %v1919
    %v2977 = vpop.f32.mrf.mxu0
    %v2978 = vadd.f32 %v2193, %v2977
    %v2979 = vpop.f32.mrf.mxu0
    %v2980 = vadd.f32 %v2193, %v2979
    %2981 = vdwg.mxu0
    %2982 = vmatpush.bf16.msra.mxu0 %v2722
    %2983 = vmatpush.bf16.msra.mxu0 %v2721
    %2984 = vmatpush.bf16.msra.mxu0 %v2720
    %2985 = vmatpush.bf16.msra.mxu0 %v2719
    %2986 = vmatpush.bf16.msra.mxu0 %v2718
    %2987 = vmatpush.bf16.msra.mxu0 %v2717
    %2988 = vmatpush.bf16.msra.mxu0 %v2716
    %2989 = vmatpush.bf16.msra.mxu0 %v2715
    %2990 = vmatmul.bf16.gmra.mxu0 %v1904
    %v2991 = vpop.f32.mrf.mxu0
    %v2992 = vadd.f32 %v2973, %v2991
    %v2993 = vpop.f32.mrf.mxu0
    %v2994 = vadd.f32 %v2975, %v2993
    %2995 = vmatmul.bf16.gmra.mxu0 %v1920
    %v2996 = vpop.f32.mrf.mxu0
    %v2997 = vadd.f32 %v2978, %v2996
    %v2998 = vpop.f32.mrf.mxu0
    %v2999 = vadd.f32 %v2980, %v2998
    %3000 = vdwg.mxu0
    %3001 = vmatpush.bf16.msra.mxu0 %v2730
    %3002 = vmatpush.bf16.msra.mxu0 %v2729
    %3003 = vmatpush.bf16.msra.mxu0 %v2728
    %3004 = vmatpush.bf16.msra.mxu0 %v2727
    %3005 = vmatpush.bf16.msra.mxu0 %v2726
    %3006 = vmatpush.bf16.msra.mxu0 %v2725
    %3007 = vmatpush.bf16.msra.mxu0 %v2724
    %3008 = vmatpush.bf16.msra.mxu0 %v2723
    %3009 = vmatmul.bf16.gmra.mxu0 %v1905
    %v3010 = vpop.f32.mrf.mxu0
    %v3011 = vadd.f32 %v2992, %v3010
    %v3012 = vpop.f32.mrf.mxu0
    %v3013 = vadd.f32 %v2994, %v3012
    %3014 = vmatmul.bf16.gmra.mxu0 %v1921
    %v3015 = vpop.f32.mrf.mxu0
    %v3016 = vadd.f32 %v2997, %v3015
    %v3017 = vpop.f32.mrf.mxu0
    %v3018 = vadd.f32 %v2999, %v3017
    %3019 = vdwg.mxu0
    %3020 = vmatpush.bf16.msra.mxu0 %v2738
    %3021 = vmatpush.bf16.msra.mxu0 %v2737
    %3022 = vmatpush.bf16.msra.mxu0 %v2736
    %3023 = vmatpush.bf16.msra.mxu0 %v2735
    %3024 = vmatpush.bf16.msra.mxu0 %v2734
    %3025 = vmatpush.bf16.msra.mxu0 %v2733
    %3026 = vmatpush.bf16.msra.mxu0 %v2732
    %3027 = vmatpush.bf16.msra.mxu0 %v2731
    %3028 = vmatmul.bf16.gmra.mxu0 %v1906
    %v3029 = vpop.f32.mrf.mxu0
    %v3030 = vadd.f32 %v3011, %v3029
    %v3031 = vpop.f32.mrf.mxu0
    %v3032 = vadd.f32 %v3013, %v3031
    %3033 = vmatmul.bf16.gmra.mxu0 %v1922
    %v3034 = vpop.f32.mrf.mxu0
    %v3035 = vadd.f32 %v3016, %v3034
    %v3036 = vpop.f32.mrf.mxu0
    %v3037 = vadd.f32 %v3018, %v3036
    %3038 = vdwg.mxu0
    %3039 = vmatpush.bf16.msra.mxu0 %v2746
    %3040 = vmatpush.bf16.msra.mxu0 %v2745
    %3041 = vmatpush.bf16.msra.mxu0 %v2744
    %3042 = vmatpush.bf16.msra.mxu0 %v2743
    %3043 = vmatpush.bf16.msra.mxu0 %v2742
    %3044 = vmatpush.bf16.msra.mxu0 %v2741
    %3045 = vmatpush.bf16.msra.mxu0 %v2740
    %3046 = vmatpush.bf16.msra.mxu0 %v2739
    %3047 = vmatmul.bf16.gmra.mxu0 %v1907
    %v3048 = vpop.f32.mrf.mxu0
    %v3049 = vadd.f32 %v3030, %v3048
    %v3050 = vpop.f32.mrf.mxu0
    %v3051 = vadd.f32 %v3032, %v3050
    %3052 = vmatmul.bf16.gmra.mxu0 %v1923
    %v3053 = vpop.f32.mrf.mxu0
    %v3054 = vadd.f32 %v3035, %v3053
    %v3055 = vpop.f32.mrf.mxu0
    %v3056 = vadd.f32 %v3037, %v3055
    %3057 = vdwg.mxu0
    %3058 = vmatpush.bf16.msra.mxu0 %v2754
    %3059 = vmatpush.bf16.msra.mxu0 %v2753
    %3060 = vmatpush.bf16.msra.mxu0 %v2752
    %3061 = vmatpush.bf16.msra.mxu0 %v2751
    %3062 = vmatpush.bf16.msra.mxu0 %v2750
    %3063 = vmatpush.bf16.msra.mxu0 %v2749
    %3064 = vmatpush.bf16.msra.mxu0 %v2748
    %3065 = vmatpush.bf16.msra.mxu0 %v2747
    %3066 = vmatmul.bf16.gmra.mxu0 %v1908
    %v3067 = vpop.f32.mrf.mxu0
    %v3068 = vadd.f32 %v3049, %v3067
    %v3069 = vpop.f32.mrf.mxu0
    %v3070 = vadd.f32 %v3051, %v3069
    %3071 = vmatmul.bf16.gmra.mxu0 %v1924
    %v3072 = vpop.f32.mrf.mxu0
    %v3073 = vadd.f32 %v3054, %v3072
    %v3074 = vpop.f32.mrf.mxu0
    %v3075 = vadd.f32 %v3056, %v3074
    %3076 = vdwg.mxu0
    %3077 = vmatpush.bf16.msra.mxu0 %v2762
    %3078 = vmatpush.bf16.msra.mxu0 %v2761
    %3079 = vmatpush.bf16.msra.mxu0 %v2760
    %3080 = vmatpush.bf16.msra.mxu0 %v2759
    %3081 = vmatpush.bf16.msra.mxu0 %v2758
    %3082 = vmatpush.bf16.msra.mxu0 %v2757
    %3083 = vmatpush.bf16.msra.mxu0 %v2756
    %3084 = vmatpush.bf16.msra.mxu0 %v2755
    %3085 = vmatmul.bf16.gmra.mxu0 %v1909
    %v3086 = vpop.f32.mrf.mxu0
    %v3087 = vadd.f32 %v3068, %v3086
    %v3088 = vpop.f32.mrf.mxu0
    %v3089 = vadd.f32 %v3070, %v3088
    %3090 = vmatmul.bf16.gmra.mxu0 %v1925
    %v3091 = vpop.f32.mrf.mxu0
    %v3092 = vadd.f32 %v3073, %v3091
    %v3093 = vpop.f32.mrf.mxu0
    %v3094 = vadd.f32 %v3075, %v3093
    %3095 = vdwg.mxu0
    %3096 = vmatpush.bf16.msra.mxu0 %v2770
    %3097 = vmatpush.bf16.msra.mxu0 %v2769
    %3098 = vmatpush.bf16.msra.mxu0 %v2768
    %3099 = vmatpush.bf16.msra.mxu0 %v2767
    %3100 = vmatpush.bf16.msra.mxu0 %v2766
    %3101 = vmatpush.bf16.msra.mxu0 %v2765
    %3102 = vmatpush.bf16.msra.mxu0 %v2764
    %3103 = vmatpush.bf16.msra.mxu0 %v2763
    %3104 = vmatmul.bf16.gmra.mxu0 %v1910
    %v3105 = vpop.f32.mrf.mxu0
    %v3106 = vadd.f32 %v3087, %v3105
    %v3107 = vpop.f32.mrf.mxu0
    %v3108 = vadd.f32 %v3089, %v3107
    %3109 = vmatmul.bf16.gmra.mxu0 %v1926
    %v3110 = vpop.f32.mrf.mxu0
    %v3111 = vadd.f32 %v3092, %v3110
    %v3112 = vpop.f32.mrf.mxu0
    %v3113 = vadd.f32 %v3094, %v3112
    %3114 = vdwg.mxu0
    %3115 = vmatpush.bf16.msra.mxu0 %v2778
    %3116 = vmatpush.bf16.msra.mxu0 %v2777
    %3117 = vmatpush.bf16.msra.mxu0 %v2776
    %3118 = vmatpush.bf16.msra.mxu0 %v2775
    %3119 = vmatpush.bf16.msra.mxu0 %v2774
    %3120 = vmatpush.bf16.msra.mxu0 %v2773
    %3121 = vmatpush.bf16.msra.mxu0 %v2772
    %3122 = vmatpush.bf16.msra.mxu0 %v2771
    %3123 = vmatmul.bf16.gmra.mxu0 %v1911
    %v3124 = vpop.f32.mrf.mxu0
    %v3125 = vadd.f32 %v3106, %v3124
    %v3126 = vpop.f32.mrf.mxu0
    %v3127 = vadd.f32 %v3108, %v3126
    %3128 = vmatmul.bf16.gmra.mxu0 %v1927
    %v3129 = vpop.f32.mrf.mxu0
    %v3130 = vadd.f32 %v3111, %v3129
    %v3131 = vpop.f32.mrf.mxu0
    %v3132 = vadd.f32 %v3113, %v3131
    %3133 = vdwg.mxu0
    %3134 = vmatpush.bf16.msra.mxu0 %v2786
    %3135 = vmatpush.bf16.msra.mxu0 %v2785
    %3136 = vmatpush.bf16.msra.mxu0 %v2784
    %3137 = vmatpush.bf16.msra.mxu0 %v2783
    %3138 = vmatpush.bf16.msra.mxu0 %v2782
    %3139 = vmatpush.bf16.msra.mxu0 %v2781
    %3140 = vmatpush.bf16.msra.mxu0 %v2780
    %3141 = vmatpush.bf16.msra.mxu0 %v2779
    %3142 = vmatmul.bf16.gmra.mxu0 %v1912
    %v3143 = vpop.f32.mrf.mxu0
    %v3144 = vadd.f32 %v3125, %v3143
    %v3145 = vpop.f32.mrf.mxu0
    %v3146 = vadd.f32 %v3127, %v3145
    %3147 = vmatmul.bf16.gmra.mxu0 %v1928
    %v3148 = vpop.f32.mrf.mxu0
    %v3149 = vadd.f32 %v3130, %v3148
    %v3150 = vpop.f32.mrf.mxu0
    %v3151 = vadd.f32 %v3132, %v3150
    %3152 = vdwg.mxu0
    %3153 = vmatpush.bf16.msra.mxu0 %v2794
    %3154 = vmatpush.bf16.msra.mxu0 %v2793
    %3155 = vmatpush.bf16.msra.mxu0 %v2792
    %3156 = vmatpush.bf16.msra.mxu0 %v2791
    %3157 = vmatpush.bf16.msra.mxu0 %v2790
    %3158 = vmatpush.bf16.msra.mxu0 %v2789
    %3159 = vmatpush.bf16.msra.mxu0 %v2788
    %3160 = vmatpush.bf16.msra.mxu0 %v2787
    %3161 = vmatmul.bf16.gmra.mxu0 %v1913
    %v3162 = vpop.f32.mrf.mxu0
    %v3163 = vadd.f32 %v3144, %v3162
    %v3164 = vpop.f32.mrf.mxu0
    %v3165 = vadd.f32 %v3146, %v3164
    %3166 = vmatmul.bf16.gmra.mxu0 %v1929
    %v3167 = vpop.f32.mrf.mxu0
    %v3168 = vadd.f32 %v3149, %v3167
    %v3169 = vpop.f32.mrf.mxu0
    %v3170 = vadd.f32 %v3151, %v3169
    %3171 = vdwg.mxu0
    %3172 = vmatpush.bf16.msra.mxu0 %v2802
    %3173 = vmatpush.bf16.msra.mxu0 %v2801
    %3174 = vmatpush.bf16.msra.mxu0 %v2800
    %3175 = vmatpush.bf16.msra.mxu0 %v2799
    %3176 = vmatpush.bf16.msra.mxu0 %v2798
    %3177 = vmatpush.bf16.msra.mxu0 %v2797
    %3178 = vmatpush.bf16.msra.mxu0 %v2796
    %3179 = vmatpush.bf16.msra.mxu0 %v2795
    %3180 = vmatmul.bf16.gmra.mxu0 %v1914
    %v3181 = vpop.f32.mrf.mxu0
    %v3182 = vadd.f32 %v3163, %v3181
    %v3183 = vpop.f32.mrf.mxu0
    %v3184 = vadd.f32 %v3165, %v3183
    %3185 = vmatmul.bf16.gmra.mxu0 %v1930
    %v3186 = vpop.f32.mrf.mxu0
    %v3187 = vadd.f32 %v3168, %v3186
    %v3188 = vpop.f32.mrf.mxu0
    %v3189 = vadd.f32 %v3170, %v3188
    %3190 = vdwg.mxu0
    %3191 = vmatpush.bf16.msra.mxu0 %v2810
    %3192 = vmatpush.bf16.msra.mxu0 %v2809
    %3193 = vmatpush.bf16.msra.mxu0 %v2808
    %3194 = vmatpush.bf16.msra.mxu0 %v2807
    %3195 = vmatpush.bf16.msra.mxu0 %v2806
    %3196 = vmatpush.bf16.msra.mxu0 %v2805
    %3197 = vmatpush.bf16.msra.mxu0 %v2804
    %3198 = vmatpush.bf16.msra.mxu0 %v2803
    %3199 = vmatmul.bf16.gmra.mxu0 %v1915
    %v3200 = vpop.f32.mrf.mxu0
    %v3201 = vadd.f32 %v3182, %v3200
    %v3202 = vpop.f32.mrf.mxu0
    %v3203 = vadd.f32 %v3184, %v3202
    %3204 = vmatmul.bf16.gmra.mxu0 %v1931
    %v3205 = vpop.f32.mrf.mxu0
    %v3206 = vadd.f32 %v3187, %v3205
    %v3207 = vpop.f32.mrf.mxu0
    %v3208 = vadd.f32 %v3189, %v3207
    %3209 = vdwg.mxu0
    %3210 = vmatpush.bf16.msra.mxu0 %v2818
    %3211 = vmatpush.bf16.msra.mxu0 %v2817
    %3212 = vmatpush.bf16.msra.mxu0 %v2816
    %3213 = vmatpush.bf16.msra.mxu0 %v2815
    %3214 = vmatpush.bf16.msra.mxu0 %v2814
    %3215 = vmatpush.bf16.msra.mxu0 %v2813
    %3216 = vmatpush.bf16.msra.mxu0 %v2812
    %3217 = vmatpush.bf16.msra.mxu0 %v2811
    %3218 = vmatmul.bf16.gmra.mxu0 %v1916
    %v3219 = vpop.f32.mrf.mxu0
    %v3220 = vadd.f32 %v3201, %v3219
    %v3221 = vpop.f32.mrf.mxu0
    %v3222 = vadd.f32 %v3203, %v3221
    %3223 = vmatmul.bf16.gmra.mxu0 %v1932
    %v3224 = vpop.f32.mrf.mxu0
    %v3225 = vadd.f32 %v3206, %v3224
    %v3226 = vpop.f32.mrf.mxu0
    %v3227 = vadd.f32 %v3208, %v3226
    %3228 = vdwg.mxu0
    %3229 = vmatpush.bf16.msra.mxu0 %v2826
    %3230 = vmatpush.bf16.msra.mxu0 %v2825
    %3231 = vmatpush.bf16.msra.mxu0 %v2824
    %3232 = vmatpush.bf16.msra.mxu0 %v2823
    %3233 = vmatpush.bf16.msra.mxu0 %v2822
    %3234 = vmatpush.bf16.msra.mxu0 %v2821
    %3235 = vmatpush.bf16.msra.mxu0 %v2820
    %3236 = vmatpush.bf16.msra.mxu0 %v2819
    %3237 = vmatmul.bf16.gmra.mxu0 %v1917
    %v3238 = vpop.f32.mrf.mxu0
    %v3239 = vadd.f32 %v3220, %v3238
    %v3240 = vpop.f32.mrf.mxu0
    %v3241 = vadd.f32 %v3222, %v3240
    %3242 = vmatmul.bf16.gmra.mxu0 %v1933
    %v3243 = vpop.f32.mrf.mxu0
    %v3244 = vadd.f32 %v3225, %v3243
    %v3245 = vpop.f32.mrf.mxu0
    %v3246 = vadd.f32 %v3227, %v3245
    %3247 = vdwg.mxu0
    %3248 = vmatpush.bf16.msra.mxu0 %v2834
    %3249 = vmatpush.bf16.msra.mxu0 %v2833
    %3250 = vmatpush.bf16.msra.mxu0 %v2832
    %3251 = vmatpush.bf16.msra.mxu0 %v2831
    %3252 = vmatpush.bf16.msra.mxu0 %v2830
    %3253 = vmatpush.bf16.msra.mxu0 %v2829
    %3254 = vmatpush.bf16.msra.mxu0 %v2828
    %3255 = vmatpush.bf16.msra.mxu0 %v2827
    %3256 = vmatmul.bf16.gmra.mxu0 %v1918
    %v3257 = vpop.f32.mrf.mxu0
    %v3258 = vadd.f32 %v3239, %v3257
    %v3259 = vpop.f32.mrf.mxu0
    %v3260 = vadd.f32 %v3241, %v3259
    %3261 = vmatmul.bf16.gmra.mxu0 %v1934
    %v3262 = vpop.f32.mrf.mxu0
    %v3263 = vadd.f32 %v3244, %v3262
    %v3264 = vpop.f32.mrf.mxu0
    %v3265 = vadd.f32 %v3246, %v3264
    %3266 = vdwg.mxu0
    %v3267 = vmul.f32 %v3258, %v3258
    %v3268 = vmul.f32 %v3260, %v3260
    %v3269 = vmul.f32 %v3263, %v3263
    %v3270 = vmul.f32 %v3265, %v3265
    %3271 = vadd.xlane.f32.xlu0 %v3267
    %v3272 = vpop.xlane.xlu0 %3271
    %3273 = vadd.xlane.f32.xlu0 %v3268
    %v3274 = vpop.xlane.xlu0 %3273
    %3275 = vadd.xlane.f32.xlu0 %v3269
    %v3276 = vpop.xlane.xlu0 %3275
    %3277 = vadd.xlane.f32.xlu0 %v3270
    %v3278 = vpop.xlane.xlu0 %3277
    %v3279 = vmax.f32 %v3272, 1e-24
    %v3280 = vmax.f32 %v3274, 1e-24
    %v3281 = vmax.f32 %v3276, 1e-24
    %v3282 = vmax.f32 %v3278, 1e-24
    %v3283 = vrsqrt.pop %v3279
    %v3284 = vmul.f32 %v3283, %v3279
    %v3285 = vmul.f32 %v3284, %v3283
    %v3286 = vmul.f32 0.5, %v3285
    %v3287 = vsub.f32 1.5, %v3286
    %v3288 = vmul.f32 %v3283, %v3287
    %vm3289 = vweird.f32 %v3279
    %vm3290 = vweird.f32 %v3283
    %vm3291 = vmor %vm3289, %vm3290
    %v3292 = vsel %vm3291, %v3283, %v3288
    %v3293 = vrsqrt.pop %v3280
    %v3294 = vmul.f32 %v3293, %v3280
    %v3295 = vmul.f32 %v3294, %v3293
    %v3296 = vmul.f32 0.5, %v3295
    %v3297 = vsub.f32 1.5, %v3296
    %v3298 = vmul.f32 %v3293, %v3297
    %vm3299 = vweird.f32 %v3280
    %vm3300 = vweird.f32 %v3293
    %vm3301 = vmor %vm3299, %vm3300
    %v3302 = vsel %vm3301, %v3293, %v3298
    %v3303 = vrsqrt.pop %v3281
    %v3304 = vmul.f32 %v3303, %v3281
    %v3305 = vmul.f32 %v3304, %v3303
    %v3306 = vmul.f32 0.5, %v3305
    %v3307 = vsub.f32 1.5, %v3306
    %v3308 = vmul.f32 %v3303, %v3307
    %vm3309 = vweird.f32 %v3281
    %vm3310 = vweird.f32 %v3303
    %vm3311 = vmor %vm3309, %vm3310
    %v3312 = vsel %vm3311, %v3303, %v3308
    %v3313 = vrsqrt.pop %v3282
    %v3314 = vmul.f32 %v3313, %v3282
    %v3315 = vmul.f32 %v3314, %v3313
    %v3316 = vmul.f32 0.5, %v3315
    %v3317 = vsub.f32 1.5, %v3316
    %v3318 = vmul.f32 %v3313, %v3317
    %vm3319 = vweird.f32 %v3282
    %vm3320 = vweird.f32 %v3313
    %vm3321 = vmor %vm3319, %vm3320
    %v3322 = vsel %vm3321, %v3313, %v3318
    %v3323 = vmul.f32 %v3258, %v3292
    %v3324 = vmul.f32 %v3260, %v3302
    %v3325 = vmul.f32 %v3263, %v3312
    %v3326 = vmul.f32 %v3265, %v3322
    %v3327 = vmul.f32 %v3323, 14.285714
    %v3328 = vmul.f32 %v3324, 14.285714
    %v3329 = vld [vmem:[%s10] sm:$0xff]
    %v3330 = vld [vmem:[%s10 + $0x8] sm:$0xff]
    %v3331 = vld [vmem:[%s10 + $0x10] sm:$0xff]
    %v3332 = vld [vmem:[%s10 + $0x18] sm:$0xff]
    %v3333 = vld [vmem:[%s10 + $0x20] sm:$0xff]
    %v3334 = vld [vmem:[%s10 + $0x28] sm:$0xff]
    %v3335 = vld [vmem:[%s10 + $0x30] sm:$0xff]
    %v3336 = vld [vmem:[%s10 + $0x38] sm:$0xff]
    %v3337 = vld [vmem:[%s10 + $0x40] sm:$0xff]
    %v3338 = vld [vmem:[%s10 + $0x48] sm:$0xff]
    %v3339 = vld [vmem:[%s10 + $0x50] sm:$0xff]
    %v3340 = vld [vmem:[%s10 + $0x58] sm:$0xff]
    %v3341 = vld [vmem:[%s10 + $0x60] sm:$0xff]
    %v3342 = vld [vmem:[%s10 + $0x68] sm:$0xff]
    %v3343 = vld [vmem:[%s10 + $0x70] sm:$0xff]
    %v3344 = vld [vmem:[%s10 + $0x78] sm:$0xff]
    %v3345 = vld [vmem:[%s10 + $0x80] sm:$0xff]
    %v3346 = vld [vmem:[%s10 + $0x88] sm:$0xff]
    %v3347 = vld [vmem:[%s10 + $0x90] sm:$0xff]
    %v3348 = vld [vmem:[%s10 + $0x98] sm:$0xff]
    %v3349 = vld [vmem:[%s10 + $0xa0] sm:$0xff]
    %v3350 = vld [vmem:[%s10 + $0xa8] sm:$0xff]
    %v3351 = vld [vmem:[%s10 + $0xb0] sm:$0xff]
    %v3352 = vld [vmem:[%s10 + $0xb8] sm:$0xff]
    %v3353 = vld [vmem:[%s10 + $0xc0] sm:$0xff]
    %v3354 = vld [vmem:[%s10 + $0xc8] sm:$0xff]
    %v3355 = vld [vmem:[%s10 + $0xd0] sm:$0xff]
    %v3356 = vld [vmem:[%s10 + $0xd8] sm:$0xff]
    %v3357 = vld [vmem:[%s10 + $0xe0] sm:$0xff]
    %v3358 = vld [vmem:[%s10 + $0xe8] sm:$0xff]
    %v3359 = vld [vmem:[%s10 + $0xf0] sm:$0xff]
    %v3360 = vld [vmem:[%s10 + $0xf8] sm:$0xff]
    %v3361 = vld [vmem:[%s11] sm:$0xff]
    %v3362 = vld [vmem:[%s11 + $0x8] sm:$0xff]
    %v3363 = vld [vmem:[%s11 + $0x10] sm:$0xff]
    %v3364 = vld [vmem:[%s11 + $0x18] sm:$0xff]
    %v3365 = vld [vmem:[%s11 + $0x20] sm:$0xff]
    %v3366 = vld [vmem:[%s11 + $0x28] sm:$0xff]
    %v3367 = vld [vmem:[%s11 + $0x30] sm:$0xff]
    %v3368 = vld [vmem:[%s11 + $0x38] sm:$0xff]
    %v3369 = vld [vmem:[%s11 + $0x40] sm:$0xff]
    %v3370 = vld [vmem:[%s11 + $0x48] sm:$0xff]
    %v3371 = vld [vmem:[%s11 + $0x50] sm:$0xff]
    %v3372 = vld [vmem:[%s11 + $0x58] sm:$0xff]
    %v3373 = vld [vmem:[%s11 + $0x60] sm:$0xff]
    %v3374 = vld [vmem:[%s11 + $0x68] sm:$0xff]
    %v3375 = vld [vmem:[%s11 + $0x70] sm:$0xff]
    %v3376 = vld [vmem:[%s11 + $0x78] sm:$0xff]
    %v3377 = vld [vmem:[%s11 + $0x80] sm:$0xff]
    %v3378 = vld [vmem:[%s11 + $0x88] sm:$0xff]
    %v3379 = vld [vmem:[%s11 + $0x90] sm:$0xff]
    %v3380 = vld [vmem:[%s11 + $0x98] sm:$0xff]
    %v3381 = vld [vmem:[%s11 + $0xa0] sm:$0xff]
    %v3382 = vld [vmem:[%s11 + $0xa8] sm:$0xff]
    %v3383 = vld [vmem:[%s11 + $0xb0] sm:$0xff]
    %v3384 = vld [vmem:[%s11 + $0xb8] sm:$0xff]
    %v3385 = vld [vmem:[%s11 + $0xc0] sm:$0xff]
    %v3386 = vld [vmem:[%s11 + $0xc8] sm:$0xff]
    %v3387 = vld [vmem:[%s11 + $0xd0] sm:$0xff]
    %v3388 = vld [vmem:[%s11 + $0xd8] sm:$0xff]
    %v3389 = vld [vmem:[%s11 + $0xe0] sm:$0xff]
    %v3390 = vld [vmem:[%s11 + $0xe8] sm:$0xff]
    %v3391 = vld [vmem:[%s11 + $0xf0] sm:$0xff]
    %v3392 = vld [vmem:[%s11 + $0xf8] sm:$0xff]
    %3393 = vmatpush.msra.mxu0 %v3359
    %3394 = vmatpush.msra.mxu0 %v3357
    %3395 = vmatpush.msra.mxu0 %v3355
    %3396 = vmatpush.msra.mxu0 %v3353
    %3397 = vmatpush.msra.mxu0 %v3351
    %3398 = vmatpush.msra.mxu0 %v3349
    %3399 = vmatpush.msra.mxu0 %v3347
    %3400 = vmatpush.msra.mxu0 %v3345
    %3401 = vmatpush.msra.mxu0 %v3343
    %3402 = vmatpush.msra.mxu0 %v3341
    %3403 = vmatpush.msra.mxu0 %v3339
    %3404 = vmatpush.msra.mxu0 %v3337
    %3405 = vmatpush.msra.mxu0 %v3335
    %3406 = vmatpush.msra.mxu0 %v3333
    %3407 = vmatpush.msra.mxu0 %v3331
    %3408 = vmatpush.msra.mxu0 %v3329
    %3409 = vmatmul.f32.gmra.mxu0 %v3327
    %v3410 = vpop.f32.mrf.mxu0
    %v3411 = vadd.f32 0.0, %v3410
    %3412 = vmatmul.f32.gmra.mxu0 %v3328
    %v3413 = vpop.f32.mrf.mxu0
    %v3414 = vadd.f32 0.0, %v3413
    %3415 = vdwg.mxu0
    %3416 = vmatpush.msra.mxu0 %v3360
    %3417 = vmatpush.msra.mxu0 %v3358
    %3418 = vmatpush.msra.mxu0 %v3356
    %3419 = vmatpush.msra.mxu0 %v3354
    %3420 = vmatpush.msra.mxu0 %v3352
    %3421 = vmatpush.msra.mxu0 %v3350
    %3422 = vmatpush.msra.mxu0 %v3348
    %3423 = vmatpush.msra.mxu0 %v3346
    %3424 = vmatpush.msra.mxu0 %v3344
    %3425 = vmatpush.msra.mxu0 %v3342
    %3426 = vmatpush.msra.mxu0 %v3340
    %3427 = vmatpush.msra.mxu0 %v3338
    %3428 = vmatpush.msra.mxu0 %v3336
    %3429 = vmatpush.msra.mxu0 %v3334
    %3430 = vmatpush.msra.mxu0 %v3332
    %3431 = vmatpush.msra.mxu0 %v3330
    %3432 = vmatmul.f32.gmra.mxu0 %v3327
    %v3433 = vpop.f32.mrf.mxu0
    %v3434 = vadd.f32 0.0, %v3433
    %3435 = vmatmul.f32.gmra.mxu0 %v3328
    %v3436 = vpop.f32.mrf.mxu0
    %v3437 = vadd.f32 0.0, %v3436
    %3438 = vdwg.mxu0
    %3439 = vmatpush.msra.mxu0 %v3391
    %3440 = vmatpush.msra.mxu0 %v3389
    %3441 = vmatpush.msra.mxu0 %v3387
    %3442 = vmatpush.msra.mxu0 %v3385
    %3443 = vmatpush.msra.mxu0 %v3383
    %3444 = vmatpush.msra.mxu0 %v3381
    %3445 = vmatpush.msra.mxu0 %v3379
    %3446 = vmatpush.msra.mxu0 %v3377
    %3447 = vmatpush.msra.mxu0 %v3375
    %3448 = vmatpush.msra.mxu0 %v3373
    %3449 = vmatpush.msra.mxu0 %v3371
    %3450 = vmatpush.msra.mxu0 %v3369
    %3451 = vmatpush.msra.mxu0 %v3367
    %3452 = vmatpush.msra.mxu0 %v3365
    %3453 = vmatpush.msra.mxu0 %v3363
    %3454 = vmatpush.msra.mxu0 %v3361
    %3455 = vmatmul.f32.gmra.mxu0 %v3327
    %v3456 = vpop.f32.mrf.mxu0
    %v3457 = vadd.f32 0.0, %v3456
    %3458 = vmatmul.f32.gmra.mxu0 %v3328
    %v3459 = vpop.f32.mrf.mxu0
    %v3460 = vadd.f32 0.0, %v3459
    %3461 = vdwg.mxu0
    %3462 = vmatpush.msra.mxu0 %v3392
    %3463 = vmatpush.msra.mxu0 %v3390
    %3464 = vmatpush.msra.mxu0 %v3388
    %3465 = vmatpush.msra.mxu0 %v3386
    %3466 = vmatpush.msra.mxu0 %v3384
    %3467 = vmatpush.msra.mxu0 %v3382
    %3468 = vmatpush.msra.mxu0 %v3380
    %3469 = vmatpush.msra.mxu0 %v3378
    %3470 = vmatpush.msra.mxu0 %v3376
    %3471 = vmatpush.msra.mxu0 %v3374
    %3472 = vmatpush.msra.mxu0 %v3372
    %3473 = vmatpush.msra.mxu0 %v3370
    %3474 = vmatpush.msra.mxu0 %v3368
    %3475 = vmatpush.msra.mxu0 %v3366
    %3476 = vmatpush.msra.mxu0 %v3364
    %3477 = vmatpush.msra.mxu0 %v3362
    %3478 = vmatmul.f32.gmra.mxu0 %v3327
    %v3479 = vpop.f32.mrf.mxu0
    %v3480 = vadd.f32 0.0, %v3479
    %3481 = vmatmul.f32.gmra.mxu0 %v3328
    %v3482 = vpop.f32.mrf.mxu0
    %v3483 = vadd.f32 0.0, %v3482
    %3484 = vdwg.mxu0
    %v3485 = vmul.f32 %v3327, %v3325
    %3486 = vadd.xlane.f32.xlu0 %v3485
    %v3487 = vpop.xlane.xlu0 %3486
    %3490 = vrot.lane.b32.xlu0 %v3411, 1
    %v3491 = vpop.permute.xlu0 %3490
    %3492 = vrot.lane.b32.xlu0 %v3434, 1
    %v3493 = vpop.permute.xlu0 %3492
    %vm3494 = vcmask 7168
    %v3495 = vsel %vm3494, %v3491, %v3493
    %v3499 = vsel %vm3494, %v3487, %v3491
    %3500 = vst [vmem:[#allocation7] sm:$0xff] %v3499
    %3501 = vst [vmem:[#allocation7 + $0x8] sm:$0xff] %v3495
    %3502 = vst.msk [vmem:[#allocation7 + $0x10] sm:$0xff] %vm3494, %v3493
    %v3503 = vmul.f32 %v3328, %v3326
    %3504 = vadd.xlane.f32.xlu0 %v3503
    %v3505 = vpop.xlane.xlu0 %3504
    %3508 = vrot.lane.b32.xlu0 %v3460, 1
    %v3509 = vpop.permute.xlu0 %3508
    %3510 = vrot.lane.b32.xlu0 %v3483, 1
    %v3511 = vpop.permute.xlu0 %3510
    %v3512 = vsel %vm3494, %v3509, %v3511
    %v3516 = vsel %vm3494, %v3505, %v3509
    %3517 = vst [vmem:[#allocation8] sm:$0xff] %v3516
    %3518 = vst [vmem:[#allocation8 + $0x8] sm:$0xff] %v3512
    %3519 = vst.msk [vmem:[#allocation8 + $0x10] sm:$0xff] %vm3494, %v3511
    %v3520 = vmul.f32 %v3328, %v3325
    %3521 = vadd.xlane.f32.xlu0 %v3520
    %v3522 = vpop.xlane.xlu0 %3521
    %3525 = vrot.lane.b32.xlu0 %v3414, 1
    %v3526 = vpop.permute.xlu0 %3525
    %3527 = vrot.lane.b32.xlu0 %v3437, 1
    %v3528 = vpop.permute.xlu0 %3527
    %v3529 = vsel %vm3494, %v3526, %v3528
    %v3533 = vsel %vm3494, %v3522, %v3526
    %3534 = vst [vmem:[#allocation10] sm:$0xff] %v3533
    %3535 = vst [vmem:[#allocation10 + $0x8] sm:$0xff] %v3529
    %3536 = vst.msk [vmem:[#allocation10 + $0x10] sm:$0xff] %vm3494, %v3528
    %v3537 = vmul.f32 %v3327, %v3326
    %3538 = vadd.xlane.f32.xlu0 %v3537
    %v3539 = vpop.xlane.xlu0 %3538
    %3542 = vrot.lane.b32.xlu0 %v3457, 1
    %v3543 = vpop.permute.xlu0 %3542
    %3544 = vrot.lane.b32.xlu0 %v3480, 1
    %v3545 = vpop.permute.xlu0 %3544
    %v3546 = vsel %vm3494, %v3543, %v3545
    %v3550 = vsel %vm3494, %v3539, %v3543
    %3551 = vst [vmem:[#allocation11] sm:$0xff] %v3550
    %3552 = vst [vmem:[#allocation11 + $0x8] sm:$0xff] %v3546
    %3553 = vst.msk [vmem:[#allocation11 + $0x10] sm:$0xff] %vm3494, %v3545
    %3554 = vst [vmem:[%s16] sm:$0xff] %v3329
    %3555 = vst [vmem:[%s16 + $0x8] sm:$0xff] %v3330
    %3556 = vst [vmem:[%s16 + $0x10] sm:$0xff] %v3331
    %3557 = vst [vmem:[%s16 + $0x18] sm:$0xff] %v3332
    %3558 = vst [vmem:[%s16 + $0x20] sm:$0xff] %v3333
    %3559 = vst [vmem:[%s16 + $0x28] sm:$0xff] %v3334
    %3560 = vst [vmem:[%s16 + $0x30] sm:$0xff] %v3335
    %3561 = vst [vmem:[%s16 + $0x38] sm:$0xff] %v3336
    %3562 = vst [vmem:[%s16 + $0x40] sm:$0xff] %v3337
    %3563 = vst [vmem:[%s16 + $0x48] sm:$0xff] %v3338
    %3564 = vst [vmem:[%s16 + $0x50] sm:$0xff] %v3339
    %3565 = vst [vmem:[%s16 + $0x58] sm:$0xff] %v3340
    %3566 = vst [vmem:[%s16 + $0x60] sm:$0xff] %v3341
    %3567 = vst [vmem:[%s16 + $0x68] sm:$0xff] %v3342
    %3568 = vst [vmem:[%s16 + $0x70] sm:$0xff] %v3343
    %3569 = vst [vmem:[%s16 + $0x78] sm:$0xff] %v3344
    %3570 = vst [vmem:[%s16 + $0x80] sm:$0xff] %v3345
    %3571 = vst [vmem:[%s16 + $0x88] sm:$0xff] %v3346
    %3572 = vst [vmem:[%s16 + $0x90] sm:$0xff] %v3347
    %3573 = vst [vmem:[%s16 + $0x98] sm:$0xff] %v3348
    %3574 = vst [vmem:[%s16 + $0xa0] sm:$0xff] %v3349
    %3575 = vst [vmem:[%s16 + $0xa8] sm:$0xff] %v3350
    %3576 = vst [vmem:[%s16 + $0xb0] sm:$0xff] %v3351
    %3577 = vst [vmem:[%s16 + $0xb8] sm:$0xff] %v3352
    %3578 = vst [vmem:[%s16 + $0xc0] sm:$0xff] %v3353
    %3579 = vst [vmem:[%s16 + $0xc8] sm:$0xff] %v3354
    %3580 = vst [vmem:[%s16 + $0xd0] sm:$0xff] %v3355
    %3581 = vst [vmem:[%s16 + $0xd8] sm:$0xff] %v3356
    %3582 = vst [vmem:[%s16 + $0xe0] sm:$0xff] %v3357
    %3583 = vst [vmem:[%s16 + $0xe8] sm:$0xff] %v3358
    %3584 = vst [vmem:[%s16 + $0xf0] sm:$0xff] %v3359
    %3585 = vst [vmem:[%s16 + $0xf8] sm:$0xff] %v3360
    %3586 = vxpose.xlu0.b32.start [1/16] %v3325, 128
    %3587 = vxpose.xlu0.b32.cont [2/16] 0.0, 128
    %3588 = vxpose.xlu0.b32.cont [3/16] 0.0, 128
    %3589 = vxpose.xlu0.b32.cont [4/16] 0.0, 128
    %3590 = vxpose.xlu0.b32.cont [5/16] 0.0, 128
    %3591 = vxpose.xlu0.b32.cont [6/16] 0.0, 128
    %3592 = vxpose.xlu0.b32.cont [7/16] 0.0, 128
    %3593 = vxpose.xlu0.b32.cont [8/16] 0.0, 128
    %3594 = vxpose.xlu0.b32.cont [9/16] 0.0, 128
    %3595 = vxpose.xlu0.b32.cont [10/16] 0.0, 128
    %3596 = vxpose.xlu0.b32.cont [11/16] 0.0, 128
    %3597 = vxpose.xlu0.b32.cont [12/16] 0.0, 128
    %3598 = vxpose.xlu0.b32.cont [13/16] 0.0, 128
    %3599 = vxpose.xlu0.b32.cont [14/16] 0.0, 128
    %3600 = vxpose.xlu0.b32.cont [15/16] 0.0, 128
    %3601 = vxpose.xlu0.b32.end [16/16] 0.0, 128
    %v3602 = vpop.trf.xlu0
    %v3603 = vpop.trf.xlu0
    %v3604 = vpop.trf.xlu0
    %v3605 = vpop.trf.xlu0
    %v3606 = vpop.trf.xlu0
    %v3607 = vpop.trf.xlu0
    %v3608 = vpop.trf.xlu0
    %v3609 = vpop.trf.xlu0
    %v3610 = vpop.trf.xlu0
    %v3611 = vpop.trf.xlu0
    %v3612 = vpop.trf.xlu0
    %v3613 = vpop.trf.xlu0
    %v3614 = vpop.trf.xlu0
    %v3615 = vpop.trf.xlu0
    %v3616 = vpop.trf.xlu0
    %v3617 = vpop.trf.xlu0
    %vm3618 = vcmask 64512
    %3619 = vst.msk [vmem:[%s16] sm:$0xff] %vm3618, %v3602
    %3620 = vst.msk [vmem:[%s16 + $0x10] sm:$0xff] %vm3618, %v3603
    %3621 = vst.msk [vmem:[%s16 + $0x20] sm:$0xff] %vm3618, %v3604
    %3622 = vst.msk [vmem:[%s16 + $0x30] sm:$0xff] %vm3618, %v3605
    %3623 = vst.msk [vmem:[%s16 + $0x40] sm:$0xff] %vm3618, %v3606
    %3624 = vst.msk [vmem:[%s16 + $0x50] sm:$0xff] %vm3618, %v3607
    %3625 = vst.msk [vmem:[%s16 + $0x60] sm:$0xff] %vm3618, %v3608
    %3626 = vst.msk [vmem:[%s16 + $0x70] sm:$0xff] %vm3618, %v3609
    %3627 = vst.msk [vmem:[%s16 + $0x80] sm:$0xff] %vm3618, %v3610
    %3628 = vst.msk [vmem:[%s16 + $0x90] sm:$0xff] %vm3618, %v3611
    %3629 = vst.msk [vmem:[%s16 + $0xa0] sm:$0xff] %vm3618, %v3612
    %3630 = vst.msk [vmem:[%s16 + $0xb0] sm:$0xff] %vm3618, %v3613
    %3631 = vst.msk [vmem:[%s16 + $0xc0] sm:$0xff] %vm3618, %v3614
    %3632 = vst.msk [vmem:[%s16 + $0xd0] sm:$0xff] %vm3618, %v3615
    %3633 = vst.msk [vmem:[%s16 + $0xe0] sm:$0xff] %vm3618, %v3616
    %3634 = vst.msk [vmem:[%s16 + $0xf0] sm:$0xff] %vm3618, %v3617
    %3635 = vst [vmem:[%s17] sm:$0xff] %v3361
    %3636 = vst [vmem:[%s17 + $0x8] sm:$0xff] %v3362
    %3637 = vst [vmem:[%s17 + $0x10] sm:$0xff] %v3363
    %3638 = vst [vmem:[%s17 + $0x18] sm:$0xff] %v3364
    %3639 = vst [vmem:[%s17 + $0x20] sm:$0xff] %v3365
    %3640 = vst [vmem:[%s17 + $0x28] sm:$0xff] %v3366
    %3641 = vst [vmem:[%s17 + $0x30] sm:$0xff] %v3367
    %3642 = vst [vmem:[%s17 + $0x38] sm:$0xff] %v3368
    %3643 = vst [vmem:[%s17 + $0x40] sm:$0xff] %v3369
    %3644 = vst [vmem:[%s17 + $0x48] sm:$0xff] %v3370
    %3645 = vst [vmem:[%s17 + $0x50] sm:$0xff] %v3371
    %3646 = vst [vmem:[%s17 + $0x58] sm:$0xff] %v3372
    %3647 = vst [vmem:[%s17 + $0x60] sm:$0xff] %v3373
    %3648 = vst [vmem:[%s17 + $0x68] sm:$0xff] %v3374
    %3649 = vst [vmem:[%s17 + $0x70] sm:$0xff] %v3375
    %3650 = vst [vmem:[%s17 + $0x78] sm:$0xff] %v3376
    %3651 = vst [vmem:[%s17 + $0x80] sm:$0xff] %v3377
    %3652 = vst [vmem:[%s17 + $0x88] sm:$0xff] %v3378
    %3653 = vst [vmem:[%s17 + $0x90] sm:$0xff] %v3379
    %3654 = vst [vmem:[%s17 + $0x98] sm:$0xff] %v3380
    %3655 = vst [vmem:[%s17 + $0xa0] sm:$0xff] %v3381
    %3656 = vst [vmem:[%s17 + $0xa8] sm:$0xff] %v3382
    %3657 = vst [vmem:[%s17 + $0xb0] sm:$0xff] %v3383
    %3658 = vst [vmem:[%s17 + $0xb8] sm:$0xff] %v3384
    %3659 = vst [vmem:[%s17 + $0xc0] sm:$0xff] %v3385
    %3660 = vst [vmem:[%s17 + $0xc8] sm:$0xff] %v3386
    %3661 = vst [vmem:[%s17 + $0xd0] sm:$0xff] %v3387
    %3662 = vst [vmem:[%s17 + $0xd8] sm:$0xff] %v3388
    %3663 = vst [vmem:[%s17 + $0xe0] sm:$0xff] %v3389
    %3664 = vst [vmem:[%s17 + $0xe8] sm:$0xff] %v3390
    %3665 = vst [vmem:[%s17 + $0xf0] sm:$0xff] %v3391
    %3666 = vst [vmem:[%s17 + $0xf8] sm:$0xff] %v3392
    %3667 = vxpose.xlu0.b32.start [1/16] %v3326, 128
    %3668 = vxpose.xlu0.b32.cont [2/16] 0.0, 128
    %3669 = vxpose.xlu0.b32.cont [3/16] 0.0, 128
    %3670 = vxpose.xlu0.b32.cont [4/16] 0.0, 128
    %3671 = vxpose.xlu0.b32.cont [5/16] 0.0, 128
    %3672 = vxpose.xlu0.b32.cont [6/16] 0.0, 128
    %3673 = vxpose.xlu0.b32.cont [7/16] 0.0, 128
    %3674 = vxpose.xlu0.b32.cont [8/16] 0.0, 128
    %3675 = vxpose.xlu0.b32.cont [9/16] 0.0, 128
    %3676 = vxpose.xlu0.b32.cont [10/16] 0.0, 128
    %3677 = vxpose.xlu0.b32.cont [11/16] 0.0, 128
    %3678 = vxpose.xlu0.b32.cont [12/16] 0.0, 128
    %3679 = vxpose.xlu0.b32.cont [13/16] 0.0, 128
    %3680 = vxpose.xlu0.b32.cont [14/16] 0.0, 128
    %3681 = vxpose.xlu0.b32.cont [15/16] 0.0, 128
    %3682 = vxpose.xlu0.b32.end [16/16] 0.0, 128
    %v3683 = vpop.trf.xlu0
    %v3684 = vpop.trf.xlu0
    %v3685 = vpop.trf.xlu0
    %v3686 = vpop.trf.xlu0
    %v3687 = vpop.trf.xlu0
    %v3688 = vpop.trf.xlu0
    %v3689 = vpop.trf.xlu0
    %v3690 = vpop.trf.xlu0
    %v3691 = vpop.trf.xlu0
    %v3692 = vpop.trf.xlu0
    %v3693 = vpop.trf.xlu0
    %v3694 = vpop.trf.xlu0
    %v3695 = vpop.trf.xlu0
    %v3696 = vpop.trf.xlu0
    %v3697 = vpop.trf.xlu0
    %v3698 = vpop.trf.xlu0
    %3699 = vst.msk [vmem:[%s17] sm:$0xff] %vm3618, %v3683
    %3700 = vst.msk [vmem:[%s17 + $0x10] sm:$0xff] %vm3618, %v3684
    %3701 = vst.msk [vmem:[%s17 + $0x20] sm:$0xff] %vm3618, %v3685
    %3702 = vst.msk [vmem:[%s17 + $0x30] sm:$0xff] %vm3618, %v3686
    %3703 = vst.msk [vmem:[%s17 + $0x40] sm:$0xff] %vm3618, %v3687
    %3704 = vst.msk [vmem:[%s17 + $0x50] sm:$0xff] %vm3618, %v3688
    %3705 = vst.msk [vmem:[%s17 + $0x60] sm:$0xff] %vm3618, %v3689
    %3706 = vst.msk [vmem:[%s17 + $0x70] sm:$0xff] %vm3618, %v3690
    %3707 = vst.msk [vmem:[%s17 + $0x80] sm:$0xff] %vm3618, %v3691
    %3708 = vst.msk [vmem:[%s17 + $0x90] sm:$0xff] %vm3618, %v3692
    %3709 = vst.msk [vmem:[%s17 + $0xa0] sm:$0xff] %vm3618, %v3693
    %3710 = vst.msk [vmem:[%s17 + $0xb0] sm:$0xff] %vm3618, %v3694
    %3711 = vst.msk [vmem:[%s17 + $0xc0] sm:$0xff] %vm3618, %v3695
    %3712 = vst.msk [vmem:[%s17 + $0xd0] sm:$0xff] %vm3618, %v3696
    %3713 = vst.msk [vmem:[%s17 + $0xe0] sm:$0xff] %vm3618, %v3697
    %3714 = vst.msk [vmem:[%s17 + $0xf0] sm:$0xff] %vm3618, %v3698
    // Predicated region
    $region58: #{impash_forward.1} parent=1 // pred_check
      _
    $region59: #{impash_forward.1} parent=1 // pred_check_branch
      %3716 = sbr.rel (0) target = $region61
    $region60: #{impash_forward.1} parent=1 // pred_region
      %3718 = vsyncadd [#allocation4], 0
      %s3720 = sshll.u32 [#allocation7], 4
      %s3721 = int_to_ptr.vmem [resolvable:$true] %s3720
      %s3722 = sshll.u32 %s12, 4
      %s3723 = int_to_ptr.hbm [resolvable:$true] %s3722
      %3725 = dma.vmem_to_hbm [thread:$0]  %s3721, 384, %s3723, [#allocation4]
    $region61: #{impash_forward.1} parent=1 // pred_fallthru
      _
    // Predicated region
    $region62: #{impash_forward.1} parent=1 // pred_check
      _
    $region63: #{impash_forward.1} parent=1 // pred_check_branch
      %3727 = sbr.rel (0) target = $region65
    $region64: #{impash_forward.1} parent=1 // pred_region
      %3729 = vsyncadd [#allocation9], 0
      %s3731 = sshll.u32 [#allocation8], 4
      %s3732 = int_to_ptr.vmem [resolvable:$true] %s3731
      %s3733 = sshll.u32 %s13, 4
      %s3734 = int_to_ptr.hbm [resolvable:$true] %s3733
      %3736 = dma.vmem_to_hbm [thread:$0]  %s3732, 384, %s3734, [#allocation9]
    $region65: #{impash_forward.1} parent=1 // pred_fallthru
      _
    // Predicated region
    $region66: #{impash_forward.1} parent=1 // pred_check
      _
    $region67: #{impash_forward.1} parent=1 // pred_check_branch
      %3738 = sbr.rel (0) target = $region69
    $region68: #{impash_forward.1} parent=1 // pred_region
      %3740 = vsyncadd [#allocation9], 0
      %s3742 = sshll.u32 [#allocation10], 4
      %s3743 = int_to_ptr.vmem [resolvable:$true] %s3742
      %s3744 = sshll.u32 %s14, 4
      %s3745 = int_to_ptr.hbm [resolvable:$true] %s3744
      %3747 = dma.vmem_to_hbm [thread:$0]  %s3743, 384, %s3745, [#allocation9]
    $region69: #{impash_forward.1} parent=1 // pred_fallthru
      _
    // Predicated region
    $region70: #{impash_forward.1} parent=1 // pred_check
      _
    $region71: #{impash_forward.1} parent=1 // pred_check_branch
      %3749 = sbr.rel (0) target = $region73
    $region72: #{impash_forward.1} parent=1 // pred_region
      %3751 = vsyncadd [#allocation12], 0
      %s3753 = sshll.u32 [#allocation11], 4
      %s3754 = int_to_ptr.vmem [resolvable:$true] %s3753
      %s3755 = sshll.u32 %s15, 4
      %s3756 = int_to_ptr.hbm [resolvable:$true] %s3755
      %3758 = dma.vmem_to_hbm [thread:$0]  %s3754, 384, %s3756, [#allocation12]
    $region73: #{impash_forward.1} parent=1 // pred_fallthru
      _
    // Predicated region
    $region74: #{impash_forward.1} parent=1 // pred_check
      _
    $region75: #{impash_forward.1} parent=1 // pred_check_branch
      %3760 = sbr.rel (0) target = $region77
    $region76: #{impash_forward.1} parent=1 // pred_region
      _
    $region77: #{impash_forward.1} parent=1 // pred_fallthru
      _
    // Predicated region
    $region78: #{impash_forward.1} parent=1 // pred_check
      _
    $region79: #{impash_forward.1} parent=1 // pred_check_branch
      %3762 = sbr.rel (0) target = $region81
    $region80: #{impash_forward.1} parent=1 // pred_region
      _
    $region81: #{impash_forward.1} parent=1 // pred_fallthru
      _
    // Predicated region
    $region82: #{impash_forward.1} parent=1 // pred_check
      _
    $region83: #{impash_forward.1} parent=1 // pred_check_branch
      %3764 = sbr.rel (0) target = $region85
    $region84: #{impash_forward.1} parent=1 // pred_region
      %3766 = dma.done [#allocation4], 384
    $region85: #{impash_forward.1} parent=1 // pred_fallthru
      _
    // Predicated region
    $region86: #{impash_forward.1} parent=1 // pred_check
      _
    $region87: #{impash_forward.1} parent=1 // pred_check_branch
      %3768 = sbr.rel (0) target = $region89
    $region88: #{impash_forward.1} parent=1 // pred_region
      %3770 = dma.done [#allocation9], 384
    $region89: #{impash_forward.1} parent=1 // pred_fallthru
      _
    // Predicated region
    $region90: #{impash_forward.1} parent=1 // pred_check
      _
    $region91: #{impash_forward.1} parent=1 // pred_check_branch
      %3772 = sbr.rel (0) target = $region93
    $region92: #{impash_forward.1} parent=1 // pred_region
      %3774 = dma.done [#allocation9], 384
    $region93: #{impash_forward.1} parent=1 // pred_fallthru
      _
    // Predicated region
    $region94: #{impash_forward.1} parent=1 // pred_check
      _
    $region95: #{impash_forward.1} parent=1 // pred_check_branch
      %3776 = sbr.rel (0) target = $region97
    $region96: #{impash_forward.1} parent=1 // pred_region
      %3778 = dma.done [#allocation12], 384
    $region97: #{impash_forward.1} parent=1 // pred_fallthru
      _
    // Predicated region
    $region98: #{impash_forward.1} parent=1 // pred_check
      _
    $region99: #{impash_forward.1} parent=1 // pred_check_branch
      %3780 = sbr.rel (0) target = $region101
    $region100: #{impash_forward.1} parent=1 // pred_region
      _
    $region101: #{impash_forward.1} parent=1 // pred_fallthru
      _
    // Predicated region
    $region102: #{impash_forward.1} parent=1 // pred_check
      _
    $region103: #{impash_forward.1} parent=1 // pred_check_branch
      %3782 = sbr.rel (0) target = $region105
    $region104: #{impash_forward.1} parent=1 // pred_region
      _
    $region105: #{impash_forward.1} parent=1 // pred_fallthru
      _
    %3783 = vsyncpa [#allocation3], 1
    %3784 = vsyncpa [#allocation6], 1
    %3785 = vsyncpa [#allocation4], 1
    %3786 = vsyncpa [#allocation9], 1
    %3787 = vsyncpa [#allocation12], 1

</llo_original>
